<compile_context>
chip_gen: v5e
topology: v5e:2x2
jax: 0.10.0
libtpu: 0.0.40
codegen_flags: <defaults>
</compile_context>

<pallas_src>
import math

import numpy as np
import jax
import jax.numpy as jnp
from jax.experimental import pallas as pl
from jax.experimental.pallas import tpu as pltpu

# ----------------------------- model hyperparams -----------------------------
INPUT_DIM = 8
D_MODEL = 32
NUM_HEADS = 4
NUM_LAYERS = 2
OUTPUT_DIM = 4
D_FF = 2048            # nn.TransformerEncoderLayer default dim_feedforward
EPS = 1e-5             # nn.LayerNorm default eps
DH = D_MODEL // NUM_HEADS

BATCH = 2
SEQ = 8
TOKENS = BATCH * SEQ


# --------------------------------- helpers -----------------------------------
def _layer_norm(z, g, b):
    mu = jnp.mean(z, axis=-1, keepdims=True)
    var = jnp.mean(jnp.square(z - mu), axis=-1, keepdims=True)
    return (z - mu) * jax.lax.rsqrt(var + EPS) * g + b


# ---------------------------------- kernel -----------------------------------
def _encoder_kernel(
    x_ref,       # (T, INPUT_DIM) f32
    mask_ref,    # (T, T)         f32  0 within batch, -1e30 across batches
    emb_w_ref,   # (INPUT_DIM, D) bf16
    emb_b_ref,   # (1, D)         f32
    wqkv_ref,    # (1, D, 3D)     bf16  (q part pre-scaled by 1/sqrt(DH))
    bqkv_ref,    # (1, 1, 3D)     f32   (q part pre-scaled by 1/sqrt(DH))
    wo_ref,      # (1, H, DH, D)  bf16
    small_ref,   # (1, 6, D)      f32   rows: bo, b2, g1, be1, g2, be2
    w1_ref,      # (1, D, FF)     bf16
    b1_ref,      # (1, 1, FF)     f32
    w2_ref,      # (1, FF, D)     bf16
    fc_w_ref,    # (D, OUT)       bf16
    fc_b_ref,    # (1, OUT)       f32
    o_ref,       # (B, OUT)       f32
    h_ref,       # (T, D)         f32   VMEM scratch carried across layers
):
    layer = pl.program_id(0)

    # ---- embedding linear (first grid step only) ----
    @pl.when(layer == 0)
    def _():
        h_ref[...] = (
            jnp.dot(x_ref[...].astype(jnp.bfloat16), emb_w_ref[...],
                    preferred_element_type=jnp.float32) + emb_b_ref[...])

    h = h_ref[...]                                       # (T, D) f32

    wqkv = wqkv_ref[0]                                   # (D, 3D)  bf16
    bqkv = bqkv_ref[0]                                   # (1, 3D)  f32
    wo = wo_ref[0]                                       # (H, DH, D) bf16
    small = small_ref[0]                                 # (6, D)   f32
    w1 = w1_ref[0]                                       # (D, FF)  bf16
    b1 = b1_ref[0]                                       # (1, FF)  f32
    w2 = w2_ref[0]                                       # (FF, D)  bf16
    bo, b2 = small[0:1], small[1:2]
    g1, be1 = small[2:3], small[3:4]
    g2, be2 = small[4:5], small[5:6]

    # ---- fused Q/K/V projection: one (T, D) x (D, 3D) MXU push ----
    qkv = (jnp.dot(h.astype(jnp.bfloat16), wqkv,
                   preferred_element_type=jnp.float32) + bqkv)       # (T, 3D)

    # Head-major layout: one 2-D transpose + sublane-aligned reshape, then
    # per-head tensors come from leading-dim slices (no per-head loop).
    qkv_t = qkv.T.reshape(3 * NUM_HEADS, DH, TOKENS)                 # (3H, DH, T)
    q3 = jnp.swapaxes(qkv_t[:NUM_HEADS], 1, 2)                       # (H, T, DH)
    k_t = qkv_t[NUM_HEADS:2 * NUM_HEADS]                             # (H, DH, T)
    v3 = jnp.swapaxes(qkv_t[2 * NUM_HEADS:], 1, 2)                   # (H, T, DH)

    # ---- attention batched over heads (cross-batch entries masked off) ----
    s = jnp.einsum("htd,hdk->htk", q3.astype(jnp.bfloat16),
                   k_t.astype(jnp.bfloat16),
                   preferred_element_type=jnp.float32)               # (H, T, T)
    s = s + mask_ref[...]
    s = s - jnp.max(s, axis=-1, keepdims=True)
    p = jnp.exp(s)
    p = p * pl.reciprocal(jnp.sum(p, axis=-1, keepdims=True), approx=True)

    ctx = jnp.einsum("htk,hkd->htd", p.astype(jnp.bfloat16),
                     v3.astype(jnp.bfloat16),
                     preferred_element_type=jnp.float32)             # (H, T, DH)
    attn = jnp.einsum("htd,hde->hte", ctx.astype(jnp.bfloat16), wo,
                      preferred_element_type=jnp.float32)            # (H, T, D)
    attn = jnp.sum(attn, axis=0) + bo                                # (T, D)

    # ---- post-LN residual block 1 (self-attention) ----
    h = _layer_norm(h + attn, g1, be1)

    # ---- feed-forward: linear -> ReLU -> linear, post-LN block 2 ----
    h1 = jnp.maximum(
        jnp.dot(h.astype(jnp.bfloat16), w1,
                preferred_element_type=jnp.float32) + b1,
        0.0).astype(jnp.bfloat16)                                    # (T, FF) bf16
    ff = jnp.dot(h1, w2, preferred_element_type=jnp.float32) + b2
    h = _layer_norm(h + ff, g2, be2)
    h_ref[...] = h

    # ---- output head (last grid step): strided last-token gather ----
    @pl.when(layer == pl.num_programs(0) - 1)
    def _():
        last = h_ref[pl.ds(SEQ - 1, BATCH, stride=SEQ), :]           # (B, D)
        z = (jnp.dot(last.astype(jnp.bfloat16), fc_w_ref[...],
                     preferred_element_type=jnp.float32) + fc_b_ref[...])
        o_ref[...] = 1.0 / (1.0 + jnp.exp(-z))                       # sigmoid


# --------------------------------- wrapper ------------------------------------
@jax.jit
def transformer_forward(packed, x):
    b, s, _ = x.shape
    assert (b, s) == (BATCH, SEQ)
    flat_x = x.reshape(TOKENS, INPUT_DIM)
    tok_batch = jnp.arange(TOKENS, dtype=jnp.int32) // SEQ
    mask = jnp.where(tok_batch[:, None] == tok_batch[None, :],
                     0.0, -1e30).astype(jnp.float32)                 # (T, T)

    grid_spec = pltpu.PrefetchScalarGridSpec(
        num_scalar_prefetch=0,
        grid=(NUM_LAYERS,),
        in_specs=[
            pl.BlockSpec((TOKENS, INPUT_DIM), lambda l: (0, 0)),               # x
            pl.BlockSpec((TOKENS, TOKENS), lambda l: (0, 0)),                  # mask
            pl.BlockSpec((INPUT_DIM, D_MODEL), lambda l: (0, 0)),              # emb_w
            pl.BlockSpec((1, D_MODEL), lambda l: (0, 0)),                      # emb_b
            pl.BlockSpec((1, D_MODEL, 3 * D_MODEL), lambda l: (l, 0, 0)),      # wqkv
            pl.BlockSpec((1, 1, 3 * D_MODEL), lambda l: (l, 0, 0)),            # bqkv
            pl.BlockSpec((1, NUM_HEADS, DH, D_MODEL), lambda l: (l, 0, 0, 0)),  # wo
            pl.BlockSpec((1, 6, D_MODEL), lambda l: (l, 0, 0)),                # small
            pl.BlockSpec((1, D_MODEL, D_FF), lambda l: (l, 0, 0)),             # w1
            pl.BlockSpec((1, 1, D_FF), lambda l: (l, 0, 0)),                   # b1
            pl.BlockSpec((1, D_FF, D_MODEL), lambda l: (l, 0, 0)),             # w2
            pl.BlockSpec((D_MODEL, OUTPUT_DIM), lambda l: (0, 0)),             # fc_w
            pl.BlockSpec((1, OUTPUT_DIM), lambda l: (0, 0)),                   # fc_b
        ],
        out_specs=pl.BlockSpec((BATCH, OUTPUT_DIM), lambda l: (0, 0)),
        scratch_shapes=[pltpu.VMEM((TOKENS, D_MODEL), jnp.float32)],
    )
    return pl.pallas_call(
        _encoder_kernel,
        out_shape=jax.ShapeDtypeStruct((BATCH, OUTPUT_DIM), jnp.float32),
        grid_spec=grid_spec,
        compiler_params=pltpu.CompilerParams(
            dimension_semantics=("arbitrary",)),
    )(flat_x, mask,
      packed["emb_w"], packed["emb_b"],
      packed["wqkv"], packed["bqkv"], packed["wo"], packed["small"],
      packed["w1"], packed["b1"], packed["w2"],
      packed["fc_w"], packed["fc_b"])


# ------------------------------- parameters -----------------------------------
def init_params(key):
    keys = iter(jax.random.split(key, 64))

    def w(shape, scale=0.02):
        return (scale * jax.random.normal(next(keys), shape)).astype(jnp.float32)

    params = {
        "emb_w": w((INPUT_DIM, D_MODEL)),   # [in, out]
        "emb_b": w((1, D_MODEL)),
        "fc_w": w((D_MODEL, OUTPUT_DIM)),
        "fc_b": w((1, OUTPUT_DIM)),
        "layers": [],
    }
    for _ in range(NUM_LAYERS):
        params["layers"].append(dict(
            wq=w((D_MODEL, D_MODEL)), wk=w((D_MODEL, D_MODEL)), wv=w((D_MODEL, D_MODEL)),
            bq=w((1, D_MODEL)), bk=w((1, D_MODEL)), bv=w((1, D_MODEL)),
            wo=w((D_MODEL, D_MODEL)), bo=w((1, D_MODEL)),
            g1=jnp.ones((1, D_MODEL), jnp.float32),
            be1=jnp.zeros((1, D_MODEL), jnp.float32),
            w1=w((D_MODEL, D_FF)), b1=w((1, D_FF)),
            w2=w((D_FF, D_MODEL)), b2=w((1, D_MODEL)),
            g2=jnp.ones((1, D_MODEL), jnp.float32),
            be2=jnp.zeros((1, D_MODEL), jnp.float32),
        ))
    return params


def pack_params(params):
    """Fuse QKV, fold the attention scale into Wq/bq, stack per-layer weights,
    reshape Wo into per-head (H, DH, D) blocks, and cast MXU weights to bf16."""
    scale = 1.0 / math.sqrt(DH)
    wqkv, bqkv, wo, small, w1, b1, w2 = [], [], [], [], [], [], []
    for lp in params["layers"]:
        wqkv.append(jnp.concatenate(
            [lp["wq"] * scale, lp["wk"], lp["wv"]], axis=1))          # (D, 3D)
        bqkv.append(jnp.concatenate(
            [lp["bq"] * scale, lp["bk"], lp["bv"]], axis=1))          # (1, 3D)
        wo.append(lp["wo"].reshape(NUM_HEADS, DH, D_MODEL))           # (H, DH, D)
        small.append(jnp.concatenate(
            [lp["bo"], lp["b2"], lp["g1"], lp["be1"], lp["g2"], lp["be2"]],
            axis=0))                                                  # (6, D)
        w1.append(lp["w1"])
        b1.append(lp["b1"])
        w2.append(lp["w2"])
    return {
        "emb_w": params["emb_w"].astype(jnp.bfloat16),
        "emb_b": params["emb_b"],
        "fc_w": params["fc_w"].astype(jnp.bfloat16),
        "fc_b": params["fc_b"],
        "wqkv": jnp.stack(wqkv).astype(jnp.bfloat16),   # (L, D, 3D)
        "bqkv": jnp.stack(bqkv),                        # (L, 1, 3D)
        "wo": jnp.stack(wo).astype(jnp.bfloat16),       # (L, H, DH, D)
        "small": jnp.stack(small),                      # (L, 6, D)
        "w1": jnp.stack(w1).astype(jnp.bfloat16),       # (L, D, FF)
        "b1": jnp.stack(b1),                            # (L, 1, FF)
        "w2": jnp.stack(w2).astype(jnp.bfloat16),       # (L, FF, D)
    }


# ------------------------------ f32 reference ----------------------------------
def reference_forward(params, x):
    """Plain-JAX f32 reference with PyTorch TransformerEncoderLayer semantics
    (post-LN, ReLU FF, dropout inactive)."""
    h = x @ params["emb_w"] + params["emb_b"]                       # (B, S, D)
    bsz, seq, _ = h.shape
    for lp in params["layers"]:
        q = h @ lp["wq"] + lp["bq"]
        k = h @ lp["wk"] + lp["bk"]
        v = h @ lp["wv"] + lp["bv"]

        def split(t):
            return t.reshape(bsz, seq, NUM_HEADS, DH).transpose(0, 2, 1, 3)

        qh, kh, vh = split(q), split(k), split(v)
        s = jnp.einsum("bhqd,bhkd->bhqk", qh, kh) / math.sqrt(DH)
        p = jax.nn.softmax(s, axis=-1)
        o = jnp.einsum("bhqk,bhkd->bhqd", p, vh)
        o = o.transpose(0, 2, 1, 3).reshape(bsz, seq, D_MODEL)
        attn = o @ lp["wo"] + lp["bo"]
        h = _layer_norm(h + attn, lp["g1"], lp["be1"])
        ff = jnp.maximum(h @ lp["w1"] + lp["b1"], 0.0) @ lp["w2"] + lp["b2"]
        h = _layer_norm(h + ff, lp["g2"], lp["be2"])
    z = h[:, -1, :] @ params["fc_w"] + params["fc_b"]
    return jax.nn.sigmoid(z)


# ---------------------------------- main --------------------------------------
if __name__ == "__main__":
    key = jax.random.PRNGKey(0)
    pkey, xkey = jax.random.split(key)
    params = init_params(pkey)
    packed = pack_params(params)
    x = jax.random.normal(xkey, (BATCH, SEQ, INPUT_DIM), dtype=jnp.float32)

    out = transformer_forward(packed, x)
    jax.block_until_ready(out)

    assert out.shape == (BATCH, OUTPUT_DIM), out.shape
    assert bool(jnp.all(jnp.isfinite(out)))

    ref = reference_forward(params, x)
    max_err = float(np.max(np.abs(np.asarray(out) - np.asarray(ref))))
    assert max_err < 2e-2, f"max abs error vs f32 reference: {max_err}"
    print("KERNEL_OK")
</pallas_src>

<mosaic_0001>
module attributes {stable_mosaic.version = 11 : i64} {
  func.func @_encoder_kernel(%arg0: i32, %arg1: memref<16x8xf32, #tpu.memory_space<vmem>>, %arg2: memref<16x16xf32, #tpu.memory_space<vmem>>, %arg3: memref<8x32xbf16, #tpu.memory_space<vmem>>, %arg4: memref<1x32xf32, #tpu.memory_space<vmem>>, %arg5: memref<1x32x96xbf16, #tpu.memory_space<vmem>>, %arg6: memref<1x1x96xf32, #tpu.memory_space<vmem>>, %arg7: memref<1x4x8x32xbf16, #tpu.memory_space<vmem>>, %arg8: memref<1x6x32xf32, #tpu.memory_space<vmem>>, %arg9: memref<1x32x2048xbf16, #tpu.memory_space<vmem>>, %arg10: memref<1x1x2048xf32, #tpu.memory_space<vmem>>, %arg11: memref<1x2048x32xbf16, #tpu.memory_space<vmem>>, %arg12: memref<32x4xbf16, #tpu.memory_space<vmem>>, %arg13: memref<1x4xf32, #tpu.memory_space<vmem>>, %arg14: memref<2x4xf32, #tpu.memory_space<vmem>>, %arg15: memref<16x32xf32, #tpu.memory_space<vmem>>) attributes {dimension_semantics = [#tpu.dimension_semantics<arbitrary>], iteration_bounds = array<i64: 2>, scalar_prefetch = 0 : i64, scratch_operands = 1 : i64, tpu.core_type = #tpu.core_type<tc>, window_params = [{pipeline_mode = #tpu.pipeline_mode<synchronous>, transform_indices = @transform_0, window_bounds = array<i64: 16, 8>}, {pipeline_mode = #tpu.pipeline_mode<synchronous>, transform_indices = @transform_1, window_bounds = array<i64: 16, 16>}, {pipeline_mode = #tpu.pipeline_mode<synchronous>, transform_indices = @transform_2, window_bounds = array<i64: 8, 32>}, {pipeline_mode = #tpu.pipeline_mode<synchronous>, transform_indices = @transform_3, window_bounds = array<i64: 1, 32>}, {transform_indices = @transform_4, window_bounds = array<i64: 1, 32, 96>}, {transform_indices = @transform_5, window_bounds = array<i64: 1, 1, 96>}, {transform_indices = @transform_6, window_bounds = array<i64: 1, 4, 8, 32>}, {transform_indices = @transform_7, window_bounds = array<i64: 1, 6, 32>}, {transform_indices = @transform_8, window_bounds = array<i64: 1, 32, 2048>}, {transform_indices = @transform_9, window_bounds = array<i64: 1, 1, 2048>}, {transform_indices = @transform_10, window_bounds = array<i64: 1, 2048, 32>}, {pipeline_mode = #tpu.pipeline_mode<synchronous>, transform_indices = @transform_11, window_bounds = array<i64: 32, 4>}, {pipeline_mode = #tpu.pipeline_mode<synchronous>, transform_indices = @transform_12, window_bounds = array<i64: 1, 4>}, {pipeline_mode = #tpu.pipeline_mode<synchronous>, transform_indices = @transform_13, window_bounds = array<i64: 2, 4>}]} {
    %c0_i32 = arith.constant 0 : i32
    %0 = arith.cmpi eq, %arg0, %c0_i32 : i32
    %1 = arith.extui %0 : i1 to i32
    %c0_i32_0 = arith.constant 0 : i32
    %2 = arith.cmpi ne, %1, %c0_i32_0 : i32
    scf.if %2 {
      %c0_48 = arith.constant 0 : index
      %c0_49 = arith.constant 0 : index
      %120 = vector.load %arg1[%c0_48, %c0_49] : memref<16x8xf32, #tpu.memory_space<vmem>>, vector<16x8xf32>
      %121 = arith.truncf %120 : vector<16x8xf32> to vector<16x8xbf16>
      %c0_50 = arith.constant 0 : index
      %c0_51 = arith.constant 0 : index
      %122 = vector.load %arg3[%c0_50, %c0_51] : memref<8x32xbf16, #tpu.memory_space<vmem>>, vector<8x32xbf16>
      %cst_52 = arith.constant dense<0.000000e+00> : vector<16x32xf32>
      %123 = tpu.matmul %121, %122, %cst_52 {dimension_numbers = #tpu.dot_dimension_numbers<[1], [0], [0], [1], [0, 0, 1, 1], [], []>} : vector<16x8xbf16>, vector<8x32xbf16>, vector<16x32xf32> -> vector<16x32xf32>
      %c0_53 = arith.constant 0 : index
      %c0_54 = arith.constant 0 : index
      %124 = vector.load %arg4[%c0_53, %c0_54] : memref<1x32xf32, #tpu.memory_space<vmem>>, vector<1x32xf32>
      %125 = vector.broadcast %124 : vector<1x32xf32> to vector<16x32xf32>
      %126 = arith.addf %123, %125 : vector<16x32xf32>
      %c0_55 = arith.constant 0 : index
      %c0_56 = arith.constant 0 : index
      %127 = vector.load %arg15[%c0_55, %c0_56] : memref<16x32xf32, #tpu.memory_space<vmem>>, vector<16x32xf32>
      tpu.vector_store %arg15[%c0_55, %c0_56], %126 {strides = array<i32>} : memref<16x32xf32, #tpu.memory_space<vmem>>, vector<16x32xf32>,
    } else {
    }
    %c0 = arith.constant 0 : index
    %c0_1 = arith.constant 0 : index
    %3 = vector.load %arg15[%c0, %c0_1] : memref<16x32xf32, #tpu.memory_space<vmem>>, vector<16x32xf32>
    %c0_2 = arith.constant 0 : index
    %c0_3 = arith.constant 0 : index
    %c0_4 = arith.constant 0 : index
    %4 = vector.load %arg5[%c0_2, %c0_3, %c0_4] : memref<1x32x96xbf16, #tpu.memory_space<vmem>>, vector<1x32x96xbf16>
    %5 = vector.shape_cast %4 : vector<1x32x96xbf16> to vector<32x96xbf16>
    %c0_5 = arith.constant 0 : index
    %c0_6 = arith.constant 0 : index
    %c0_7 = arith.constant 0 : index
    %6 = vector.load %arg6[%c0_5, %c0_6, %c0_7] : memref<1x1x96xf32, #tpu.memory_space<vmem>>, vector<1x1x96xf32>
    %7 = vector.shape_cast %6 : vector<1x1x96xf32> to vector<1x96xf32>
    %c0_8 = arith.constant 0 : index
    %c0_9 = arith.constant 0 : index
    %c0_10 = arith.constant 0 : index
    %c0_11 = arith.constant 0 : index
    %8 = vector.load %arg7[%c0_8, %c0_9, %c0_10, %c0_11] : memref<1x4x8x32xbf16, #tpu.memory_space<vmem>>, vector<1x4x8x32xbf16>
    %9 = vector.shape_cast %8 : vector<1x4x8x32xbf16> to vector<4x8x32xbf16>
    %c0_12 = arith.constant 0 : index
    %c0_13 = arith.constant 0 : index
    %c0_14 = arith.constant 0 : index
    %10 = vector.load %arg8[%c0_12, %c0_13, %c0_14] : memref<1x6x32xf32, #tpu.memory_space<vmem>>, vector<1x6x32xf32>
    %11 = vector.shape_cast %10 : vector<1x6x32xf32> to vector<6x32xf32>
    %c0_15 = arith.constant 0 : index
    %c0_16 = arith.constant 0 : index
    %c0_17 = arith.constant 0 : index
    %12 = vector.load %arg9[%c0_15, %c0_16, %c0_17] : memref<1x32x2048xbf16, #tpu.memory_space<vmem>>, vector<1x32x2048xbf16>
    %13 = vector.shape_cast %12 : vector<1x32x2048xbf16> to vector<32x2048xbf16>
    %c0_18 = arith.constant 0 : index
    %c0_19 = arith.constant 0 : index
    %c0_20 = arith.constant 0 : index
    %14 = vector.load %arg10[%c0_18, %c0_19, %c0_20] : memref<1x1x2048xf32, #tpu.memory_space<vmem>>, vector<1x1x2048xf32>
    %15 = vector.shape_cast %14 : vector<1x1x2048xf32> to vector<1x2048xf32>
    %c0_21 = arith.constant 0 : index
    %c0_22 = arith.constant 0 : index
    %c0_23 = arith.constant 0 : index
    %16 = vector.load %arg11[%c0_21, %c0_22, %c0_23] : memref<1x2048x32xbf16, #tpu.memory_space<vmem>>, vector<1x2048x32xbf16>
    %17 = vector.shape_cast %16 : vector<1x2048x32xbf16> to vector<2048x32xbf16>
    %18 = vector.extract_strided_slice %11 {offsets = [0, 0], sizes = [1, 32], strides = [1, 1]} : vector<6x32xf32> to vector<1x32xf32>
    %19 = vector.extract_strided_slice %11 {offsets = [1, 0], sizes = [1, 32], strides = [1, 1]} : vector<6x32xf32> to vector<1x32xf32>
    %20 = vector.extract_strided_slice %11 {offsets = [2, 0], sizes = [1, 32], strides = [1, 1]} : vector<6x32xf32> to vector<1x32xf32>
    %21 = vector.extract_strided_slice %11 {offsets = [3, 0], sizes = [1, 32], strides = [1, 1]} : vector<6x32xf32> to vector<1x32xf32>
    %22 = vector.extract_strided_slice %11 {offsets = [4, 0], sizes = [1, 32], strides = [1, 1]} : vector<6x32xf32> to vector<1x32xf32>
    %23 = vector.extract_strided_slice %11 {offsets = [5, 0], sizes = [1, 32], strides = [1, 1]} : vector<6x32xf32> to vector<1x32xf32>
    %24 = arith.truncf %3 : vector<16x32xf32> to vector<16x32xbf16>
    %cst = arith.constant dense<0.000000e+00> : vector<16x96xf32>
    %25 = tpu.matmul %24, %5, %cst {dimension_numbers = #tpu.dot_dimension_numbers<[1], [0], [0], [1], [0, 0, 1, 1], [], []>} : vector<16x32xbf16>, vector<32x96xbf16>, vector<16x96xf32> -> vector<16x96xf32>
    %26 = vector.broadcast %7 : vector<1x96xf32> to vector<16x96xf32>
    %27 = arith.addf %25, %26 : vector<16x96xf32>
    %28 = tpu.transpose %27, [1, 0] : vector<16x96xf32> -> vector<96x16xf32>
    %29 = vector.shape_cast %28 : vector<96x16xf32> to vector<12x8x16xf32>
    %30 = vector.extract_strided_slice %29 {offsets = [0, 0, 0], sizes = [4, 8, 16], strides = [1, 1, 1]} : vector<12x8x16xf32> to vector<4x8x16xf32>
    %31 = tpu.transpose %30, [0, 2, 1] : vector<4x8x16xf32> -> vector<4x16x8xf32>
    %32 = vector.extract_strided_slice %29 {offsets = [4, 0, 0], sizes = [4, 8, 16], strides = [1, 1, 1]} : vector<12x8x16xf32> to vector<4x8x16xf32>
    %33 = vector.extract_strided_slice %29 {offsets = [8, 0, 0], sizes = [4, 8, 16], strides = [1, 1, 1]} : vector<12x8x16xf32> to vector<4x8x16xf32>
    %34 = tpu.transpose %33, [0, 2, 1] : vector<4x8x16xf32> -> vector<4x16x8xf32>
    %35 = arith.truncf %31 : vector<4x16x8xf32> to vector<4x16x8xbf16>
    %36 = arith.truncf %32 : vector<4x8x16xf32> to vector<4x8x16xbf16>
    "tpu.trace_start"() <{level = 10 : i32, message = "htd,hdk->htk"}> : () -> ()
    %cst_24 = arith.constant dense<0.000000e+00> : vector<4x16x16xf32>
    %37 = tpu.matmul %35, %36, %cst_24 {dimension_numbers = #tpu.dot_dimension_numbers<[2], [1], [1], [2], [0, 0, 0, 1, 1, 2], [0], [0]>} : vector<4x16x8xbf16>, vector<4x8x16xbf16>, vector<4x16x16xf32> -> vector<4x16x16xf32>
    "tpu.trace_stop"() : () -> ()
    %c0_25 = arith.constant 0 : index
    %c0_26 = arith.constant 0 : index
    %38 = vector.load %arg2[%c0_25, %c0_26] : memref<16x16xf32, #tpu.memory_space<vmem>>, vector<16x16xf32>
    %39 = vector.shape_cast %38 : vector<16x16xf32> to vector<1x16x16xf32>
    %40 = vector.broadcast %39 : vector<1x16x16xf32> to vector<4x16x16xf32>
    %41 = arith.addf %37, %40 : vector<4x16x16xf32>
    %cst_27 = arith.constant dense<0xFF800000> : vector<4x16xf32>
    %42 = vector.multi_reduction <maximumf>, %41, %cst_27 [2] : vector<4x16x16xf32> to vector<4x16xf32>
    %43 = vector.shape_cast %42 : vector<4x16xf32> to vector<4x16x1xf32>
    %44 = vector.broadcast %43 : vector<4x16x1xf32> to vector<4x16x16xf32>
    %45 = arith.subf %41, %44 : vector<4x16x16xf32>
    %46 = math.exp %45 : vector<4x16x16xf32>
    %cst_28 = arith.constant dense<0.000000e+00> : vector<4x16xf32>
    %47 = vector.multi_reduction <add>, %46, %cst_28 [2] : vector<4x16x16xf32> to vector<4x16xf32>
    %48 = vector.shape_cast %47 : vector<4x16xf32> to vector<4x16x1xf32>
    %49 = tpu.reciprocal %48 {approx = true} : vector<4x16x1xf32> -> vector<4x16x1xf32>
    %50 = vector.broadcast %49 : vector<4x16x1xf32> to vector<4x16x16xf32>
    %51 = arith.mulf %46, %50 : vector<4x16x16xf32>
    %52 = arith.truncf %51 : vector<4x16x16xf32> to vector<4x16x16xbf16>
    %53 = arith.truncf %34 : vector<4x16x8xf32> to vector<4x16x8xbf16>
    "tpu.trace_start"() <{level = 10 : i32, message = "htk,hkd->htd"}> : () -> ()
    %cst_29 = arith.constant dense<0.000000e+00> : vector<4x16x8xf32>
    %54 = tpu.matmul %52, %53, %cst_29 {dimension_numbers = #tpu.dot_dimension_numbers<[2], [1], [1], [2], [0, 0, 0, 1, 1, 2], [0], [0]>} : vector<4x16x16xbf16>, vector<4x16x8xbf16>, vector<4x16x8xf32> -> vector<4x16x8xf32>
    "tpu.trace_stop"() : () -> ()
    %55 = arith.truncf %54 : vector<4x16x8xf32> to vector<4x16x8xbf16>
    "tpu.trace_start"() <{level = 10 : i32, message = "htd,hde->hte"}> : () -> ()
    %cst_30 = arith.constant dense<0.000000e+00> : vector<4x16x32xf32>
    %56 = tpu.matmul %55, %9, %cst_30 {dimension_numbers = #tpu.dot_dimension_numbers<[2], [1], [1], [2], [0, 0, 0, 1, 1, 2], [0], [0]>} : vector<4x16x8xbf16>, vector<4x8x32xbf16>, vector<4x16x32xf32> -> vector<4x16x32xf32>
    "tpu.trace_stop"() : () -> ()
    %cst_31 = arith.constant dense<0.000000e+00> : vector<16x32xf32>
    %57 = vector.multi_reduction <add>, %56, %cst_31 [0] : vector<4x16x32xf32> to vector<16x32xf32>
    %58 = vector.broadcast %18 : vector<1x32xf32> to vector<16x32xf32>
    %59 = arith.addf %57, %58 : vector<16x32xf32>
    %60 = arith.addf %3, %59 : vector<16x32xf32>
    %cst_32 = arith.constant dense<0.000000e+00> : vector<16xf32>
    %61 = vector.multi_reduction <add>, %60, %cst_32 [1] : vector<16x32xf32> to vector<16xf32>
    %62 = vector.shape_cast %61 : vector<16xf32> to vector<16x1xf32>
    %cst_33 = arith.constant 3.200000e+01 : f32
    %63 = vector.broadcast %cst_33 : f32 to vector<16x1xf32>
    %64 = arith.divf %62, %63 : vector<16x1xf32>
    %65 = vector.broadcast %64 : vector<16x1xf32> to vector<16x32xf32>
    %66 = arith.subf %60, %65 : vector<16x32xf32>
    %67 = arith.mulf %66, %66 : vector<16x32xf32>
    %cst_34 = arith.constant dense<0.000000e+00> : vector<16xf32>
    %68 = vector.multi_reduction <add>, %67, %cst_34 [1] : vector<16x32xf32> to vector<16xf32>
    %69 = vector.shape_cast %68 : vector<16xf32> to vector<16x1xf32>
    %cst_35 = arith.constant 3.200000e+01 : f32
    %70 = vector.broadcast %cst_35 : f32 to vector<16x1xf32>
    %71 = arith.divf %69, %70 : vector<16x1xf32>
    %72 = vector.broadcast %64 : vector<16x1xf32> to vector<16x32xf32>
    %73 = arith.subf %60, %72 : vector<16x32xf32>
    %cst_36 = arith.constant 9.99999974E-6 : f32
    %74 = vector.broadcast %cst_36 : f32 to vector<16x1xf32>
    %75 = arith.addf %71, %74 : vector<16x1xf32>
    %76 = math.rsqrt %75 : vector<16x1xf32>
    %77 = vector.broadcast %76 : vector<16x1xf32> to vector<16x32xf32>
    %78 = arith.mulf %73, %77 : vector<16x32xf32>
    %79 = vector.broadcast %20 : vector<1x32xf32> to vector<16x32xf32>
    %80 = arith.mulf %78, %79 : vector<16x32xf32>
    %81 = vector.broadcast %21 : vector<1x32xf32> to vector<16x32xf32>
    %82 = arith.addf %80, %81 : vector<16x32xf32>
    %83 = arith.truncf %82 : vector<16x32xf32> to vector<16x32xbf16>
    %cst_37 = arith.constant dense<0.000000e+00> : vector<16x2048xf32>
    %84 = tpu.matmul %83, %13, %cst_37 {dimension_numbers = #tpu.dot_dimension_numbers<[1], [0], [0], [1], [0, 0, 1, 1], [], []>} : vector<16x32xbf16>, vector<32x2048xbf16>, vector<16x2048xf32> -> vector<16x2048xf32>
    %85 = vector.broadcast %15 : vector<1x2048xf32> to vector<16x2048xf32>
    %86 = arith.addf %84, %85 : vector<16x2048xf32>
    %cst_38 = arith.constant 0.000000e+00 : f32
    %87 = vector.broadcast %cst_38 : f32 to vector<16x2048xf32>
    %88 = arith.maximumf %86, %87 : vector<16x2048xf32>
    %89 = arith.truncf %88 : vector<16x2048xf32> to vector<16x2048xbf16>
    %cst_39 = arith.constant dense<0.000000e+00> : vector<16x32xf32>
    %90 = tpu.matmul %89, %17, %cst_39 {dimension_numbers = #tpu.dot_dimension_numbers<[1], [0], [0], [1], [0, 0, 1, 1], [], []>} : vector<16x2048xbf16>, vector<2048x32xbf16>, vector<16x32xf32> -> vector<16x32xf32>
    %91 = vector.broadcast %19 : vector<1x32xf32> to vector<16x32xf32>
    %92 = arith.addf %90, %91 : vector<16x32xf32>
    %93 = arith.addf %82, %92 : vector<16x32xf32>
    %cst_40 = arith.constant dense<0.000000e+00> : vector<16xf32>
    %94 = vector.multi_reduction <add>, %93, %cst_40 [1] : vector<16x32xf32> to vector<16xf32>
    %95 = vector.shape_cast %94 : vector<16xf32> to vector<16x1xf32>
    %cst_41 = arith.constant 3.200000e+01 : f32
    %96 = vector.broadcast %cst_41 : f32 to vector<16x1xf32>
    %97 = arith.divf %95, %96 : vector<16x1xf32>
    %98 = vector.broadcast %97 : vector<16x1xf32> to vector<16x32xf32>
    %99 = arith.subf %93, %98 : vector<16x32xf32>
    %100 = arith.mulf %99, %99 : vector<16x32xf32>
    %cst_42 = arith.constant dense<0.000000e+00> : vector<16xf32>
    %101 = vector.multi_reduction <add>, %100, %cst_42 [1] : vector<16x32xf32> to vector<16xf32>
    %102 = vector.shape_cast %101 : vector<16xf32> to vector<16x1xf32>
    %cst_43 = arith.constant 3.200000e+01 : f32
    %103 = vector.broadcast %cst_43 : f32 to vector<16x1xf32>
    %104 = arith.divf %102, %103 : vector<16x1xf32>
    %105 = vector.broadcast %97 : vector<16x1xf32> to vector<16x32xf32>
    %106 = arith.subf %93, %105 : vector<16x32xf32>
    %cst_44 = arith.constant 9.99999974E-6 : f32
    %107 = vector.broadcast %cst_44 : f32 to vector<16x1xf32>
    %108 = arith.addf %104, %107 : vector<16x1xf32>
    %109 = math.rsqrt %108 : vector<16x1xf32>
    %110 = vector.broadcast %109 : vector<16x1xf32> to vector<16x32xf32>
    %111 = arith.mulf %106, %110 : vector<16x32xf32>
    %112 = vector.broadcast %22 : vector<1x32xf32> to vector<16x32xf32>
    %113 = arith.mulf %111, %112 : vector<16x32xf32>
    %114 = vector.broadcast %23 : vector<1x32xf32> to vector<16x32xf32>
    %115 = arith.addf %113, %114 : vector<16x32xf32>
    %c0_45 = arith.constant 0 : index
    %c0_46 = arith.constant 0 : index
    %116 = vector.load %arg15[%c0_45, %c0_46] : memref<16x32xf32, #tpu.memory_space<vmem>>, vector<16x32xf32>
    tpu.vector_store %arg15[%c0_45, %c0_46], %115 {strides = array<i32>} : memref<16x32xf32, #tpu.memory_space<vmem>>, vector<16x32xf32>,
    %c1_i32 = arith.constant 1 : i32
    %117 = arith.cmpi eq, %arg0, %c1_i32 : i32
    %118 = arith.extui %117 : i1 to i32
    %c0_i32_47 = arith.constant 0 : i32
    %119 = arith.cmpi ne, %118, %c0_i32_47 : i32
    scf.if %119 {
      %c7 = arith.constant 7 : index
      %c0_48 = arith.constant 0 : index
      %120 = tpu.strided_load %arg15[%c7, %c0_48] {strides = array<i32: 8, 1>} : memref<16x32xf32, #tpu.memory_space<vmem>>, vector<2x32xf32>
      %121 = arith.truncf %120 : vector<2x32xf32> to vector<2x32xbf16>
      %c0_49 = arith.constant 0 : index
      %c0_50 = arith.constant 0 : index
      %122 = vector.load %arg12[%c0_49, %c0_50] : memref<32x4xbf16, #tpu.memory_space<vmem>>, vector<32x4xbf16>
      %cst_51 = arith.constant dense<0.000000e+00> : vector<2x4xf32>
      %123 = tpu.matmul %121, %122, %cst_51 {dimension_numbers = #tpu.dot_dimension_numbers<[1], [0], [0], [1], [0, 0, 1, 1], [], []>} : vector<2x32xbf16>, vector<32x4xbf16>, vector<2x4xf32> -> vector<2x4xf32>
      %c0_52 = arith.constant 0 : index
      %c0_53 = arith.constant 0 : index
      %124 = vector.load %arg13[%c0_52, %c0_53] : memref<1x4xf32, #tpu.memory_space<vmem>>, vector<1x4xf32>
      %125 = vector.broadcast %124 : vector<1x4xf32> to vector<2x4xf32>
      %126 = arith.addf %123, %125 : vector<2x4xf32>
      %cst_54 = arith.constant 0.000000e+00 : f32
      %127 = vector.broadcast %cst_54 : f32 to vector<2x4xf32>
      %128 = arith.subf %127, %126 : vector<2x4xf32>
      %129 = math.exp %128 : vector<2x4xf32>
      %cst_55 = arith.constant 1.000000e+00 : f32
      %130 = vector.broadcast %cst_55 : f32 to vector<2x4xf32>
      %131 = arith.addf %130, %129 : vector<2x4xf32>
      %cst_56 = arith.constant 1.000000e+00 : f32
      %132 = vector.broadcast %cst_56 : f32 to vector<2x4xf32>
      %133 = arith.divf %132, %131 : vector<2x4xf32>
      %c0_57 = arith.constant 0 : index
      %c0_58 = arith.constant 0 : index
      %134 = vector.load %arg14[%c0_57, %c0_58] : memref<2x4xf32, #tpu.memory_space<vmem>>, vector<2x4xf32>
      tpu.vector_store %arg14[%c0_57, %c0_58], %133 {strides = array<i32>} : memref<2x4xf32, #tpu.memory_space<vmem>>, vector<2x4xf32>,
    } else {
    }
    return
  }
  func.func @transform_0(%arg0: i32) -> (i32, i32) {
    %c0_i32 = arith.constant 0 : i32
    %c0_i32_0 = arith.constant 0 : i32
    %c0_i32_1 = arith.constant 0 : i32
    return %c0_i32, %c0_i32_0 : i32, i32
  }
  func.func @transform_1(%arg0: i32) -> (i32, i32) {
    %c0_i32 = arith.constant 0 : i32
    %c0_i32_0 = arith.constant 0 : i32
    %c0_i32_1 = arith.constant 0 : i32
    return %c0_i32, %c0_i32_0 : i32, i32
  }
  func.func @transform_2(%arg0: i32) -> (i32, i32) {
    %c0_i32 = arith.constant 0 : i32
    %c0_i32_0 = arith.constant 0 : i32
    %c0_i32_1 = arith.constant 0 : i32
    return %c0_i32, %c0_i32_0 : i32, i32
  }
  func.func @transform_3(%arg0: i32) -> (i32, i32) {
    %c0_i32 = arith.constant 0 : i32
    %c0_i32_0 = arith.constant 0 : i32
    %c0_i32_1 = arith.constant 0 : i32
    return %c0_i32, %c0_i32_0 : i32, i32
  }
  func.func @transform_4(%arg0: i32) -> (i32, i32, i32) {
    %c0_i32 = arith.constant 0 : i32
    %c0_i32_0 = arith.constant 0 : i32
    %c0_i32_1 = arith.constant 0 : i32
    return %arg0, %c0_i32, %c0_i32_0 : i32, i32, i32
  }
  func.func @transform_5(%arg0: i32) -> (i32, i32, i32) {
    %c0_i32 = arith.constant 0 : i32
    %c0_i32_0 = arith.constant 0 : i32
    %c0_i32_1 = arith.constant 0 : i32
    return %arg0, %c0_i32, %c0_i32_0 : i32, i32, i32
  }
  func.func @transform_6(%arg0: i32) -> (i32, i32, i32, i32) {
    %c0_i32 = arith.constant 0 : i32
    %c0_i32_0 = arith.constant 0 : i32
    %c0_i32_1 = arith.constant 0 : i32
    %c0_i32_2 = arith.constant 0 : i32
    return %arg0, %c0_i32, %c0_i32_0, %c0_i32_1 : i32, i32, i32, i32
  }
  func.func @transform_7(%arg0: i32) -> (i32, i32, i32) {
    %c0_i32 = arith.constant 0 : i32
    %c0_i32_0 = arith.constant 0 : i32
    %c0_i32_1 = arith.constant 0 : i32
    return %arg0, %c0_i32, %c0_i32_0 : i32, i32, i32
  }
  func.func @transform_8(%arg0: i32) -> (i32, i32, i32) {
    %c0_i32 = arith.constant 0 : i32
    %c0_i32_0 = arith.constant 0 : i32
    %c0_i32_1 = arith.constant 0 : i32
    return %arg0, %c0_i32, %c0_i32_0 : i32, i32, i32
  }
  func.func @transform_9(%arg0: i32) -> (i32, i32, i32) {
    %c0_i32 = arith.constant 0 : i32
    %c0_i32_0 = arith.constant 0 : i32
    %c0_i32_1 = arith.constant 0 : i32
    return %arg0, %c0_i32, %c0_i32_0 : i32, i32, i32
  }
  func.func @transform_10(%arg0: i32) -> (i32, i32, i32) {
    %c0_i32 = arith.constant 0 : i32
    %c0_i32_0 = arith.constant 0 : i32
    %c0_i32_1 = arith.constant 0 : i32
    return %arg0, %c0_i32, %c0_i32_0 : i32, i32, i32
  }
  func.func @transform_11(%arg0: i32) -> (i32, i32) {
    %c0_i32 = arith.constant 0 : i32
    %c0_i32_0 = arith.constant 0 : i32
    %c0_i32_1 = arith.constant 0 : i32
    return %c0_i32, %c0_i32_0 : i32, i32
  }
  func.func @transform_12(%arg0: i32) -> (i32, i32) {
    %c0_i32 = arith.constant 0 : i32
    %c0_i32_0 = arith.constant 0 : i32
    %c0_i32_1 = arith.constant 0 : i32
    return %c0_i32, %c0_i32_0 : i32, i32
  }
  func.func @transform_13(%arg0: i32) -> (i32, i32) {
    %c0_i32 = arith.constant 0 : i32
    %c0_i32_0 = arith.constant 0 : i32
    %c0_i32_1 = arith.constant 0 : i32
    return %c0_i32, %c0_i32_0 : i32, i32
  }
}

</mosaic_0001>

<llo_original>
// kernel: transformer_forward.1
$region0: #{transformer_forward.1}
  #allocation0 [shape = 'u32[]', space=smem, size = 0x4, offset = 0x4, fixed_abs, tag = 'smem constant byte address 0x4 - core index']
  #allocation1 [shape = 'u32[72,128]{1,0:T(1,128)}', space=vmem, size = 0x9000, scoped, tag = 'internal scratch']
  #allocation2 [shape = 'f32[16,32]{1,0:T(8,128)}', space=vmem, size = 0x2000, scoped, tag = 'scratch operand']
  %s0 = inlined_call_operand.vmem [shape: f32[16,8], index: 0, kind: input, shape index: {}]
  %s1 = inlined_call_operand.vmem [shape: f32[16,16], index: 1, kind: input, shape index: {}]
  %s2 = inlined_call_operand.vmem [shape: bf16[8,32], index: 2, kind: input, shape index: {}]
  %s3 = inlined_call_operand.vmem [shape: f32[1,32], index: 3, kind: input, shape index: {}]
  %s4 = inlined_call_operand.vmem [shape: bf16[2,32,96], index: 4, kind: input, shape index: {}]
  %s5 = inlined_call_operand.vmem [shape: f32[2,1,96], index: 5, kind: input, shape index: {}]
  %s6 = inlined_call_operand.vmem [shape: bf16[2,4,8,32], index: 6, kind: input, shape index: {}]
  %s7 = inlined_call_operand.vmem [shape: f32[2,6,32], index: 7, kind: input, shape index: {}]
  %s8 = inlined_call_operand.vmem [shape: bf16[2,32,2048], index: 8, kind: input, shape index: {}]
  %s9 = inlined_call_operand.vmem [shape: f32[2,1,2048], index: 9, kind: input, shape index: {}]
  %s10 = inlined_call_operand.vmem [shape: bf16[2,2048,32], index: 10, kind: input, shape index: {}]
  %s11 = inlined_call_operand.vmem [shape: bf16[32,4], index: 11, kind: input, shape index: {}]
  %s12 = inlined_call_operand.vmem [shape: f32[1,4], index: 12, kind: input, shape index: {}]
  %s13 = inlined_call_operand.hbm [shape: f32[2,4], index: 13, kind: output, shape index: {}]
  %s14 = sld [smem:[#allocation0]]
  $region93: #{transformer_forward.1} parent=0
    _
  %s16 = ssub.s32 1, %s14
  %s17 = scalar_select 0, %s16, %s14
  $region1: #{transformer_forward.1} parent=0
    #allocation3 [shape = 'u8[1024]{0}', space=vmem, size = 0x400, scoped, tag = 'output window, operand 0, single buffered']
    #allocation4 [shape = 's32[2]{0}', space=sflag, size = 0x8, scoped, tag = 'scoped memory for transformer_forward.1']
    %18 = vsyncpa [#allocation4], 0
    loop: start=0, step=1, limit=4
    $region2: #{transformer_forward.1} parent=1 // loop_pre_header
      _
    $region3: #{transformer_forward.1} parent=1 // loop_header
      %s20 = sphi 0, %s24
      %p21 = scmp.ge.s32.totalorder %s20, 4
      %s28 = sphi 0, %s28
      %s30 = sphi 0, %s28
      %s31 = sphi 0, %s30
      %s45 = sphi 0, %s31
      %s49 = sphi 0, %s49
      %s51 = sphi 0, %s49
      %s52 = sphi 0, %s51
      %s66 = sphi 0, %s52
      %s70 = sphi 0, %s70
      %s72 = sphi 0, %s70
      %s73 = sphi 0, %s72
      %s87 = sphi 0, %s73
      %s91 = sphi 0, %s91
      %s93 = sphi 0, %s91
      %s94 = sphi 0, %s93
      %s108 = sphi 0, %s94
      %s114 = sphi 0, %s116
      %s117 = sphi 0, %s114
      %s118 = sphi 0, %s117
      %s134 = sphi 0, %s118
      %s140 = sphi 0, %s142
      %s143 = sphi 0, %s140
      %s144 = sphi 0, %s143
      %s160 = sphi 0, %s144
      %s166 = sphi 0, %s168
      %s169 = sphi 0, %s166
      %s170 = sphi 0, %s169
      %s186 = sphi 0, %s170
      %s192 = sphi 0, %s194
      %s195 = sphi 0, %s192
      %s196 = sphi 0, %s195
      %s212 = sphi 0, %s196
      %s218 = sphi 0, %s220
      %s221 = sphi 0, %s218
      %s222 = sphi 0, %s221
      %s238 = sphi 0, %s222
      %s244 = sphi 0, %s246
      %s247 = sphi 0, %s244
      %s248 = sphi 0, %s247
      %s264 = sphi 0, %s248
      %s270 = sphi 0, %s272
      %s273 = sphi 0, %s270
      %s274 = sphi 0, %s273
      %s290 = sphi 0, %s274
      %s294 = sphi 0, %s294
      %s296 = sphi 0, %s294
      %s297 = sphi 0, %s296
      %s311 = sphi 0, %s297
      %s315 = sphi 0, %s315
      %s317 = sphi 0, %s315
      %s318 = sphi 0, %s317
      %s332 = sphi 0, %s318
      %s336 = sphi 0, %s336
      %s338 = sphi 0, %s336
      %s339 = sphi 0, %s338
      %s353 = sphi 0, %s339
    $region4: #{transformer_forward.1} parent=1 // loop_header_branch
      %23 = sbr.rel (%p21) target = $region8
    $region5: #{transformer_forward.1} parent=1 // loop_body
      %s25 = ssub.s32 %s20, 1
      %s26 = ssub.s32 %s20, 2
      %s27 = sadd.s32 %s20, 1
      %s29 = sadd.s32 %s28, 1
      %p32 = scmp.eq.s32.totalorder %s20, 1
      %p33 = scmp.ne.s32.totalorder %s28, %s30
      %p34 = scmp.eq.s32.totalorder %s20, 0
      %p35 = por %p33, %p34
      %p36 = scmp.ne.s32.totalorder %s28, %s30
      %p37 = scmp.eq.s32.totalorder %s25, 1
      %p38 = por %p36, %p37
      %p39 = scmp.ne.s32.totalorder %s30, %s31
      %p40 = scmp.eq.s32.totalorder %s25, 0
      %p41 = por %p39, %p40
      %p42 = scmp.ne.s32.totalorder %s30, %s31
      %p43 = scmp.eq.s32.totalorder %s26, 1
      %p44 = por %p42, %p43
      %p46 = scmp.ne.s32.totalorder %s31, %s45
      %p47 = scmp.eq.s32.totalorder %s26, 0
      %p48 = por %p46, %p47
      %s50 = sadd.s32 %s49, 1
      %p53 = scmp.eq.s32.totalorder %s20, 1
      %p54 = scmp.ne.s32.totalorder %s49, %s51
      %p55 = scmp.eq.s32.totalorder %s20, 0
      %p56 = por %p54, %p55
      %p57 = scmp.ne.s32.totalorder %s49, %s51
      %p58 = scmp.eq.s32.totalorder %s25, 1
      %p59 = por %p57, %p58
      %p60 = scmp.ne.s32.totalorder %s51, %s52
      %p61 = scmp.eq.s32.totalorder %s25, 0
      %p62 = por %p60, %p61
      %p63 = scmp.ne.s32.totalorder %s51, %s52
      %p64 = scmp.eq.s32.totalorder %s26, 1
      %p65 = por %p63, %p64
      %p67 = scmp.ne.s32.totalorder %s52, %s66
      %p68 = scmp.eq.s32.totalorder %s26, 0
      %p69 = por %p67, %p68
      %s71 = sadd.s32 %s70, 1
      %p74 = scmp.eq.s32.totalorder %s20, 1
      %p75 = scmp.ne.s32.totalorder %s70, %s72
      %p76 = scmp.eq.s32.totalorder %s20, 0
      %p77 = por %p75, %p76
      %p78 = scmp.ne.s32.totalorder %s70, %s72
      %p79 = scmp.eq.s32.totalorder %s25, 1
      %p80 = por %p78, %p79
      %p81 = scmp.ne.s32.totalorder %s72, %s73
      %p82 = scmp.eq.s32.totalorder %s25, 0
      %p83 = por %p81, %p82
      %p84 = scmp.ne.s32.totalorder %s72, %s73
      %p85 = scmp.eq.s32.totalorder %s26, 1
      %p86 = por %p84, %p85
      %p88 = scmp.ne.s32.totalorder %s73, %s87
      %p89 = scmp.eq.s32.totalorder %s26, 0
      %p90 = por %p88, %p89
      %s92 = sadd.s32 %s91, 1
      %p95 = scmp.eq.s32.totalorder %s20, 1
      %p96 = scmp.ne.s32.totalorder %s91, %s93
      %p97 = scmp.eq.s32.totalorder %s20, 0
      %p98 = por %p96, %p97
      %p99 = scmp.ne.s32.totalorder %s91, %s93
      %p100 = scmp.eq.s32.totalorder %s25, 1
      %p101 = por %p99, %p100
      %p102 = scmp.ne.s32.totalorder %s93, %s94
      %p103 = scmp.eq.s32.totalorder %s25, 0
      %p104 = por %p102, %p103
      %p105 = scmp.ne.s32.totalorder %s93, %s94
      %p106 = scmp.eq.s32.totalorder %s26, 1
      %p107 = por %p105, %p106
      %p109 = scmp.ne.s32.totalorder %s94, %s108
      %p110 = scmp.eq.s32.totalorder %s26, 0
      %p111 = por %p109, %p110
      %s112 = ssub.s32 %s20, %s27
      %p113 = scmp.eq.s32.totalorder %s112, 0
      %s115 = sadd.s32 %s114, 1
      %s116 = scalar_select %p113, %s114, %s115
      %p119 = pneg %p113
      %p120 = scmp.eq.s32.totalorder %s20, 1
      %p121 = por %p119, %p120
      %p122 = scmp.ne.s32.totalorder %s114, %s117
      %p123 = scmp.eq.s32.totalorder %s20, 0
      %p124 = por %p122, %p123
      %p125 = scmp.ne.s32.totalorder %s114, %s117
      %p126 = scmp.eq.s32.totalorder %s25, 1
      %p127 = por %p125, %p126
      %p128 = scmp.ne.s32.totalorder %s117, %s118
      %p129 = scmp.eq.s32.totalorder %s25, 0
      %p130 = por %p128, %p129
      %p131 = scmp.ne.s32.totalorder %s117, %s118
      %p132 = scmp.eq.s32.totalorder %s26, 1
      %p133 = por %p131, %p132
      %p135 = scmp.ne.s32.totalorder %s118, %s134
      %p136 = scmp.eq.s32.totalorder %s26, 0
      %p137 = por %p135, %p136
      %s138 = ssub.s32 %s20, %s27
      %p139 = scmp.eq.s32.totalorder %s138, 0
      %s141 = sadd.s32 %s140, 1
      %s142 = scalar_select %p139, %s140, %s141
      %p145 = pneg %p139
      %p146 = scmp.eq.s32.totalorder %s20, 1
      %p147 = por %p145, %p146
      %p148 = scmp.ne.s32.totalorder %s140, %s143
      %p149 = scmp.eq.s32.totalorder %s20, 0
      %p150 = por %p148, %p149
      %p151 = scmp.ne.s32.totalorder %s140, %s143
      %p152 = scmp.eq.s32.totalorder %s25, 1
      %p153 = por %p151, %p152
      %p154 = scmp.ne.s32.totalorder %s143, %s144
      %p155 = scmp.eq.s32.totalorder %s25, 0
      %p156 = por %p154, %p155
      %p157 = scmp.ne.s32.totalorder %s143, %s144
      %p158 = scmp.eq.s32.totalorder %s26, 1
      %p159 = por %p157, %p158
      %p161 = scmp.ne.s32.totalorder %s144, %s160
      %p162 = scmp.eq.s32.totalorder %s26, 0
      %p163 = por %p161, %p162
      %s164 = ssub.s32 %s20, %s27
      %p165 = scmp.eq.s32.totalorder %s164, 0
      %s167 = sadd.s32 %s166, 1
      %s168 = scalar_select %p165, %s166, %s167
      %p171 = pneg %p165
      %p172 = scmp.eq.s32.totalorder %s20, 1
      %p173 = por %p171, %p172
      %p174 = scmp.ne.s32.totalorder %s166, %s169
      %p175 = scmp.eq.s32.totalorder %s20, 0
      %p176 = por %p174, %p175
      %p177 = scmp.ne.s32.totalorder %s166, %s169
      %p178 = scmp.eq.s32.totalorder %s25, 1
      %p179 = por %p177, %p178
      %p180 = scmp.ne.s32.totalorder %s169, %s170
      %p181 = scmp.eq.s32.totalorder %s25, 0
      %p182 = por %p180, %p181
      %p183 = scmp.ne.s32.totalorder %s169, %s170
      %p184 = scmp.eq.s32.totalorder %s26, 1
      %p185 = por %p183, %p184
      %p187 = scmp.ne.s32.totalorder %s170, %s186
      %p188 = scmp.eq.s32.totalorder %s26, 0
      %p189 = por %p187, %p188
      %s190 = ssub.s32 %s20, %s27
      %p191 = scmp.eq.s32.totalorder %s190, 0
      %s193 = sadd.s32 %s192, 1
      %s194 = scalar_select %p191, %s192, %s193
      %p197 = pneg %p191
      %p198 = scmp.eq.s32.totalorder %s20, 1
      %p199 = por %p197, %p198
      %p200 = scmp.ne.s32.totalorder %s192, %s195
      %p201 = scmp.eq.s32.totalorder %s20, 0
      %p202 = por %p200, %p201
      %p203 = scmp.ne.s32.totalorder %s192, %s195
      %p204 = scmp.eq.s32.totalorder %s25, 1
      %p205 = por %p203, %p204
      %p206 = scmp.ne.s32.totalorder %s195, %s196
      %p207 = scmp.eq.s32.totalorder %s25, 0
      %p208 = por %p206, %p207
      %p209 = scmp.ne.s32.totalorder %s195, %s196
      %p210 = scmp.eq.s32.totalorder %s26, 1
      %p211 = por %p209, %p210
      %p213 = scmp.ne.s32.totalorder %s196, %s212
      %p214 = scmp.eq.s32.totalorder %s26, 0
      %p215 = por %p213, %p214
      %s216 = ssub.s32 %s20, %s27
      %p217 = scmp.eq.s32.totalorder %s216, 0
      %s219 = sadd.s32 %s218, 1
      %s220 = scalar_select %p217, %s218, %s219
      %p223 = pneg %p217
      %p224 = scmp.eq.s32.totalorder %s20, 1
      %p225 = por %p223, %p224
      %p226 = scmp.ne.s32.totalorder %s218, %s221
      %p227 = scmp.eq.s32.totalorder %s20, 0
      %p228 = por %p226, %p227
      %p229 = scmp.ne.s32.totalorder %s218, %s221
      %p230 = scmp.eq.s32.totalorder %s25, 1
      %p231 = por %p229, %p230
      %p232 = scmp.ne.s32.totalorder %s221, %s222
      %p233 = scmp.eq.s32.totalorder %s25, 0
      %p234 = por %p232, %p233
      %p235 = scmp.ne.s32.totalorder %s221, %s222
      %p236 = scmp.eq.s32.totalorder %s26, 1
      %p237 = por %p235, %p236
      %p239 = scmp.ne.s32.totalorder %s222, %s238
      %p240 = scmp.eq.s32.totalorder %s26, 0
      %p241 = por %p239, %p240
      %s242 = ssub.s32 %s20, %s27
      %p243 = scmp.eq.s32.totalorder %s242, 0
      %s245 = sadd.s32 %s244, 1
      %s246 = scalar_select %p243, %s244, %s245
      %p249 = pneg %p243
      %p250 = scmp.eq.s32.totalorder %s20, 1
      %p251 = por %p249, %p250
      %p252 = scmp.ne.s32.totalorder %s244, %s247
      %p253 = scmp.eq.s32.totalorder %s20, 0
      %p254 = por %p252, %p253
      %p255 = scmp.ne.s32.totalorder %s244, %s247
      %p256 = scmp.eq.s32.totalorder %s25, 1
      %p257 = por %p255, %p256
      %p258 = scmp.ne.s32.totalorder %s247, %s248
      %p259 = scmp.eq.s32.totalorder %s25, 0
      %p260 = por %p258, %p259
      %p261 = scmp.ne.s32.totalorder %s247, %s248
      %p262 = scmp.eq.s32.totalorder %s26, 1
      %p263 = por %p261, %p262
      %p265 = scmp.ne.s32.totalorder %s248, %s264
      %p266 = scmp.eq.s32.totalorder %s26, 0
      %p267 = por %p265, %p266
      %s268 = ssub.s32 %s20, %s27
      %p269 = scmp.eq.s32.totalorder %s268, 0
      %s271 = sadd.s32 %s270, 1
      %s272 = scalar_select %p269, %s270, %s271
      %p275 = pneg %p269
      %p276 = scmp.eq.s32.totalorder %s20, 1
      %p277 = por %p275, %p276
      %p278 = scmp.ne.s32.totalorder %s270, %s273
      %p279 = scmp.eq.s32.totalorder %s20, 0
      %p280 = por %p278, %p279
      %p281 = scmp.ne.s32.totalorder %s270, %s273
      %p282 = scmp.eq.s32.totalorder %s25, 1
      %p283 = por %p281, %p282
      %p284 = scmp.ne.s32.totalorder %s273, %s274
      %p285 = scmp.eq.s32.totalorder %s25, 0
      %p286 = por %p284, %p285
      %p287 = scmp.ne.s32.totalorder %s273, %s274
      %p288 = scmp.eq.s32.totalorder %s26, 1
      %p289 = por %p287, %p288
      %p291 = scmp.ne.s32.totalorder %s274, %s290
      %p292 = scmp.eq.s32.totalorder %s26, 0
      %p293 = por %p291, %p292
      %s295 = sadd.s32 %s294, 1
      %p298 = scmp.eq.s32.totalorder %s20, 1
      %p299 = scmp.ne.s32.totalorder %s294, %s296
      %p300 = scmp.eq.s32.totalorder %s20, 0
      %p301 = por %p299, %p300
      %p302 = scmp.ne.s32.totalorder %s294, %s296
      %p303 = scmp.eq.s32.totalorder %s25, 1
      %p304 = por %p302, %p303
      %p305 = scmp.ne.s32.totalorder %s296, %s297
      %p306 = scmp.eq.s32.totalorder %s25, 0
      %p307 = por %p305, %p306
      %p308 = scmp.ne.s32.totalorder %s296, %s297
      %p309 = scmp.eq.s32.totalorder %s26, 1
      %p310 = por %p308, %p309
      %p312 = scmp.ne.s32.totalorder %s297, %s311
      %p313 = scmp.eq.s32.totalorder %s26, 0
      %p314 = por %p312, %p313
      %s316 = sadd.s32 %s315, 1
      %p319 = scmp.eq.s32.totalorder %s20, 1
      %p320 = scmp.ne.s32.totalorder %s315, %s317
      %p321 = scmp.eq.s32.totalorder %s20, 0
      %p322 = por %p320, %p321
      %p323 = scmp.ne.s32.totalorder %s315, %s317
      %p324 = scmp.eq.s32.totalorder %s25, 1
      %p325 = por %p323, %p324
      %p326 = scmp.ne.s32.totalorder %s317, %s318
      %p327 = scmp.eq.s32.totalorder %s25, 0
      %p328 = por %p326, %p327
      %p329 = scmp.ne.s32.totalorder %s317, %s318
      %p330 = scmp.eq.s32.totalorder %s26, 1
      %p331 = por %p329, %p330
      %p333 = scmp.ne.s32.totalorder %s318, %s332
      %p334 = scmp.eq.s32.totalorder %s26, 0
      %p335 = por %p333, %p334
      %s337 = sadd.s32 %s336, 1
      %p340 = scmp.eq.s32.totalorder %s20, 1
      %p341 = scmp.ne.s32.totalorder %s336, %s338
      %p342 = scmp.eq.s32.totalorder %s20, 0
      %p343 = por %p341, %p342
      %p344 = scmp.ne.s32.totalorder %s336, %s338
      %p345 = scmp.eq.s32.totalorder %s25, 1
      %p346 = por %p344, %p345
      %p347 = scmp.ne.s32.totalorder %s338, %s339
      %p348 = scmp.eq.s32.totalorder %s25, 0
      %p349 = por %p347, %p348
      %p350 = scmp.ne.s32.totalorder %s338, %s339
      %p351 = scmp.eq.s32.totalorder %s26, 1
      %p352 = por %p350, %p351
      %p354 = scmp.ne.s32.totalorder %s339, %s353
      %p355 = scmp.eq.s32.totalorder %s26, 0
      %p356 = por %p354, %p355
      %p357 = scmp.le.s32.totalorder 1, %s20
      %p358 = scmp.lt.s32.totalorder %s20, 3
      %p359 = pnand %p357, %p358
      %p360 = pneg %p359
      // Predicated region
      $region9: #{transformer_forward.1} parent=5 // pred_check
        _
      $region10: #{transformer_forward.1} parent=5 // pred_check_branch
        %362 = sbr.rel (%p359) target = $region12
      $region11: #{transformer_forward.1} parent=5 // pred_region
        %s363 = ssub.s32 %s20, 1
        // Predicated region
        $region13: #{transformer_forward.1} parent=11 // pred_check
          %p364 = pneg %p41
        $region14: #{transformer_forward.1} parent=11 // pred_check_branch
          %366 = sbr.rel (%p364) target = $region16
        $region15: #{transformer_forward.1} parent=11 // pred_region
          _
        $region16: #{transformer_forward.1} parent=11 // pred_fallthru
          _
        // Predicated region
        $region17: #{transformer_forward.1} parent=11 // pred_check
          %p367 = pneg %p62
        $region18: #{transformer_forward.1} parent=11 // pred_check_branch
          %369 = sbr.rel (%p367) target = $region20
        $region19: #{transformer_forward.1} parent=11 // pred_region
          _
        $region20: #{transformer_forward.1} parent=11 // pred_fallthru
          _
        // Predicated region
        $region21: #{transformer_forward.1} parent=11 // pred_check
          %p370 = pneg %p83
        $region22: #{transformer_forward.1} parent=11 // pred_check_branch
          %372 = sbr.rel (%p370) target = $region24
        $region23: #{transformer_forward.1} parent=11 // pred_region
          _
        $region24: #{transformer_forward.1} parent=11 // pred_fallthru
          _
        // Predicated region
        $region25: #{transformer_forward.1} parent=11 // pred_check
          %p373 = pneg %p104
        $region26: #{transformer_forward.1} parent=11 // pred_check_branch
          %375 = sbr.rel (%p373) target = $region28
        $region27: #{transformer_forward.1} parent=11 // pred_region
          _
        $region28: #{transformer_forward.1} parent=11 // pred_fallthru
          _
        // Predicated region
        $region29: #{transformer_forward.1} parent=11 // pred_check
          %p376 = pneg %p307
        $region30: #{transformer_forward.1} parent=11 // pred_check_branch
          %378 = sbr.rel (%p376) target = $region32
        $region31: #{transformer_forward.1} parent=11 // pred_region
          _
        $region32: #{transformer_forward.1} parent=11 // pred_fallthru
          _
        // Predicated region
        $region33: #{transformer_forward.1} parent=11 // pred_check
          %p379 = pneg %p328
        $region34: #{transformer_forward.1} parent=11 // pred_check_branch
          %381 = sbr.rel (%p379) target = $region36
        $region35: #{transformer_forward.1} parent=11 // pred_region
          _
        $region36: #{transformer_forward.1} parent=11 // pred_fallthru
          _
      $region12: #{transformer_forward.1} parent=5 // pred_fallthru
        _
      %p382 = scmp.lt.s32.totalorder %s20, 2
      // Predicated region
      $region37: #{transformer_forward.1} parent=5 // pred_check
        %p383 = pneg %p382
      $region38: #{transformer_forward.1} parent=5 // pred_check_branch
        %385 = sbr.rel (%p383) target = $region40
      $region39: #{transformer_forward.1} parent=5 // pred_region
        // Predicated region
        $region41: #{transformer_forward.1} parent=39 // pred_check
          %p386 = pneg %p124
        $region42: #{transformer_forward.1} parent=39 // pred_check_branch
          %388 = sbr.rel (%p386) target = $region44
        $region43: #{transformer_forward.1} parent=39 // pred_region
          %p389 = scmp.lt.s32.totalorder %s20, 1
          %s390 = scalar_select %p389, %s20, 1
          %s391 = smul.addr %s390, 4
          %s392 = smul.addr %s391, 4
          %s393 = scalar_lea.vmem %s4, %s392
        $region44: #{transformer_forward.1} parent=39 // pred_fallthru
          _
        // Predicated region
        $region45: #{transformer_forward.1} parent=39 // pred_check
          %p394 = pneg %p150
        $region46: #{transformer_forward.1} parent=39 // pred_check_branch
          %396 = sbr.rel (%p394) target = $region48
        $region47: #{transformer_forward.1} parent=39 // pred_region
          %p397 = scmp.lt.s32.totalorder %s20, 1
          %s398 = scalar_select %p397, %s20, 1
          %s399 = scalar_lea.vmem %s5, %s398
        $region48: #{transformer_forward.1} parent=39 // pred_fallthru
          _
        // Predicated region
        $region49: #{transformer_forward.1} parent=39 // pred_check
          %p400 = pneg %p176
        $region50: #{transformer_forward.1} parent=39 // pred_check_branch
          %402 = sbr.rel (%p400) target = $region52
        $region51: #{transformer_forward.1} parent=39 // pred_region
          %p403 = scmp.lt.s32.totalorder %s20, 1
          %s404 = scalar_select %p403, %s20, 1
          %s405 = smul.addr %s404, 4
          %s406 = smul.addr %s405, 4
          %s407 = scalar_lea.vmem %s6, %s406
        $region52: #{transformer_forward.1} parent=39 // pred_fallthru
          _
        // Predicated region
        $region53: #{transformer_forward.1} parent=39 // pred_check
          %p408 = pneg %p202
        $region54: #{transformer_forward.1} parent=39 // pred_check_branch
          %410 = sbr.rel (%p408) target = $region56
        $region55: #{transformer_forward.1} parent=39 // pred_region
          %p411 = scmp.lt.s32.totalorder %s20, 1
          %s412 = scalar_select %p411, %s20, 1
          %s413 = smul.addr %s412, 8
          %s414 = scalar_lea.vmem %s7, %s413
        $region56: #{transformer_forward.1} parent=39 // pred_fallthru
          _
        // Predicated region
        $region57: #{transformer_forward.1} parent=39 // pred_check
          %p415 = pneg %p228
        $region58: #{transformer_forward.1} parent=39 // pred_check_branch
          %417 = sbr.rel (%p415) target = $region60
        $region59: #{transformer_forward.1} parent=39 // pred_region
          %p418 = scmp.lt.s32.totalorder %s20, 1
          %s419 = scalar_select %p418, %s20, 1
          %s420 = smul.addr %s419, 64
          %s421 = smul.addr %s420, 4
          %s422 = scalar_lea.vmem %s8, %s421
        $region60: #{transformer_forward.1} parent=39 // pred_fallthru
          _
        // Predicated region
        $region61: #{transformer_forward.1} parent=39 // pred_check
          %p423 = pneg %p254
        $region62: #{transformer_forward.1} parent=39 // pred_check_branch
          %425 = sbr.rel (%p423) target = $region64
        $region63: #{transformer_forward.1} parent=39 // pred_region
          %p426 = scmp.lt.s32.totalorder %s20, 1
          %s427 = scalar_select %p426, %s20, 1
          %s428 = smul.addr %s427, 16
          %s429 = scalar_lea.vmem %s9, %s428
        $region64: #{transformer_forward.1} parent=39 // pred_fallthru
          _
        // Predicated region
        $region65: #{transformer_forward.1} parent=39 // pred_check
          %p430 = pneg %p280
        $region66: #{transformer_forward.1} parent=39 // pred_check_branch
          %432 = sbr.rel (%p430) target = $region68
        $region67: #{transformer_forward.1} parent=39 // pred_region
          %p433 = scmp.lt.s32.totalorder %s20, 1
          %s434 = scalar_select %p433, %s20, 1
          %s435 = smul.addr %s434, 256
          %s436 = smul.addr %s435, 4
          %s437 = scalar_lea.vmem %s10, %s436
        $region68: #{transformer_forward.1} parent=39 // pred_fallthru
          _
      $region40: #{transformer_forward.1} parent=5 // pred_fallthru
        _
      %p438 = scmp.le.s32.totalorder 1, %s20
      %p439 = scmp.lt.s32.totalorder %s20, 3
      %p440 = pnand %p438, %p439
      %p441 = pneg %p440
      // Predicated region
      $region69: #{transformer_forward.1} parent=5 // pred_check
        _
      $region70: #{transformer_forward.1} parent=5 // pred_check_branch
        %443 = sbr.rel (%p440) target = $region72
      $region71: #{transformer_forward.1} parent=5 // pred_region
        %s444 = ssub.s32 %s20, 1
        %p445 = pneg %p41
        %p446 = pneg %p38
        %p447 = pneg %p62
        %p448 = pneg %p59
        %p449 = pneg %p83
        %p450 = pneg %p80
        %p451 = pneg %p104
        %p452 = pneg %p101
        %p453 = scmp.lt.s32.totalorder %s25, 1
        %s454 = scalar_select %p453, %s25, 1
        %s455 = smul.addr %s454, 4
        %s456 = smul.addr %s455, 4
        %s457 = scalar_lea.vmem %s4, %s456
        %p458 = pneg %p130
        %p459 = pneg %p127
        %p460 = scmp.lt.s32.totalorder %s25, 1
        %s461 = scalar_select %p460, %s25, 1
        %s462 = scalar_lea.vmem %s5, %s461
        %p463 = pneg %p156
        %p464 = pneg %p153
        %p465 = scmp.lt.s32.totalorder %s25, 1
        %s466 = scalar_select %p465, %s25, 1
        %s467 = smul.addr %s466, 4
        %s468 = smul.addr %s467, 4
        %s469 = scalar_lea.vmem %s6, %s468
        %p470 = pneg %p182
        %p471 = pneg %p179
        %p472 = scmp.lt.s32.totalorder %s25, 1
        %s473 = scalar_select %p472, %s25, 1
        %s474 = smul.addr %s473, 8
        %s475 = scalar_lea.vmem %s7, %s474
        %p476 = pneg %p208
        %p477 = pneg %p205
        %p478 = scmp.lt.s32.totalorder %s25, 1
        %s479 = scalar_select %p478, %s25, 1
        %s480 = smul.addr %s479, 64
        %s481 = smul.addr %s480, 4
        %s482 = scalar_lea.vmem %s8, %s481
        %p483 = pneg %p234
        %p484 = pneg %p231
        %p485 = scmp.lt.s32.totalorder %s25, 1
        %s486 = scalar_select %p485, %s25, 1
        %s487 = smul.addr %s486, 16
        %s488 = scalar_lea.vmem %s9, %s487
        %p489 = pneg %p260
        %p490 = pneg %p257
        %p491 = scmp.lt.s32.totalorder %s25, 1
        %s492 = scalar_select %p491, %s25, 1
        %s493 = smul.addr %s492, 256
        %s494 = smul.addr %s493, 4
        %s495 = scalar_lea.vmem %s10, %s494
        %p496 = pneg %p286
        %p497 = pneg %p283
        %p498 = pneg %p307
        %p499 = pneg %p304
        %p500 = pneg %p328
        %p501 = pneg %p325
        %p502 = pneg %p349
        %p503 = pneg %p346
        %p504 = scmp.lt.s32.totalorder %s25, 1
        %s505 = scalar_select %p504, %s25, 1
        %s506 = smul.addr %s505, 4
        %s507 = smul.addr %s506, 4
        %s508 = scalar_lea.vmem %s4, %s507
        %p509 = scmp.lt.s32.totalorder %s25, 1
        %s510 = scalar_select %p509, %s25, 1
        %s511 = scalar_lea.vmem %s5, %s510
        %p512 = scmp.lt.s32.totalorder %s25, 1
        %s513 = scalar_select %p512, %s25, 1
        %s514 = smul.addr %s513, 4
        %s515 = smul.addr %s514, 4
        %s516 = scalar_lea.vmem %s6, %s515
        %p517 = scmp.lt.s32.totalorder %s25, 1
        %s518 = scalar_select %p517, %s25, 1
        %s519 = smul.addr %s518, 8
        %s520 = scalar_lea.vmem %s7, %s519
        %p521 = scmp.lt.s32.totalorder %s25, 1
        %s522 = scalar_select %p521, %s25, 1
        %s523 = smul.addr %s522, 64
        %s524 = smul.addr %s523, 4
        %s525 = scalar_lea.vmem %s8, %s524
        %p526 = scmp.lt.s32.totalorder %s25, 1
        %s527 = scalar_select %p526, %s25, 1
        %s528 = smul.addr %s527, 16
        %s529 = scalar_lea.vmem %s9, %s528
        %p530 = scmp.lt.s32.totalorder %s25, 1
        %s531 = scalar_select %p530, %s25, 1
        %s532 = smul.addr %s531, 256
        %s533 = smul.addr %s532, 4
        %s534 = scalar_lea.vmem %s10, %s533
        %p536 = scmp.eq.s32.totalorder %s25, 0
        // Predicated region
        $region73: #{transformer_forward.1} parent=71 // pred_check
          %p537 = pneg %p536
        $region74: #{transformer_forward.1} parent=71 // pred_check_branch
          %539 = sbr.rel (%p537) target = $region76
        $region75: #{transformer_forward.1} parent=71 // pred_region
          %v540 = vld [vmem:[%s0] sm:$0xff]
          %v541 = vld [vmem:[%s0 + $0x8] sm:$0xff]
          %v542 = vpack.c.bf16 %v541, %v540
          %v543 = vld [vmem:[%s2] sm:$0xf]
          %v544 = vld [vmem:[%s3] sm:$0x1]
          %v546 = vperm.slane %v544, 0
          %vm548 = vcmask 64512
          %v550 = vsel %vm548, %v542, 0
          %vm552 = vcmask 1043456
          %v554 = vsel %vm552, %v543, 0
          %556 = vmatpush.bf16.msra.mxu0 0
          %557 = vmatpush.bf16.msra.mxu0 0
          %558 = vmatpush.bf16.msra.mxu0 0
          %559 = vmatpush.bf16.msra.mxu0 0
          %560 = vmatpush.bf16.msra.mxu0 0
          %561 = vmatpush.bf16.msra.mxu0 0
          %562 = vmatpush.bf16.msra.mxu0 0
          %563 = vmatpush.bf16.msra.mxu0 %v554
          %564 = vmatmul.bf16.gmra.mxu0 %v550
          %v565 = vpop.f32.mrf.mxu0
          %v566 = vadd.f32 %v546, %v565
          %v567 = vpop.f32.mrf.mxu0
          %v568 = vadd.f32 %v546, %v567
          %569 = vdwg.mxu0
          %vm570 = vcmask 261120
          %571 = vst.msk [vmem:[#allocation2] sm:$0xff] %vm570, %v566
          %572 = vst.msk [vmem:[#allocation2 + $0x8] sm:$0xff] %vm570, %v568
        $region76: #{transformer_forward.1} parent=71 // pred_fallthru
          _
        %v573 = vld [vmem:[#allocation2] sm:$0xff]
        %v574 = vld [vmem:[#allocation2 + $0x8] sm:$0xff]
        %v575 = vld [vmem:[%s508] sm:$0xf]
        %v576 = vld [vmem:[%s508 + $0x4] sm:$0xf]
        %v577 = vld [vmem:[%s508 + $0x8] sm:$0xf]
        %v578 = vld [vmem:[%s508 + $0xc] sm:$0xf]
        %v579 = vld [vmem:[%s511] sm:$0x1]
        %v580 = vld [vmem:[%s516] sm:$0xf]
        %v581 = vld [vmem:[%s516 + $0x4] sm:$0xf]
        %v582 = vld [vmem:[%s516 + $0x8] sm:$0xf]
        %v583 = vld [vmem:[%s516 + $0xc] sm:$0xf]
        %v584 = vld [vmem:[%s520] sm:$0x3f]
        %v585 = vld [vmem:[%s525] sm:$0xff]
        %v586 = vld [vmem:[%s525 + $0x8] sm:$0xff]
        %v587 = vld [vmem:[%s525 + $0x10] sm:$0xff]
        %v588 = vld [vmem:[%s525 + $0x18] sm:$0xff]
        %v589 = vld [vmem:[%s525 + $0x20] sm:$0xff]
        %v590 = vld [vmem:[%s525 + $0x28] sm:$0xff]
        %v591 = vld [vmem:[%s525 + $0x30] sm:$0xff]
        %v592 = vld [vmem:[%s525 + $0x38] sm:$0xff]
        %v593 = vld [vmem:[%s525 + $0x40] sm:$0xff]
        %v594 = vld [vmem:[%s525 + $0x48] sm:$0xff]
        %v595 = vld [vmem:[%s525 + $0x50] sm:$0xff]
        %v596 = vld [vmem:[%s525 + $0x58] sm:$0xff]
        %v597 = vld [vmem:[%s525 + $0x60] sm:$0xff]
        %v598 = vld [vmem:[%s525 + $0x68] sm:$0xff]
        %v599 = vld [vmem:[%s525 + $0x70] sm:$0xff]
        %v600 = vld [vmem:[%s525 + $0x78] sm:$0xff]
        %v601 = vld [vmem:[%s525 + $0x80] sm:$0xff]
        %v602 = vld [vmem:[%s525 + $0x88] sm:$0xff]
        %v603 = vld [vmem:[%s525 + $0x90] sm:$0xff]
        %v604 = vld [vmem:[%s525 + $0x98] sm:$0xff]
        %v605 = vld [vmem:[%s525 + $0xa0] sm:$0xff]
        %v606 = vld [vmem:[%s525 + $0xa8] sm:$0xff]
        %v607 = vld [vmem:[%s525 + $0xb0] sm:$0xff]
        %v608 = vld [vmem:[%s525 + $0xb8] sm:$0xff]
        %v609 = vld [vmem:[%s525 + $0xc0] sm:$0xff]
        %v610 = vld [vmem:[%s525 + $0xc8] sm:$0xff]
        %v611 = vld [vmem:[%s525 + $0xd0] sm:$0xff]
        %v612 = vld [vmem:[%s525 + $0xd8] sm:$0xff]
        %v613 = vld [vmem:[%s525 + $0xe0] sm:$0xff]
        %v614 = vld [vmem:[%s525 + $0xe8] sm:$0xff]
        %v615 = vld [vmem:[%s525 + $0xf0] sm:$0xff]
        %v616 = vld [vmem:[%s525 + $0xf8] sm:$0xff]
        %v617 = vld [vmem:[%s529] sm:$0xff]
        %v618 = vld [vmem:[%s529 + $0x8] sm:$0xff]
        %v619 = vld [vmem:[%s534] sm:$0xf]
        %v620 = vld [vmem:[%s534 + $0x4] sm:$0xf]
        %v621 = vld [vmem:[%s534 + $0x8] sm:$0xf]
        %v622 = vld [vmem:[%s534 + $0xc] sm:$0xf]
        %v623 = vld [vmem:[%s534 + $0x10] sm:$0xf]
        %v624 = vld [vmem:[%s534 + $0x14] sm:$0xf]
        %v625 = vld [vmem:[%s534 + $0x18] sm:$0xf]
        %v626 = vld [vmem:[%s534 + $0x1c] sm:$0xf]
        %v627 = vld [vmem:[%s534 + $0x20] sm:$0xf]
        %v628 = vld [vmem:[%s534 + $0x24] sm:$0xf]
        %v629 = vld [vmem:[%s534 + $0x28] sm:$0xf]
        %v630 = vld [vmem:[%s534 + $0x2c] sm:$0xf]
        %v631 = vld [vmem:[%s534 + $0x30] sm:$0xf]
        %v632 = vld [vmem:[%s534 + $0x34] sm:$0xf]
        %v633 = vld [vmem:[%s534 + $0x38] sm:$0xf]
        %v634 = vld [vmem:[%s534 + $0x3c] sm:$0xf]
        %v635 = vld [vmem:[%s534 + $0x40] sm:$0xf]
        %v636 = vld [vmem:[%s534 + $0x44] sm:$0xf]
        %v637 = vld [vmem:[%s534 + $0x48] sm:$0xf]
        %v638 = vld [vmem:[%s534 + $0x4c] sm:$0xf]
        %v639 = vld [vmem:[%s534 + $0x50] sm:$0xf]
        %v640 = vld [vmem:[%s534 + $0x54] sm:$0xf]
        %v641 = vld [vmem:[%s534 + $0x58] sm:$0xf]
        %v642 = vld [vmem:[%s534 + $0x5c] sm:$0xf]
        %v643 = vld [vmem:[%s534 + $0x60] sm:$0xf]
        %v644 = vld [vmem:[%s534 + $0x64] sm:$0xf]
        %v645 = vld [vmem:[%s534 + $0x68] sm:$0xf]
        %v646 = vld [vmem:[%s534 + $0x6c] sm:$0xf]
        %v647 = vld [vmem:[%s534 + $0x70] sm:$0xf]
        %v648 = vld [vmem:[%s534 + $0x74] sm:$0xf]
        %v649 = vld [vmem:[%s534 + $0x78] sm:$0xf]
        %v650 = vld [vmem:[%s534 + $0x7c] sm:$0xf]
        %v651 = vld [vmem:[%s534 + $0x80] sm:$0xf]
        %v652 = vld [vmem:[%s534 + $0x84] sm:$0xf]
        %v653 = vld [vmem:[%s534 + $0x88] sm:$0xf]
        %v654 = vld [vmem:[%s534 + $0x8c] sm:$0xf]
        %v655 = vld [vmem:[%s534 + $0x90] sm:$0xf]
        %v656 = vld [vmem:[%s534 + $0x94] sm:$0xf]
        %v657 = vld [vmem:[%s534 + $0x98] sm:$0xf]
        %v658 = vld [vmem:[%s534 + $0x9c] sm:$0xf]
        %v659 = vld [vmem:[%s534 + $0xa0] sm:$0xf]
        %v660 = vld [vmem:[%s534 + $0xa4] sm:$0xf]
        %v661 = vld [vmem:[%s534 + $0xa8] sm:$0xf]
        %v662 = vld [vmem:[%s534 + $0xac] sm:$0xf]
        %v663 = vld [vmem:[%s534 + $0xb0] sm:$0xf]
        %v664 = vld [vmem:[%s534 + $0xb4] sm:$0xf]
        %v665 = vld [vmem:[%s534 + $0xb8] sm:$0xf]
        %v666 = vld [vmem:[%s534 + $0xbc] sm:$0xf]
        %v667 = vld [vmem:[%s534 + $0xc0] sm:$0xf]
        %v668 = vld [vmem:[%s534 + $0xc4] sm:$0xf]
        %v669 = vld [vmem:[%s534 + $0xc8] sm:$0xf]
        %v670 = vld [vmem:[%s534 + $0xcc] sm:$0xf]
        %v671 = vld [vmem:[%s534 + $0xd0] sm:$0xf]
        %v672 = vld [vmem:[%s534 + $0xd4] sm:$0xf]
        %v673 = vld [vmem:[%s534 + $0xd8] sm:$0xf]
        %v674 = vld [vmem:[%s534 + $0xdc] sm:$0xf]
        %v675 = vld [vmem:[%s534 + $0xe0] sm:$0xf]
        %v676 = vld [vmem:[%s534 + $0xe4] sm:$0xf]
        %v677 = vld [vmem:[%s534 + $0xe8] sm:$0xf]
        %v678 = vld [vmem:[%s534 + $0xec] sm:$0xf]
        %v679 = vld [vmem:[%s534 + $0xf0] sm:$0xf]
        %v680 = vld [vmem:[%s534 + $0xf4] sm:$0xf]
        %v681 = vld [vmem:[%s534 + $0xf8] sm:$0xf]
        %v682 = vld [vmem:[%s534 + $0xfc] sm:$0xf]
        %v683 = vld [vmem:[%s534 + $0x100] sm:$0xf]
        %v684 = vld [vmem:[%s534 + $0x104] sm:$0xf]
        %v685 = vld [vmem:[%s534 + $0x108] sm:$0xf]
        %v686 = vld [vmem:[%s534 + $0x10c] sm:$0xf]
        %v687 = vld [vmem:[%s534 + $0x110] sm:$0xf]
        %v688 = vld [vmem:[%s534 + $0x114] sm:$0xf]
        %v689 = vld [vmem:[%s534 + $0x118] sm:$0xf]
        %v690 = vld [vmem:[%s534 + $0x11c] sm:$0xf]
        %v691 = vld [vmem:[%s534 + $0x120] sm:$0xf]
        %v692 = vld [vmem:[%s534 + $0x124] sm:$0xf]
        %v693 = vld [vmem:[%s534 + $0x128] sm:$0xf]
        %v694 = vld [vmem:[%s534 + $0x12c] sm:$0xf]
        %v695 = vld [vmem:[%s534 + $0x130] sm:$0xf]
        %v696 = vld [vmem:[%s534 + $0x134] sm:$0xf]
        %v697 = vld [vmem:[%s534 + $0x138] sm:$0xf]
        %v698 = vld [vmem:[%s534 + $0x13c] sm:$0xf]
        %v699 = vld [vmem:[%s534 + $0x140] sm:$0xf]
        %v700 = vld [vmem:[%s534 + $0x144] sm:$0xf]
        %v701 = vld [vmem:[%s534 + $0x148] sm:$0xf]
        %v702 = vld [vmem:[%s534 + $0x14c] sm:$0xf]
        %v703 = vld [vmem:[%s534 + $0x150] sm:$0xf]
        %v704 = vld [vmem:[%s534 + $0x154] sm:$0xf]
        %v705 = vld [vmem:[%s534 + $0x158] sm:$0xf]
        %v706 = vld [vmem:[%s534 + $0x15c] sm:$0xf]
        %v707 = vld [vmem:[%s534 + $0x160] sm:$0xf]
        %v708 = vld [vmem:[%s534 + $0x164] sm:$0xf]
        %v709 = vld [vmem:[%s534 + $0x168] sm:$0xf]
        %v710 = vld [vmem:[%s534 + $0x16c] sm:$0xf]
        %v711 = vld [vmem:[%s534 + $0x170] sm:$0xf]
        %v712 = vld [vmem:[%s534 + $0x174] sm:$0xf]
        %v713 = vld [vmem:[%s534 + $0x178] sm:$0xf]
        %v714 = vld [vmem:[%s534 + $0x17c] sm:$0xf]
        %v715 = vld [vmem:[%s534 + $0x180] sm:$0xf]
        %v716 = vld [vmem:[%s534 + $0x184] sm:$0xf]
        %v717 = vld [vmem:[%s534 + $0x188] sm:$0xf]
        %v718 = vld [vmem:[%s534 + $0x18c] sm:$0xf]
        %v719 = vld [vmem:[%s534 + $0x190] sm:$0xf]
        %v720 = vld [vmem:[%s534 + $0x194] sm:$0xf]
        %v721 = vld [vmem:[%s534 + $0x198] sm:$0xf]
        %v722 = vld [vmem:[%s534 + $0x19c] sm:$0xf]
        %v723 = vld [vmem:[%s534 + $0x1a0] sm:$0xf]
        %v724 = vld [vmem:[%s534 + $0x1a4] sm:$0xf]
        %v725 = vld [vmem:[%s534 + $0x1a8] sm:$0xf]
        %v726 = vld [vmem:[%s534 + $0x1ac] sm:$0xf]
        %v727 = vld [vmem:[%s534 + $0x1b0] sm:$0xf]
        %v728 = vld [vmem:[%s534 + $0x1b4] sm:$0xf]
        %v729 = vld [vmem:[%s534 + $0x1b8] sm:$0xf]
        %v730 = vld [vmem:[%s534 + $0x1bc] sm:$0xf]
        %v731 = vld [vmem:[%s534 + $0x1c0] sm:$0xf]
        %v732 = vld [vmem:[%s534 + $0x1c4] sm:$0xf]
        %v733 = vld [vmem:[%s534 + $0x1c8] sm:$0xf]
        %v734 = vld [vmem:[%s534 + $0x1cc] sm:$0xf]
        %v735 = vld [vmem:[%s534 + $0x1d0] sm:$0xf]
        %v736 = vld [vmem:[%s534 + $0x1d4] sm:$0xf]
        %v737 = vld [vmem:[%s534 + $0x1d8] sm:$0xf]
        %v738 = vld [vmem:[%s534 + $0x1dc] sm:$0xf]
        %v739 = vld [vmem:[%s534 + $0x1e0] sm:$0xf]
        %v740 = vld [vmem:[%s534 + $0x1e4] sm:$0xf]
        %v741 = vld [vmem:[%s534 + $0x1e8] sm:$0xf]
        %v742 = vld [vmem:[%s534 + $0x1ec] sm:$0xf]
        %v743 = vld [vmem:[%s534 + $0x1f0] sm:$0xf]
        %v744 = vld [vmem:[%s534 + $0x1f4] sm:$0xf]
        %v745 = vld [vmem:[%s534 + $0x1f8] sm:$0xf]
        %v746 = vld [vmem:[%s534 + $0x1fc] sm:$0xf]
        %v747 = vld [vmem:[%s534 + $0x200] sm:$0xf]
        %v748 = vld [vmem:[%s534 + $0x204] sm:$0xf]
        %v749 = vld [vmem:[%s534 + $0x208] sm:$0xf]
        %v750 = vld [vmem:[%s534 + $0x20c] sm:$0xf]
        %v751 = vld [vmem:[%s534 + $0x210] sm:$0xf]
        %v752 = vld [vmem:[%s534 + $0x214] sm:$0xf]
        %v753 = vld [vmem:[%s534 + $0x218] sm:$0xf]
        %v754 = vld [vmem:[%s534 + $0x21c] sm:$0xf]
        %v755 = vld [vmem:[%s534 + $0x220] sm:$0xf]
        %v756 = vld [vmem:[%s534 + $0x224] sm:$0xf]
        %v757 = vld [vmem:[%s534 + $0x228] sm:$0xf]
        %v758 = vld [vmem:[%s534 + $0x22c] sm:$0xf]
        %v759 = vld [vmem:[%s534 + $0x230] sm:$0xf]
        %v760 = vld [vmem:[%s534 + $0x234] sm:$0xf]
        %v761 = vld [vmem:[%s534 + $0x238] sm:$0xf]
        %v762 = vld [vmem:[%s534 + $0x23c] sm:$0xf]
        %v763 = vld [vmem:[%s534 + $0x240] sm:$0xf]
        %v764 = vld [vmem:[%s534 + $0x244] sm:$0xf]
        %v765 = vld [vmem:[%s534 + $0x248] sm:$0xf]
        %v766 = vld [vmem:[%s534 + $0x24c] sm:$0xf]
        %v767 = vld [vmem:[%s534 + $0x250] sm:$0xf]
        %v768 = vld [vmem:[%s534 + $0x254] sm:$0xf]
        %v769 = vld [vmem:[%s534 + $0x258] sm:$0xf]
        %v770 = vld [vmem:[%s534 + $0x25c] sm:$0xf]
        %v771 = vld [vmem:[%s534 + $0x260] sm:$0xf]
        %v772 = vld [vmem:[%s534 + $0x264] sm:$0xf]
        %v773 = vld [vmem:[%s534 + $0x268] sm:$0xf]
        %v774 = vld [vmem:[%s534 + $0x26c] sm:$0xf]
        %v775 = vld [vmem:[%s534 + $0x270] sm:$0xf]
        %v776 = vld [vmem:[%s534 + $0x274] sm:$0xf]
        %v777 = vld [vmem:[%s534 + $0x278] sm:$0xf]
        %v778 = vld [vmem:[%s534 + $0x27c] sm:$0xf]
        %v779 = vld [vmem:[%s534 + $0x280] sm:$0xf]
        %v780 = vld [vmem:[%s534 + $0x284] sm:$0xf]
        %v781 = vld [vmem:[%s534 + $0x288] sm:$0xf]
        %v782 = vld [vmem:[%s534 + $0x28c] sm:$0xf]
        %v783 = vld [vmem:[%s534 + $0x290] sm:$0xf]
        %v784 = vld [vmem:[%s534 + $0x294] sm:$0xf]
        %v785 = vld [vmem:[%s534 + $0x298] sm:$0xf]
        %v786 = vld [vmem:[%s534 + $0x29c] sm:$0xf]
        %v787 = vld [vmem:[%s534 + $0x2a0] sm:$0xf]
        %v788 = vld [vmem:[%s534 + $0x2a4] sm:$0xf]
        %v789 = vld [vmem:[%s534 + $0x2a8] sm:$0xf]
        %v790 = vld [vmem:[%s534 + $0x2ac] sm:$0xf]
        %v791 = vld [vmem:[%s534 + $0x2b0] sm:$0xf]
        %v792 = vld [vmem:[%s534 + $0x2b4] sm:$0xf]
        %v793 = vld [vmem:[%s534 + $0x2b8] sm:$0xf]
        %v794 = vld [vmem:[%s534 + $0x2bc] sm:$0xf]
        %v795 = vld [vmem:[%s534 + $0x2c0] sm:$0xf]
        %v796 = vld [vmem:[%s534 + $0x2c4] sm:$0xf]
        %v797 = vld [vmem:[%s534 + $0x2c8] sm:$0xf]
        %v798 = vld [vmem:[%s534 + $0x2cc] sm:$0xf]
        %v799 = vld [vmem:[%s534 + $0x2d0] sm:$0xf]
        %v800 = vld [vmem:[%s534 + $0x2d4] sm:$0xf]
        %v801 = vld [vmem:[%s534 + $0x2d8] sm:$0xf]
        %v802 = vld [vmem:[%s534 + $0x2dc] sm:$0xf]
        %v803 = vld [vmem:[%s534 + $0x2e0] sm:$0xf]
        %v804 = vld [vmem:[%s534 + $0x2e4] sm:$0xf]
        %v805 = vld [vmem:[%s534 + $0x2e8] sm:$0xf]
        %v806 = vld [vmem:[%s534 + $0x2ec] sm:$0xf]
        %v807 = vld [vmem:[%s534 + $0x2f0] sm:$0xf]
        %v808 = vld [vmem:[%s534 + $0x2f4] sm:$0xf]
        %v809 = vld [vmem:[%s534 + $0x2f8] sm:$0xf]
        %v810 = vld [vmem:[%s534 + $0x2fc] sm:$0xf]
        %v811 = vld [vmem:[%s534 + $0x300] sm:$0xf]
        %v812 = vld [vmem:[%s534 + $0x304] sm:$0xf]
        %v813 = vld [vmem:[%s534 + $0x308] sm:$0xf]
        %v814 = vld [vmem:[%s534 + $0x30c] sm:$0xf]
        %v815 = vld [vmem:[%s534 + $0x310] sm:$0xf]
        %v816 = vld [vmem:[%s534 + $0x314] sm:$0xf]
        %v817 = vld [vmem:[%s534 + $0x318] sm:$0xf]
        %v818 = vld [vmem:[%s534 + $0x31c] sm:$0xf]
        %v819 = vld [vmem:[%s534 + $0x320] sm:$0xf]
        %v820 = vld [vmem:[%s534 + $0x324] sm:$0xf]
        %v821 = vld [vmem:[%s534 + $0x328] sm:$0xf]
        %v822 = vld [vmem:[%s534 + $0x32c] sm:$0xf]
        %v823 = vld [vmem:[%s534 + $0x330] sm:$0xf]
        %v824 = vld [vmem:[%s534 + $0x334] sm:$0xf]
        %v825 = vld [vmem:[%s534 + $0x338] sm:$0xf]
        %v826 = vld [vmem:[%s534 + $0x33c] sm:$0xf]
        %v827 = vld [vmem:[%s534 + $0x340] sm:$0xf]
        %v828 = vld [vmem:[%s534 + $0x344] sm:$0xf]
        %v829 = vld [vmem:[%s534 + $0x348] sm:$0xf]
        %v830 = vld [vmem:[%s534 + $0x34c] sm:$0xf]
        %v831 = vld [vmem:[%s534 + $0x350] sm:$0xf]
        %v832 = vld [vmem:[%s534 + $0x354] sm:$0xf]
        %v833 = vld [vmem:[%s534 + $0x358] sm:$0xf]
        %v834 = vld [vmem:[%s534 + $0x35c] sm:$0xf]
        %v835 = vld [vmem:[%s534 + $0x360] sm:$0xf]
        %v836 = vld [vmem:[%s534 + $0x364] sm:$0xf]
        %v837 = vld [vmem:[%s534 + $0x368] sm:$0xf]
        %v838 = vld [vmem:[%s534 + $0x36c] sm:$0xf]
        %v839 = vld [vmem:[%s534 + $0x370] sm:$0xf]
        %v840 = vld [vmem:[%s534 + $0x374] sm:$0xf]
        %v841 = vld [vmem:[%s534 + $0x378] sm:$0xf]
        %v842 = vld [vmem:[%s534 + $0x37c] sm:$0xf]
        %v843 = vld [vmem:[%s534 + $0x380] sm:$0xf]
        %v844 = vld [vmem:[%s534 + $0x384] sm:$0xf]
        %v845 = vld [vmem:[%s534 + $0x388] sm:$0xf]
        %v846 = vld [vmem:[%s534 + $0x38c] sm:$0xf]
        %v847 = vld [vmem:[%s534 + $0x390] sm:$0xf]
        %v848 = vld [vmem:[%s534 + $0x394] sm:$0xf]
        %v849 = vld [vmem:[%s534 + $0x398] sm:$0xf]
        %v850 = vld [vmem:[%s534 + $0x39c] sm:$0xf]
        %v851 = vld [vmem:[%s534 + $0x3a0] sm:$0xf]
        %v852 = vld [vmem:[%s534 + $0x3a4] sm:$0xf]
        %v853 = vld [vmem:[%s534 + $0x3a8] sm:$0xf]
        %v854 = vld [vmem:[%s534 + $0x3ac] sm:$0xf]
        %v855 = vld [vmem:[%s534 + $0x3b0] sm:$0xf]
        %v856 = vld [vmem:[%s534 + $0x3b4] sm:$0xf]
        %v857 = vld [vmem:[%s534 + $0x3b8] sm:$0xf]
        %v858 = vld [vmem:[%s534 + $0x3bc] sm:$0xf]
        %v859 = vld [vmem:[%s534 + $0x3c0] sm:$0xf]
        %v860 = vld [vmem:[%s534 + $0x3c4] sm:$0xf]
        %v861 = vld [vmem:[%s534 + $0x3c8] sm:$0xf]
        %v862 = vld [vmem:[%s534 + $0x3cc] sm:$0xf]
        %v863 = vld [vmem:[%s534 + $0x3d0] sm:$0xf]
        %v864 = vld [vmem:[%s534 + $0x3d4] sm:$0xf]
        %v865 = vld [vmem:[%s534 + $0x3d8] sm:$0xf]
        %v866 = vld [vmem:[%s534 + $0x3dc] sm:$0xf]
        %v867 = vld [vmem:[%s534 + $0x3e0] sm:$0xf]
        %v868 = vld [vmem:[%s534 + $0x3e4] sm:$0xf]
        %v869 = vld [vmem:[%s534 + $0x3e8] sm:$0xf]
        %v870 = vld [vmem:[%s534 + $0x3ec] sm:$0xf]
        %v871 = vld [vmem:[%s534 + $0x3f0] sm:$0xf]
        %v872 = vld [vmem:[%s534 + $0x3f4] sm:$0xf]
        %v873 = vld [vmem:[%s534 + $0x3f8] sm:$0xf]
        %v874 = vld [vmem:[%s534 + $0x3fc] sm:$0xf]
        %v875 = vpack.c.bf16 %v574, %v573
        %v877 = vperm.slane %v579, 0
        %v883 = vunpack.c.l.b16 %v575
        %v884 = vunpack.c.l.b16 %v576
        %v885 = vunpack.c.l.b16 %v577
        %v886 = vunpack.c.l.b16 %v578
        %v887 = vpack.c.b16 %v884, %v883
        %v888 = vpack.c.b16 %v886, %v885
        %vm891 = vcmask 261120
        %v893 = vsel %vm891, %v875, 0
        %895 = vmatpush.bf16.msra.mxu0 0
        %896 = vmatpush.bf16.msra.mxu0 0
        %897 = vmatpush.bf16.msra.mxu0 0
        %898 = vmatpush.bf16.msra.mxu0 0
        %899 = vmatpush.bf16.msra.mxu0 0
        %900 = vmatpush.bf16.msra.mxu0 0
        %901 = vmatpush.bf16.msra.mxu0 %v888
        %902 = vmatpush.bf16.msra.mxu0 %v887
        %903 = vmatmul.bf16.gmra.mxu0 %v893
        %v904 = vpop.f32.mrf.mxu0
        %v905 = vadd.f32 %v877, %v904
        %v906 = vpop.f32.mrf.mxu0
        %v907 = vadd.f32 %v877, %v906
        %908 = vdwg.mxu0
        %909 = vxpose.xlu0.b32.start [1/16] %v905, 128
        %910 = vxpose.xlu0.b32.cont [2/16] %v907, 128
        %911 = vxpose.xlu0.b32.cont [3/16] 0.0, 128
        %912 = vxpose.xlu0.b32.cont [4/16] 0.0, 128
        %913 = vxpose.xlu0.b32.cont [5/16] 0.0, 128
        %914 = vxpose.xlu0.b32.cont [6/16] 0.0, 128
        %915 = vxpose.xlu0.b32.cont [7/16] 0.0, 128
        %916 = vxpose.xlu0.b32.cont [8/16] 0.0, 128
        %917 = vxpose.xlu0.b32.cont [9/16] 0.0, 128
        %918 = vxpose.xlu0.b32.cont [10/16] 0.0, 128
        %919 = vxpose.xlu0.b32.cont [11/16] 0.0, 128
        %920 = vxpose.xlu0.b32.cont [12/16] 0.0, 128
        %921 = vxpose.xlu0.b32.cont [13/16] 0.0, 128
        %922 = vxpose.xlu0.b32.cont [14/16] 0.0, 128
        %923 = vxpose.xlu0.b32.cont [15/16] 0.0, 128
        %924 = vxpose.xlu0.b32.end [16/16] 0.0, 128
        %v925 = vpop.trf.xlu0
        %v926 = vpop.trf.xlu0
        %v927 = vpop.trf.xlu0
        %v928 = vpop.trf.xlu0
        %v929 = vpop.trf.xlu0
        %v930 = vpop.trf.xlu0
        %v931 = vpop.trf.xlu0
        %v932 = vpop.trf.xlu0
        %v933 = vpop.trf.xlu0
        %v934 = vpop.trf.xlu0
        %v935 = vpop.trf.xlu0
        %v936 = vpop.trf.xlu0
        %v937 = vpop.trf.xlu0
        %v938 = vpop.trf.xlu0
        %v939 = vpop.trf.xlu0
        %v940 = vpop.trf.xlu0
        %941 = vxpose.xlu0.b32.start [1/16] %v925, 128
        %942 = vxpose.xlu0.b32.cont [2/16] 0.0, 128
        %943 = vxpose.xlu0.b32.cont [3/16] 0.0, 128
        %944 = vxpose.xlu0.b32.cont [4/16] 0.0, 128
        %945 = vxpose.xlu0.b32.cont [5/16] 0.0, 128
        %946 = vxpose.xlu0.b32.cont [6/16] 0.0, 128
        %947 = vxpose.xlu0.b32.cont [7/16] 0.0, 128
        %948 = vxpose.xlu0.b32.cont [8/16] 0.0, 128
        %949 = vxpose.xlu0.b32.cont [9/16] 0.0, 128
        %950 = vxpose.xlu0.b32.cont [10/16] 0.0, 128
        %951 = vxpose.xlu0.b32.cont [11/16] 0.0, 128
        %952 = vxpose.xlu0.b32.cont [12/16] 0.0, 128
        %953 = vxpose.xlu0.b32.cont [13/16] 0.0, 128
        %954 = vxpose.xlu0.b32.cont [14/16] 0.0, 128
        %955 = vxpose.xlu0.b32.cont [15/16] 0.0, 128
        %956 = vxpose.xlu0.b32.end [16/16] 0.0, 128
        %v957 = vpop.trf.xlu0
        %v958 = vpop.trf.xlu0
        %v959 = vpop.trf.xlu0
        %v960 = vpop.trf.xlu0
        %v961 = vpop.trf.xlu0
        %v962 = vpop.trf.xlu0
        %v963 = vpop.trf.xlu0
        %v964 = vpop.trf.xlu0
        %v965 = vpop.trf.xlu0
        %v966 = vpop.trf.xlu0
        %v967 = vpop.trf.xlu0
        %v968 = vpop.trf.xlu0
        %v969 = vpop.trf.xlu0
        %v970 = vpop.trf.xlu0
        %v971 = vpop.trf.xlu0
        %v972 = vpop.trf.xlu0
        %973 = vxpose.xlu0.b32.start [1/16] %v926, 128
        %974 = vxpose.xlu0.b32.cont [2/16] 0.0, 128
        %975 = vxpose.xlu0.b32.cont [3/16] 0.0, 128
        %976 = vxpose.xlu0.b32.cont [4/16] 0.0, 128
        %977 = vxpose.xlu0.b32.cont [5/16] 0.0, 128
        %978 = vxpose.xlu0.b32.cont [6/16] 0.0, 128
        %979 = vxpose.xlu0.b32.cont [7/16] 0.0, 128
        %980 = vxpose.xlu0.b32.cont [8/16] 0.0, 128
        %981 = vxpose.xlu0.b32.cont [9/16] 0.0, 128
        %982 = vxpose.xlu0.b32.cont [10/16] 0.0, 128
        %983 = vxpose.xlu0.b32.cont [11/16] 0.0, 128
        %984 = vxpose.xlu0.b32.cont [12/16] 0.0, 128
        %985 = vxpose.xlu0.b32.cont [13/16] 0.0, 128
        %986 = vxpose.xlu0.b32.cont [14/16] 0.0, 128
        %987 = vxpose.xlu0.b32.cont [15/16] 0.0, 128
        %988 = vxpose.xlu0.b32.end [16/16] 0.0, 128
        %v989 = vpop.trf.xlu0
        %v990 = vpop.trf.xlu0
        %v991 = vpop.trf.xlu0
        %v992 = vpop.trf.xlu0
        %v993 = vpop.trf.xlu0
        %v994 = vpop.trf.xlu0
        %v995 = vpop.trf.xlu0
        %v996 = vpop.trf.xlu0
        %v997 = vpop.trf.xlu0
        %v998 = vpop.trf.xlu0
        %v999 = vpop.trf.xlu0
        %v1000 = vpop.trf.xlu0
        %v1001 = vpop.trf.xlu0
        %v1002 = vpop.trf.xlu0
        %v1003 = vpop.trf.xlu0
        %v1004 = vpop.trf.xlu0
        %1005 = vxpose.xlu0.b32.start [1/16] %v927, 128
        %1006 = vxpose.xlu0.b32.cont [2/16] 0.0, 128
        %1007 = vxpose.xlu0.b32.cont [3/16] 0.0, 128
        %1008 = vxpose.xlu0.b32.cont [4/16] 0.0, 128
        %1009 = vxpose.xlu0.b32.cont [5/16] 0.0, 128
        %1010 = vxpose.xlu0.b32.cont [6/16] 0.0, 128
        %1011 = vxpose.xlu0.b32.cont [7/16] 0.0, 128
        %1012 = vxpose.xlu0.b32.cont [8/16] 0.0, 128
        %1013 = vxpose.xlu0.b32.cont [9/16] 0.0, 128
        %1014 = vxpose.xlu0.b32.cont [10/16] 0.0, 128
        %1015 = vxpose.xlu0.b32.cont [11/16] 0.0, 128
        %1016 = vxpose.xlu0.b32.cont [12/16] 0.0, 128
        %1017 = vxpose.xlu0.b32.cont [13/16] 0.0, 128
        %1018 = vxpose.xlu0.b32.cont [14/16] 0.0, 128
        %1019 = vxpose.xlu0.b32.cont [15/16] 0.0, 128
        %1020 = vxpose.xlu0.b32.end [16/16] 0.0, 128
        %v1021 = vpop.trf.xlu0
        %v1022 = vpop.trf.xlu0
        %v1023 = vpop.trf.xlu0
        %v1024 = vpop.trf.xlu0
        %v1025 = vpop.trf.xlu0
        %v1026 = vpop.trf.xlu0
        %v1027 = vpop.trf.xlu0
        %v1028 = vpop.trf.xlu0
        %v1029 = vpop.trf.xlu0
        %v1030 = vpop.trf.xlu0
        %v1031 = vpop.trf.xlu0
        %v1032 = vpop.trf.xlu0
        %v1033 = vpop.trf.xlu0
        %v1034 = vpop.trf.xlu0
        %v1035 = vpop.trf.xlu0
        %v1036 = vpop.trf.xlu0
        %1037 = vxpose.xlu0.b32.start [1/16] %v928, 128
        %1038 = vxpose.xlu0.b32.cont [2/16] 0.0, 128
        %1039 = vxpose.xlu0.b32.cont [3/16] 0.0, 128
        %1040 = vxpose.xlu0.b32.cont [4/16] 0.0, 128
        %1041 = vxpose.xlu0.b32.cont [5/16] 0.0, 128
        %1042 = vxpose.xlu0.b32.cont [6/16] 0.0, 128
        %1043 = vxpose.xlu0.b32.cont [7/16] 0.0, 128
        %1044 = vxpose.xlu0.b32.cont [8/16] 0.0, 128
        %1045 = vxpose.xlu0.b32.cont [9/16] 0.0, 128
        %1046 = vxpose.xlu0.b32.cont [10/16] 0.0, 128
        %1047 = vxpose.xlu0.b32.cont [11/16] 0.0, 128
        %1048 = vxpose.xlu0.b32.cont [12/16] 0.0, 128
        %1049 = vxpose.xlu0.b32.cont [13/16] 0.0, 128
        %1050 = vxpose.xlu0.b32.cont [14/16] 0.0, 128
        %1051 = vxpose.xlu0.b32.cont [15/16] 0.0, 128
        %1052 = vxpose.xlu0.b32.end [16/16] 0.0, 128
        %v1053 = vpop.trf.xlu0
        %v1054 = vpop.trf.xlu0
        %v1055 = vpop.trf.xlu0
        %v1056 = vpop.trf.xlu0
        %v1057 = vpop.trf.xlu0
        %v1058 = vpop.trf.xlu0
        %v1059 = vpop.trf.xlu0
        %v1060 = vpop.trf.xlu0
        %v1061 = vpop.trf.xlu0
        %v1062 = vpop.trf.xlu0
        %v1063 = vpop.trf.xlu0
        %v1064 = vpop.trf.xlu0
        %v1065 = vpop.trf.xlu0
        %v1066 = vpop.trf.xlu0
        %v1067 = vpop.trf.xlu0
        %v1068 = vpop.trf.xlu0
        %1069 = vxpose.xlu0.b32.start [1/16] %v933, 128
        %1070 = vxpose.xlu0.b32.cont [2/16] 0.0, 128
        %1071 = vxpose.xlu0.b32.cont [3/16] 0.0, 128
        %1072 = vxpose.xlu0.b32.cont [4/16] 0.0, 128
        %1073 = vxpose.xlu0.b32.cont [5/16] 0.0, 128
        %1074 = vxpose.xlu0.b32.cont [6/16] 0.0, 128
        %1075 = vxpose.xlu0.b32.cont [7/16] 0.0, 128
        %1076 = vxpose.xlu0.b32.cont [8/16] 0.0, 128
        %1077 = vxpose.xlu0.b32.cont [9/16] 0.0, 128
        %1078 = vxpose.xlu0.b32.cont [10/16] 0.0, 128
        %1079 = vxpose.xlu0.b32.cont [11/16] 0.0, 128
        %1080 = vxpose.xlu0.b32.cont [12/16] 0.0, 128
        %1081 = vxpose.xlu0.b32.cont [13/16] 0.0, 128
        %1082 = vxpose.xlu0.b32.cont [14/16] 0.0, 128
        %1083 = vxpose.xlu0.b32.cont [15/16] 0.0, 128
        %1084 = vxpose.xlu0.b32.end [16/16] 0.0, 128
        %v1085 = vpop.trf.xlu0
        %v1086 = vpop.trf.xlu0
        %v1087 = vpop.trf.xlu0
        %v1088 = vpop.trf.xlu0
        %v1089 = vpop.trf.xlu0
        %v1090 = vpop.trf.xlu0
        %v1091 = vpop.trf.xlu0
        %v1092 = vpop.trf.xlu0
        %v1093 = vpop.trf.xlu0
        %v1094 = vpop.trf.xlu0
        %v1095 = vpop.trf.xlu0
        %v1096 = vpop.trf.xlu0
        %v1097 = vpop.trf.xlu0
        %v1098 = vpop.trf.xlu0
        %v1099 = vpop.trf.xlu0
        %v1100 = vpop.trf.xlu0
        %1101 = vxpose.xlu0.b32.start [1/16] %v934, 128
        %1102 = vxpose.xlu0.b32.cont [2/16] 0.0, 128
        %1103 = vxpose.xlu0.b32.cont [3/16] 0.0, 128
        %1104 = vxpose.xlu0.b32.cont [4/16] 0.0, 128
        %1105 = vxpose.xlu0.b32.cont [5/16] 0.0, 128
        %1106 = vxpose.xlu0.b32.cont [6/16] 0.0, 128
        %1107 = vxpose.xlu0.b32.cont [7/16] 0.0, 128
        %1108 = vxpose.xlu0.b32.cont [8/16] 0.0, 128
        %1109 = vxpose.xlu0.b32.cont [9/16] 0.0, 128
        %1110 = vxpose.xlu0.b32.cont [10/16] 0.0, 128
        %1111 = vxpose.xlu0.b32.cont [11/16] 0.0, 128
        %1112 = vxpose.xlu0.b32.cont [12/16] 0.0, 128
        %1113 = vxpose.xlu0.b32.cont [13/16] 0.0, 128
        %1114 = vxpose.xlu0.b32.cont [14/16] 0.0, 128
        %1115 = vxpose.xlu0.b32.cont [15/16] 0.0, 128
        %1116 = vxpose.xlu0.b32.end [16/16] 0.0, 128
        %v1117 = vpop.trf.xlu0
        %v1118 = vpop.trf.xlu0
        %v1119 = vpop.trf.xlu0
        %v1120 = vpop.trf.xlu0
        %v1121 = vpop.trf.xlu0
        %v1122 = vpop.trf.xlu0
        %v1123 = vpop.trf.xlu0
        %v1124 = vpop.trf.xlu0
        %v1125 = vpop.trf.xlu0
        %v1126 = vpop.trf.xlu0
        %v1127 = vpop.trf.xlu0
        %v1128 = vpop.trf.xlu0
        %v1129 = vpop.trf.xlu0
        %v1130 = vpop.trf.xlu0
        %v1131 = vpop.trf.xlu0
        %v1132 = vpop.trf.xlu0
        %1133 = vxpose.xlu0.b32.start [1/16] %v935, 128
        %1134 = vxpose.xlu0.b32.cont [2/16] 0.0, 128
        %1135 = vxpose.xlu0.b32.cont [3/16] 0.0, 128
        %1136 = vxpose.xlu0.b32.cont [4/16] 0.0, 128
        %1137 = vxpose.xlu0.b32.cont [5/16] 0.0, 128
        %1138 = vxpose.xlu0.b32.cont [6/16] 0.0, 128
        %1139 = vxpose.xlu0.b32.cont [7/16] 0.0, 128
        %1140 = vxpose.xlu0.b32.cont [8/16] 0.0, 128
        %1141 = vxpose.xlu0.b32.cont [9/16] 0.0, 128
        %1142 = vxpose.xlu0.b32.cont [10/16] 0.0, 128
        %1143 = vxpose.xlu0.b32.cont [11/16] 0.0, 128
        %1144 = vxpose.xlu0.b32.cont [12/16] 0.0, 128
        %1145 = vxpose.xlu0.b32.cont [13/16] 0.0, 128
        %1146 = vxpose.xlu0.b32.cont [14/16] 0.0, 128
        %1147 = vxpose.xlu0.b32.cont [15/16] 0.0, 128
        %1148 = vxpose.xlu0.b32.end [16/16] 0.0, 128
        %v1149 = vpop.trf.xlu0
        %v1150 = vpop.trf.xlu0
        %v1151 = vpop.trf.xlu0
        %v1152 = vpop.trf.xlu0
        %v1153 = vpop.trf.xlu0
        %v1154 = vpop.trf.xlu0
        %v1155 = vpop.trf.xlu0
        %v1156 = vpop.trf.xlu0
        %v1157 = vpop.trf.xlu0
        %v1158 = vpop.trf.xlu0
        %v1159 = vpop.trf.xlu0
        %v1160 = vpop.trf.xlu0
        %v1161 = vpop.trf.xlu0
        %v1162 = vpop.trf.xlu0
        %v1163 = vpop.trf.xlu0
        %v1164 = vpop.trf.xlu0
        %1165 = vxpose.xlu0.b32.start [1/16] %v936, 128
        %1166 = vxpose.xlu0.b32.cont [2/16] 0.0, 128
        %1167 = vxpose.xlu0.b32.cont [3/16] 0.0, 128
        %1168 = vxpose.xlu0.b32.cont [4/16] 0.0, 128
        %1169 = vxpose.xlu0.b32.cont [5/16] 0.0, 128
        %1170 = vxpose.xlu0.b32.cont [6/16] 0.0, 128
        %1171 = vxpose.xlu0.b32.cont [7/16] 0.0, 128
        %1172 = vxpose.xlu0.b32.cont [8/16] 0.0, 128
        %1173 = vxpose.xlu0.b32.cont [9/16] 0.0, 128
        %1174 = vxpose.xlu0.b32.cont [10/16] 0.0, 128
        %1175 = vxpose.xlu0.b32.cont [11/16] 0.0, 128
        %1176 = vxpose.xlu0.b32.cont [12/16] 0.0, 128
        %1177 = vxpose.xlu0.b32.cont [13/16] 0.0, 128
        %1178 = vxpose.xlu0.b32.cont [14/16] 0.0, 128
        %1179 = vxpose.xlu0.b32.cont [15/16] 0.0, 128
        %1180 = vxpose.xlu0.b32.end [16/16] 0.0, 128
        %v1181 = vpop.trf.xlu0
        %v1182 = vpop.trf.xlu0
        %v1183 = vpop.trf.xlu0
        %v1184 = vpop.trf.xlu0
        %v1185 = vpop.trf.xlu0
        %v1186 = vpop.trf.xlu0
        %v1187 = vpop.trf.xlu0
        %v1188 = vpop.trf.xlu0
        %v1189 = vpop.trf.xlu0
        %v1190 = vpop.trf.xlu0
        %v1191 = vpop.trf.xlu0
        %v1192 = vpop.trf.xlu0
        %v1193 = vpop.trf.xlu0
        %v1194 = vpop.trf.xlu0
        %v1195 = vpop.trf.xlu0
        %v1196 = vpop.trf.xlu0
        %v1197 = vpack.c.bf16 %v957, %v957
        %v1198 = vpack.c.bf16 %v958, %v958
        %v1199 = vpack.c.bf16 %v989, %v989
        %v1200 = vpack.c.bf16 %v990, %v990
        %v1201 = vpack.c.bf16 %v1021, %v1021
        %v1202 = vpack.c.bf16 %v1022, %v1022
        %v1203 = vpack.c.bf16 %v1053, %v1053
        %v1204 = vpack.c.bf16 %v1054, %v1054
        %v1205 = vpack.c.bf16 %v929, %v929
        %v1206 = vpack.c.bf16 %v930, %v930
        %v1207 = vpack.c.bf16 %v931, %v931
        %v1208 = vpack.c.bf16 %v932, %v932
        %v1209 = vld [vmem:[%s1] sm:$0xff]
        %v1210 = vld [vmem:[%s1 + $0x8] sm:$0xff]
        %v1213 = vunpack.c.l.b16 %v1197
        %v1214 = vunpack.c.l.b16 %v1198
        %v1215 = vpack.c.b16 %v1214, %v1213
        %vm1216 = vcmask 64512
        %v1218 = vsel %vm1216, %v1215, 0
        %vm1220 = vcmask 1043456
        %v1222 = vsel %vm1220, %v1205, 0
        %1224 = vmatpush.bf16.msra.mxu0 0
        %1225 = vmatpush.bf16.msra.mxu0 0
        %1226 = vmatpush.bf16.msra.mxu0 0
        %1227 = vmatpush.bf16.msra.mxu0 0
        %1228 = vmatpush.bf16.msra.mxu0 0
        %1229 = vmatpush.bf16.msra.mxu0 0
        %1230 = vmatpush.bf16.msra.mxu0 0
        %1231 = vmatpush.bf16.msra.mxu0 %v1222
        %1232 = vmatmul.bf16.gmra.mxu0 %v1218
        %v1233 = vpop.f32.mrf.mxu0
        %v1234 = vadd.f32 %v1209, %v1233
        %v1235 = vpop.f32.mrf.mxu0
        %v1236 = vadd.f32 %v1210, %v1235
        %1237 = vdwg.mxu0
        %v1240 = vunpack.c.l.b16 %v1199
        %v1241 = vunpack.c.l.b16 %v1200
        %v1242 = vpack.c.b16 %v1241, %v1240
        %v1244 = vsel %vm1216, %v1242, 0
        %v1247 = vsel %vm1220, %v1206, 0
        %1249 = vmatpush.bf16.msra.mxu0 0
        %1250 = vmatpush.bf16.msra.mxu0 0
        %1251 = vmatpush.bf16.msra.mxu0 0
        %1252 = vmatpush.bf16.msra.mxu0 0
        %1253 = vmatpush.bf16.msra.mxu0 0
        %1254 = vmatpush.bf16.msra.mxu0 0
        %1255 = vmatpush.bf16.msra.mxu0 0
        %1256 = vmatpush.bf16.msra.mxu0 %v1247
        %1257 = vmatmul.bf16.gmra.mxu0 %v1244
        %v1258 = vpop.f32.mrf.mxu0
        %v1259 = vadd.f32 %v1209, %v1258
        %v1260 = vpop.f32.mrf.mxu0
        %v1261 = vadd.f32 %v1210, %v1260
        %1262 = vdwg.mxu0
        %v1265 = vunpack.c.l.b16 %v1201
        %v1266 = vunpack.c.l.b16 %v1202
        %v1267 = vpack.c.b16 %v1266, %v1265
        %v1269 = vsel %vm1216, %v1267, 0
        %v1272 = vsel %vm1220, %v1207, 0
        %1274 = vmatpush.bf16.msra.mxu0 0
        %1275 = vmatpush.bf16.msra.mxu0 0
        %1276 = vmatpush.bf16.msra.mxu0 0
        %1277 = vmatpush.bf16.msra.mxu0 0
        %1278 = vmatpush.bf16.msra.mxu0 0
        %1279 = vmatpush.bf16.msra.mxu0 0
        %1280 = vmatpush.bf16.msra.mxu0 0
        %1281 = vmatpush.bf16.msra.mxu0 %v1272
        %1282 = vmatmul.bf16.gmra.mxu0 %v1269
        %v1283 = vpop.f32.mrf.mxu0
        %v1284 = vadd.f32 %v1209, %v1283
        %v1285 = vpop.f32.mrf.mxu0
        %v1286 = vadd.f32 %v1210, %v1285
        %1287 = vdwg.mxu0
        %v1290 = vunpack.c.l.b16 %v1203
        %v1291 = vunpack.c.l.b16 %v1204
        %v1292 = vpack.c.b16 %v1291, %v1290
        %v1294 = vsel %vm1216, %v1292, 0
        %v1297 = vsel %vm1220, %v1208, 0
        %1299 = vmatpush.bf16.msra.mxu0 0
        %1300 = vmatpush.bf16.msra.mxu0 0
        %1301 = vmatpush.bf16.msra.mxu0 0
        %1302 = vmatpush.bf16.msra.mxu0 0
        %1303 = vmatpush.bf16.msra.mxu0 0
        %1304 = vmatpush.bf16.msra.mxu0 0
        %1305 = vmatpush.bf16.msra.mxu0 0
        %1306 = vmatpush.bf16.msra.mxu0 %v1297
        %1307 = vmatmul.bf16.gmra.mxu0 %v1294
        %v1308 = vpop.f32.mrf.mxu0
        %v1309 = vadd.f32 %v1209, %v1308
        %v1310 = vpop.f32.mrf.mxu0
        %v1311 = vadd.f32 %v1210, %v1310
        %1312 = vdwg.mxu0
        %vm1313 = vcmask 130048
        %v1314 = vsel %vm1313, %v1234, -inf
        %1315 = vmax.xlane.f32.xlu0 %v1314
        %v1316 = vpop.xlane.xlu0 %1315
        %v1317 = vsel %vm1313, %v1236, -inf
        %1318 = vmax.xlane.f32.xlu0 %v1317
        %v1319 = vpop.xlane.xlu0 %1318
        %v1320 = vsel %vm1313, %v1259, -inf
        %1321 = vmax.xlane.f32.xlu0 %v1320
        %v1322 = vpop.xlane.xlu0 %1321
        %v1323 = vsel %vm1313, %v1261, -inf
        %1324 = vmax.xlane.f32.xlu0 %v1323
        %v1325 = vpop.xlane.xlu0 %1324
        %v1326 = vsel %vm1313, %v1284, -inf
        %1327 = vmax.xlane.f32.xlu0 %v1326
        %v1328 = vpop.xlane.xlu0 %1327
        %v1329 = vsel %vm1313, %v1286, -inf
        %1330 = vmax.xlane.f32.xlu0 %v1329
        %v1331 = vpop.xlane.xlu0 %1330
        %v1332 = vsel %vm1313, %v1309, -inf
        %1333 = vmax.xlane.f32.xlu0 %v1332
        %v1334 = vpop.xlane.xlu0 %1333
        %v1335 = vsel %vm1313, %v1311, -inf
        %1336 = vmax.xlane.f32.xlu0 %v1335
        %v1337 = vpop.xlane.xlu0 %1336
        %v1338 = vsub.f32 %v1234, %v1316
        %v1339 = vsub.f32 %v1236, %v1319
        %v1340 = vsub.f32 %v1259, %v1322
        %v1341 = vsub.f32 %v1261, %v1325
        %v1342 = vsub.f32 %v1284, %v1328
        %v1343 = vsub.f32 %v1286, %v1331
        %v1344 = vsub.f32 %v1309, %v1334
        %v1345 = vsub.f32 %v1311, %v1337
        %v1346 = vmul.f32 %v1338, 1.442695
        %v1347 = vpow.pop %v1346
        %v1348 = vmul.f32 %v1339, 1.442695
        %v1349 = vpow.pop %v1348
        %v1350 = vmul.f32 %v1340, 1.442695
        %v1351 = vpow.pop %v1350
        %v1352 = vmul.f32 %v1341, 1.442695
        %v1353 = vpow.pop %v1352
        %v1354 = vmul.f32 %v1342, 1.442695
        %v1355 = vpow.pop %v1354
        %v1356 = vmul.f32 %v1343, 1.442695
        %v1357 = vpow.pop %v1356
        %v1358 = vmul.f32 %v1344, 1.442695
        %v1359 = vpow.pop %v1358
        %v1360 = vmul.f32 %v1345, 1.442695
        %v1361 = vpow.pop %v1360
        %v1362 = vsel %vm1313, %v1347, 0.0
        %1363 = vadd.xlane.f32.xlu0 %v1362
        %v1364 = vpop.xlane.xlu0 %1363
        %v1365 = vsel %vm1313, %v1349, 0.0
        %1366 = vadd.xlane.f32.xlu0 %v1365
        %v1367 = vpop.xlane.xlu0 %1366
        %v1368 = vsel %vm1313, %v1351, 0.0
        %1369 = vadd.xlane.f32.xlu0 %v1368
        %v1370 = vpop.xlane.xlu0 %1369
        %v1371 = vsel %vm1313, %v1353, 0.0
        %1372 = vadd.xlane.f32.xlu0 %v1371
        %v1373 = vpop.xlane.xlu0 %1372
        %v1374 = vsel %vm1313, %v1355, 0.0
        %1375 = vadd.xlane.f32.xlu0 %v1374
        %v1376 = vpop.xlane.xlu0 %1375
        %v1377 = vsel %vm1313, %v1357, 0.0
        %1378 = vadd.xlane.f32.xlu0 %v1377
        %v1379 = vpop.xlane.xlu0 %1378
        %v1380 = vsel %vm1313, %v1359, 0.0
        %1381 = vadd.xlane.f32.xlu0 %v1380
        %v1382 = vpop.xlane.xlu0 %1381
        %v1383 = vsel %vm1313, %v1361, 0.0
        %1384 = vadd.xlane.f32.xlu0 %v1383
        %v1385 = vpop.xlane.xlu0 %1384
        %v1386 = vrcp.pop %v1364
        %v1387 = vrcp.pop %v1367
        %v1388 = vrcp.pop %v1370
        %v1389 = vrcp.pop %v1373
        %v1390 = vrcp.pop %v1376
        %v1391 = vrcp.pop %v1379
        %v1392 = vrcp.pop %v1382
        %v1393 = vrcp.pop %v1385
        %v1394 = vmul.f32 %v1347, %v1386
        %v1395 = vmul.f32 %v1349, %v1387
        %v1396 = vmul.f32 %v1351, %v1388
        %v1397 = vmul.f32 %v1353, %v1389
        %v1398 = vmul.f32 %v1355, %v1390
        %v1399 = vmul.f32 %v1357, %v1391
        %v1400 = vmul.f32 %v1359, %v1392
        %v1401 = vmul.f32 %v1361, %v1393
        %v1402 = vpack.c.bf16 %v1394, %v1394
        %v1403 = vpack.c.bf16 %v1395, %v1395
        %v1404 = vpack.c.bf16 %v1396, %v1396
        %v1405 = vpack.c.bf16 %v1397, %v1397
        %v1406 = vpack.c.bf16 %v1398, %v1398
        %v1407 = vpack.c.bf16 %v1399, %v1399
        %v1408 = vpack.c.bf16 %v1400, %v1400
        %v1409 = vpack.c.bf16 %v1401, %v1401
        %v1410 = vpack.c.bf16 %v1085, %v1085
        %v1411 = vpack.c.bf16 %v1086, %v1086
        %v1412 = vpack.c.bf16 %v1117, %v1117
        %v1413 = vpack.c.bf16 %v1118, %v1118
        %v1414 = vpack.c.bf16 %v1149, %v1149
        %v1415 = vpack.c.bf16 %v1150, %v1150
        %v1416 = vpack.c.bf16 %v1181, %v1181
        %v1417 = vpack.c.bf16 %v1182, %v1182
        %v1420 = vunpack.c.l.b16 %v1402
        %v1421 = vunpack.c.l.b16 %v1403
        %v1422 = vpack.c.b16 %v1421, %v1420
        %v1425 = vunpack.c.l.b16 %v1410
        %v1426 = vunpack.c.l.b16 %v1411
        %v1427 = vpack.c.b16 %v1426, %v1425
        %v1430 = vsel %vm1313, %v1422, 0
        %1432 = vmatpush.bf16.msra.mxu0 0
        %1433 = vmatpush.bf16.msra.mxu0 0
        %1434 = vmatpush.bf16.msra.mxu0 0
        %1435 = vmatpush.bf16.msra.mxu0 0
        %1436 = vmatpush.bf16.msra.mxu0 0
        %1437 = vmatpush.bf16.msra.mxu0 0
        %1438 = vmatpush.bf16.msra.mxu0 0
        %1439 = vmatpush.bf16.msra.mxu0 %v1427
        %1440 = vmatmul.bf16.gmra.mxu0 %v1430
        %v1441 = vpop.f32.mrf.mxu0
        %v1442 = vadd.f32 0.0, %v1441
        %v1443 = vpop.f32.mrf.mxu0
        %v1444 = vadd.f32 0.0, %v1443
        %1445 = vdwg.mxu0
        %v1448 = vunpack.c.l.b16 %v1404
        %v1449 = vunpack.c.l.b16 %v1405
        %v1450 = vpack.c.b16 %v1449, %v1448
        %v1453 = vunpack.c.l.b16 %v1412
        %v1454 = vunpack.c.l.b16 %v1413
        %v1455 = vpack.c.b16 %v1454, %v1453
        %v1458 = vsel %vm1313, %v1450, 0
        %1460 = vmatpush.bf16.msra.mxu0 0
        %1461 = vmatpush.bf16.msra.mxu0 0
        %1462 = vmatpush.bf16.msra.mxu0 0
        %1463 = vmatpush.bf16.msra.mxu0 0
        %1464 = vmatpush.bf16.msra.mxu0 0
        %1465 = vmatpush.bf16.msra.mxu0 0
        %1466 = vmatpush.bf16.msra.mxu0 0
        %1467 = vmatpush.bf16.msra.mxu0 %v1455
        %1468 = vmatmul.bf16.gmra.mxu0 %v1458
        %v1469 = vpop.f32.mrf.mxu0
        %v1470 = vadd.f32 0.0, %v1469
        %v1471 = vpop.f32.mrf.mxu0
        %v1472 = vadd.f32 0.0, %v1471
        %1473 = vdwg.mxu0
        %v1476 = vunpack.c.l.b16 %v1406
        %v1477 = vunpack.c.l.b16 %v1407
        %v1478 = vpack.c.b16 %v1477, %v1476
        %v1481 = vunpack.c.l.b16 %v1414
        %v1482 = vunpack.c.l.b16 %v1415
        %v1483 = vpack.c.b16 %v1482, %v1481
        %v1486 = vsel %vm1313, %v1478, 0
        %1488 = vmatpush.bf16.msra.mxu0 0
        %1489 = vmatpush.bf16.msra.mxu0 0
        %1490 = vmatpush.bf16.msra.mxu0 0
        %1491 = vmatpush.bf16.msra.mxu0 0
        %1492 = vmatpush.bf16.msra.mxu0 0
        %1493 = vmatpush.bf16.msra.mxu0 0
        %1494 = vmatpush.bf16.msra.mxu0 0
        %1495 = vmatpush.bf16.msra.mxu0 %v1483
        %1496 = vmatmul.bf16.gmra.mxu0 %v1486
        %v1497 = vpop.f32.mrf.mxu0
        %v1498 = vadd.f32 0.0, %v1497
        %v1499 = vpop.f32.mrf.mxu0
        %v1500 = vadd.f32 0.0, %v1499
        %1501 = vdwg.mxu0
        %v1504 = vunpack.c.l.b16 %v1408
        %v1505 = vunpack.c.l.b16 %v1409
        %v1506 = vpack.c.b16 %v1505, %v1504
        %v1509 = vunpack.c.l.b16 %v1416
        %v1510 = vunpack.c.l.b16 %v1417
        %v1511 = vpack.c.b16 %v1510, %v1509
        %v1514 = vsel %vm1313, %v1506, 0
        %1516 = vmatpush.bf16.msra.mxu0 0
        %1517 = vmatpush.bf16.msra.mxu0 0
        %1518 = vmatpush.bf16.msra.mxu0 0
        %1519 = vmatpush.bf16.msra.mxu0 0
        %1520 = vmatpush.bf16.msra.mxu0 0
        %1521 = vmatpush.bf16.msra.mxu0 0
        %1522 = vmatpush.bf16.msra.mxu0 0
        %1523 = vmatpush.bf16.msra.mxu0 %v1511
        %1524 = vmatmul.bf16.gmra.mxu0 %v1514
        %v1525 = vpop.f32.mrf.mxu0
        %v1526 = vadd.f32 0.0, %v1525
        %v1527 = vpop.f32.mrf.mxu0
        %v1528 = vadd.f32 0.0, %v1527
        %1529 = vdwg.mxu0
        %v1530 = vpack.c.bf16 %v1442, %v1442
        %v1531 = vpack.c.bf16 %v1444, %v1444
        %v1532 = vpack.c.bf16 %v1470, %v1470
        %v1533 = vpack.c.bf16 %v1472, %v1472
        %v1534 = vpack.c.bf16 %v1498, %v1498
        %v1535 = vpack.c.bf16 %v1500, %v1500
        %v1536 = vpack.c.bf16 %v1526, %v1526
        %v1537 = vpack.c.bf16 %v1528, %v1528
        %v1540 = vunpack.c.l.b16 %v1530
        %v1541 = vunpack.c.l.b16 %v1531
        %v1542 = vpack.c.b16 %v1541, %v1540
        %v1544 = vsel %vm1216, %v1542, 0
        %v1547 = vsel %vm1220, %v580, 0
        %1549 = vmatpush.bf16.msra.mxu0 0
        %1550 = vmatpush.bf16.msra.mxu0 0
        %1551 = vmatpush.bf16.msra.mxu0 0
        %1552 = vmatpush.bf16.msra.mxu0 0
        %1553 = vmatpush.bf16.msra.mxu0 0
        %1554 = vmatpush.bf16.msra.mxu0 0
        %1555 = vmatpush.bf16.msra.mxu0 0
        %1556 = vmatpush.bf16.msra.mxu0 %v1547
        %1557 = vmatmul.bf16.gmra.mxu0 %v1544
        %v1558 = vpop.f32.mrf.mxu0
        %v1559 = vadd.f32 0.0, %v1558
        %v1560 = vpop.f32.mrf.mxu0
        %v1561 = vadd.f32 0.0, %v1560
        %1562 = vdwg.mxu0
        %v1565 = vunpack.c.l.b16 %v1532
        %v1566 = vunpack.c.l.b16 %v1533
        %v1567 = vpack.c.b16 %v1566, %v1565
        %v1569 = vsel %vm1216, %v1567, 0
        %v1572 = vsel %vm1220, %v581, 0
        %1574 = vmatpush.bf16.msra.mxu0 0
        %1575 = vmatpush.bf16.msra.mxu0 0
        %1576 = vmatpush.bf16.msra.mxu0 0
        %1577 = vmatpush.bf16.msra.mxu0 0
        %1578 = vmatpush.bf16.msra.mxu0 0
        %1579 = vmatpush.bf16.msra.mxu0 0
        %1580 = vmatpush.bf16.msra.mxu0 0
        %1581 = vmatpush.bf16.msra.mxu0 %v1572
        %1582 = vmatmul.bf16.gmra.mxu0 %v1569
        %v1583 = vpop.f32.mrf.mxu0
        %v1584 = vadd.f32 0.0, %v1583
        %v1585 = vpop.f32.mrf.mxu0
        %v1586 = vadd.f32 0.0, %v1585
        %1587 = vdwg.mxu0
        %v1590 = vunpack.c.l.b16 %v1534
        %v1591 = vunpack.c.l.b16 %v1535
        %v1592 = vpack.c.b16 %v1591, %v1590
        %v1594 = vsel %vm1216, %v1592, 0
        %v1597 = vsel %vm1220, %v582, 0
        %1599 = vmatpush.bf16.msra.mxu0 0
        %1600 = vmatpush.bf16.msra.mxu0 0
        %1601 = vmatpush.bf16.msra.mxu0 0
        %1602 = vmatpush.bf16.msra.mxu0 0
        %1603 = vmatpush.bf16.msra.mxu0 0
        %1604 = vmatpush.bf16.msra.mxu0 0
        %1605 = vmatpush.bf16.msra.mxu0 0
        %1606 = vmatpush.bf16.msra.mxu0 %v1597
        %1607 = vmatmul.bf16.gmra.mxu0 %v1594
        %v1608 = vpop.f32.mrf.mxu0
        %v1609 = vadd.f32 0.0, %v1608
        %v1610 = vpop.f32.mrf.mxu0
        %v1611 = vadd.f32 0.0, %v1610
        %1612 = vdwg.mxu0
        %v1615 = vunpack.c.l.b16 %v1536
        %v1616 = vunpack.c.l.b16 %v1537
        %v1617 = vpack.c.b16 %v1616, %v1615
        %v1619 = vsel %vm1216, %v1617, 0
        %v1622 = vsel %vm1220, %v583, 0
        %1624 = vmatpush.bf16.msra.mxu0 0
        %1625 = vmatpush.bf16.msra.mxu0 0
        %1626 = vmatpush.bf16.msra.mxu0 0
        %1627 = vmatpush.bf16.msra.mxu0 0
        %1628 = vmatpush.bf16.msra.mxu0 0
        %1629 = vmatpush.bf16.msra.mxu0 0
        %1630 = vmatpush.bf16.msra.mxu0 0
        %1631 = vmatpush.bf16.msra.mxu0 %v1622
        %1632 = vmatmul.bf16.gmra.mxu0 %v1619
        %v1633 = vpop.f32.mrf.mxu0
        %v1634 = vadd.f32 0.0, %v1633
        %v1635 = vpop.f32.mrf.mxu0
        %v1636 = vadd.f32 0.0, %v1635
        %1637 = vdwg.mxu0
        %v1638 = vsel %vm891, %v1559, 0.0
        %v1639 = vsel %vm891, %v1584, 0.0
        %v1640 = vadd.f32 %v1638, %v1639
        %v1641 = vsel %vm891, %v1609, 0.0
        %v1642 = vadd.f32 %v1640, %v1641
        %v1643 = vsel %vm891, %v1634, 0.0
        %v1644 = vadd.f32 %v1642, %v1643
        %v1645 = vsel %vm891, %v1561, 0.0
        %v1646 = vsel %vm891, %v1586, 0.0
        %v1647 = vadd.f32 %v1645, %v1646
        %v1648 = vsel %vm891, %v1611, 0.0
        %v1649 = vadd.f32 %v1647, %v1648
        %v1650 = vsel %vm891, %v1636, 0.0
        %v1651 = vadd.f32 %v1649, %v1650
        %v1652 = vperm.slane %v584, 0
        %v1653 = vadd.f32 %v1644, %v1652
        %v1654 = vadd.f32 %v1651, %v1652
        %v1655 = vadd.f32 %v573, %v1653
        %v1656 = vadd.f32 %v574, %v1654
        %v1657 = vsel %vm891, %v1655, 0.0
        %1658 = vadd.xlane.f32.xlu0 %v1657
        %v1659 = vpop.xlane.xlu0 %1658
        %v1660 = vsel %vm891, %v1656, 0.0
        %1661 = vadd.xlane.f32.xlu0 %v1660
        %v1662 = vpop.xlane.xlu0 %1661
        %v1663 = vrcp.pop 32.0
        %v1664 = vmul.f32 32.0, %v1663
        %v1665 = vsub.f32 1.0, %v1664
        %v1666 = vmul.f32 %v1663, %v1665
        %v1667 = vadd.f32 %v1663, %v1666
        %vm1668 = vweird.f32 %v1663
        %v1669 = vsel %vm1668, %v1663, %v1667
        %v1670 = vmul.f32 %v1659, %v1669
        %v1671 = vmul.f32 %v1662, %v1669
        %v1672 = vsub.f32 %v1655, %v1670
        %v1673 = vsub.f32 %v1656, %v1671
        %v1674 = vmul.f32 %v1672, %v1672
        %v1675 = vmul.f32 %v1673, %v1673
        %v1676 = vsel %vm891, %v1674, 0.0
        %1677 = vadd.xlane.f32.xlu0 %v1676
        %v1678 = vpop.xlane.xlu0 %1677
        %v1679 = vsel %vm891, %v1675, 0.0
        %1680 = vadd.xlane.f32.xlu0 %v1679
        %v1681 = vpop.xlane.xlu0 %1680
        %v1682 = vmul.f32 %v1678, %v1669
        %v1683 = vmul.f32 %v1681, %v1669
        %v1684 = vadd.f32 %v1682, 1e-05
        %v1685 = vadd.f32 %v1683, 1e-05
        %v1686 = vrsqrt.pop %v1684
        %v1687 = vmul.f32 %v1686, %v1684
        %v1688 = vmul.f32 %v1687, %v1686
        %v1689 = vmul.f32 0.5, %v1688
        %v1690 = vsub.f32 1.5, %v1689
        %v1691 = vmul.f32 %v1686, %v1690
        %vm1692 = vweird.f32 %v1684
        %vm1693 = vweird.f32 %v1686
        %vm1694 = vmor %vm1692, %vm1693
        %v1695 = vsel %vm1694, %v1686, %v1691
        %v1696 = vrsqrt.pop %v1685
        %v1697 = vmul.f32 %v1696, %v1685
        %v1698 = vmul.f32 %v1697, %v1696
        %v1699 = vmul.f32 0.5, %v1698
        %v1700 = vsub.f32 1.5, %v1699
        %v1701 = vmul.f32 %v1696, %v1700
        %vm1702 = vweird.f32 %v1685
        %vm1703 = vweird.f32 %v1696
        %vm1704 = vmor %vm1702, %vm1703
        %v1705 = vsel %vm1704, %v1696, %v1701
        %v1706 = vmul.f32 %v1672, %v1695
        %v1707 = vmul.f32 %v1673, %v1705
        %v1708 = vperm.slane %v584, 2
        %v1709 = vmul.f32 %v1706, %v1708
        %v1710 = vmul.f32 %v1707, %v1708
        %v1711 = vperm.slane %v584, 3
        %v1712 = vadd.f32 %v1709, %v1711
        %v1713 = vadd.f32 %v1710, %v1711
        %v1714 = vpack.c.bf16 %v1713, %v1712
        %v1717 = vperm.slane %v617, 0
        %v1718 = vperm.slane %v617, 1
        %v1719 = vperm.slane %v617, 2
        %v1720 = vperm.slane %v617, 3
        %v1721 = vperm.slane %v617, 4
        %v1722 = vperm.slane %v617, 5
        %v1723 = vperm.slane %v617, 6
        %v1724 = vperm.slane %v617, 7
        %v1725 = vperm.slane %v618, 0
        %v1726 = vperm.slane %v618, 1
        %v1727 = vperm.slane %v618, 2
        %v1728 = vperm.slane %v618, 3
        %v1729 = vperm.slane %v618, 4
        %v1730 = vperm.slane %v618, 5
        %v1731 = vperm.slane %v618, 6
        %v1732 = vperm.slane %v618, 7
        %v1781 = vunpack.c.l.b16 %v585
        %v1782 = vunpack.c.h.b16 %v585
        %v1783 = vunpack.c.l.b16 %v586
        %v1784 = vunpack.c.h.b16 %v586
        %v1785 = vunpack.c.l.b16 %v587
        %v1786 = vunpack.c.h.b16 %v587
        %v1787 = vunpack.c.l.b16 %v588
        %v1788 = vunpack.c.h.b16 %v588
        %v1789 = vunpack.c.l.b16 %v589
        %v1790 = vunpack.c.h.b16 %v589
        %v1791 = vunpack.c.l.b16 %v590
        %v1792 = vunpack.c.h.b16 %v590
        %v1793 = vunpack.c.l.b16 %v591
        %v1794 = vunpack.c.h.b16 %v591
        %v1795 = vunpack.c.l.b16 %v592
        %v1796 = vunpack.c.h.b16 %v592
        %v1797 = vunpack.c.l.b16 %v593
        %v1798 = vunpack.c.h.b16 %v593
        %v1799 = vunpack.c.l.b16 %v594
        %v1800 = vunpack.c.h.b16 %v594
        %v1801 = vunpack.c.l.b16 %v595
        %v1802 = vunpack.c.h.b16 %v595
        %v1803 = vunpack.c.l.b16 %v596
        %v1804 = vunpack.c.h.b16 %v596
        %v1805 = vunpack.c.l.b16 %v597
        %v1806 = vunpack.c.h.b16 %v597
        %v1807 = vunpack.c.l.b16 %v598
        %v1808 = vunpack.c.h.b16 %v598
        %v1809 = vunpack.c.l.b16 %v599
        %v1810 = vunpack.c.h.b16 %v599
        %v1811 = vunpack.c.l.b16 %v600
        %v1812 = vunpack.c.h.b16 %v600
        %v1813 = vunpack.c.l.b16 %v601
        %v1814 = vunpack.c.h.b16 %v601
        %v1815 = vunpack.c.l.b16 %v602
        %v1816 = vunpack.c.h.b16 %v602
        %v1817 = vunpack.c.l.b16 %v603
        %v1818 = vunpack.c.h.b16 %v603
        %v1819 = vunpack.c.l.b16 %v604
        %v1820 = vunpack.c.h.b16 %v604
        %v1821 = vunpack.c.l.b16 %v605
        %v1822 = vunpack.c.h.b16 %v605
        %v1823 = vunpack.c.l.b16 %v606
        %v1824 = vunpack.c.h.b16 %v606
        %v1825 = vunpack.c.l.b16 %v607
        %v1826 = vunpack.c.h.b16 %v607
        %v1827 = vunpack.c.l.b16 %v608
        %v1828 = vunpack.c.h.b16 %v608
        %v1829 = vunpack.c.l.b16 %v609
        %v1830 = vunpack.c.h.b16 %v609
        %v1831 = vunpack.c.l.b16 %v610
        %v1832 = vunpack.c.h.b16 %v610
        %v1833 = vunpack.c.l.b16 %v611
        %v1834 = vunpack.c.h.b16 %v611
        %v1835 = vunpack.c.l.b16 %v612
        %v1836 = vunpack.c.h.b16 %v612
        %v1837 = vunpack.c.l.b16 %v613
        %v1838 = vunpack.c.h.b16 %v613
        %v1839 = vunpack.c.l.b16 %v614
        %v1840 = vunpack.c.h.b16 %v614
        %v1841 = vunpack.c.l.b16 %v615
        %v1842 = vunpack.c.h.b16 %v615
        %v1843 = vunpack.c.l.b16 %v616
        %v1844 = vunpack.c.h.b16 %v616
        %v1845 = vpack.c.b16 %v1797, %v1781
        %v1846 = vpack.c.b16 %v1798, %v1782
        %v1847 = vpack.c.b16 %v1799, %v1783
        %v1848 = vpack.c.b16 %v1800, %v1784
        %v1849 = vpack.c.b16 %v1801, %v1785
        %v1850 = vpack.c.b16 %v1802, %v1786
        %v1851 = vpack.c.b16 %v1803, %v1787
        %v1852 = vpack.c.b16 %v1804, %v1788
        %v1853 = vpack.c.b16 %v1805, %v1789
        %v1854 = vpack.c.b16 %v1806, %v1790
        %v1855 = vpack.c.b16 %v1807, %v1791
        %v1856 = vpack.c.b16 %v1808, %v1792
        %v1857 = vpack.c.b16 %v1809, %v1793
        %v1858 = vpack.c.b16 %v1810, %v1794
        %v1859 = vpack.c.b16 %v1811, %v1795
        %v1860 = vpack.c.b16 %v1812, %v1796
        %v1861 = vpack.c.b16 %v1829, %v1813
        %v1862 = vpack.c.b16 %v1830, %v1814
        %v1863 = vpack.c.b16 %v1831, %v1815
        %v1864 = vpack.c.b16 %v1832, %v1816
        %v1865 = vpack.c.b16 %v1833, %v1817
        %v1866 = vpack.c.b16 %v1834, %v1818
        %v1867 = vpack.c.b16 %v1835, %v1819
        %v1868 = vpack.c.b16 %v1836, %v1820
        %v1869 = vpack.c.b16 %v1837, %v1821
        %v1870 = vpack.c.b16 %v1838, %v1822
        %v1871 = vpack.c.b16 %v1839, %v1823
        %v1872 = vpack.c.b16 %v1840, %v1824
        %v1873 = vpack.c.b16 %v1841, %v1825
        %v1874 = vpack.c.b16 %v1842, %v1826
        %v1875 = vpack.c.b16 %v1843, %v1827
        %v1876 = vpack.c.b16 %v1844, %v1828
        %v1910 = vsel %vm891, %v1714, 0
        %1912 = vmatpush.bf16.msra.mxu0 0
        %1913 = vmatpush.bf16.msra.mxu0 0
        %1914 = vmatpush.bf16.msra.mxu0 0
        %1915 = vmatpush.bf16.msra.mxu0 0
        %1916 = vmatpush.bf16.msra.mxu0 0
        %1917 = vmatpush.bf16.msra.mxu0 0
        %1918 = vmatpush.bf16.msra.mxu0 %v1861
        %1919 = vmatpush.bf16.msra.mxu0 %v1845
        %1920 = vmatmul.bf16.gmra.mxu0 %v1910
        %v1921 = vpop.f32.mrf.mxu0
        %v1922 = vadd.f32 %v1717, %v1921
        %v1923 = vpop.f32.mrf.mxu0
        %v1924 = vadd.f32 %v1717, %v1923
        %1925 = vdwg.mxu0
        %1926 = vmatpush.bf16.msra.mxu0 0
        %1927 = vmatpush.bf16.msra.mxu0 0
        %1928 = vmatpush.bf16.msra.mxu0 0
        %1929 = vmatpush.bf16.msra.mxu0 0
        %1930 = vmatpush.bf16.msra.mxu0 0
        %1931 = vmatpush.bf16.msra.mxu0 0
        %1932 = vmatpush.bf16.msra.mxu0 %v1862
        %1933 = vmatpush.bf16.msra.mxu0 %v1846
        %1934 = vmatmul.bf16.gmra.mxu0 %v1910
        %v1935 = vpop.f32.mrf.mxu0
        %v1936 = vadd.f32 %v1718, %v1935
        %v1937 = vpop.f32.mrf.mxu0
        %v1938 = vadd.f32 %v1718, %v1937
        %1939 = vdwg.mxu0
        %1940 = vmatpush.bf16.msra.mxu0 0
        %1941 = vmatpush.bf16.msra.mxu0 0
        %1942 = vmatpush.bf16.msra.mxu0 0
        %1943 = vmatpush.bf16.msra.mxu0 0
        %1944 = vmatpush.bf16.msra.mxu0 0
        %1945 = vmatpush.bf16.msra.mxu0 0
        %1946 = vmatpush.bf16.msra.mxu0 %v1863
        %1947 = vmatpush.bf16.msra.mxu0 %v1847
        %1948 = vmatmul.bf16.gmra.mxu0 %v1910
        %v1949 = vpop.f32.mrf.mxu0
        %v1950 = vadd.f32 %v1719, %v1949
        %v1951 = vpop.f32.mrf.mxu0
        %v1952 = vadd.f32 %v1719, %v1951
        %1953 = vdwg.mxu0
        %1954 = vmatpush.bf16.msra.mxu0 0
        %1955 = vmatpush.bf16.msra.mxu0 0
        %1956 = vmatpush.bf16.msra.mxu0 0
        %1957 = vmatpush.bf16.msra.mxu0 0
        %1958 = vmatpush.bf16.msra.mxu0 0
        %1959 = vmatpush.bf16.msra.mxu0 0
        %1960 = vmatpush.bf16.msra.mxu0 %v1864
        %1961 = vmatpush.bf16.msra.mxu0 %v1848
        %1962 = vmatmul.bf16.gmra.mxu0 %v1910
        %v1963 = vpop.f32.mrf.mxu0
        %v1964 = vadd.f32 %v1720, %v1963
        %v1965 = vpop.f32.mrf.mxu0
        %v1966 = vadd.f32 %v1720, %v1965
        %1967 = vdwg.mxu0
        %1968 = vmatpush.bf16.msra.mxu0 0
        %1969 = vmatpush.bf16.msra.mxu0 0
        %1970 = vmatpush.bf16.msra.mxu0 0
        %1971 = vmatpush.bf16.msra.mxu0 0
        %1972 = vmatpush.bf16.msra.mxu0 0
        %1973 = vmatpush.bf16.msra.mxu0 0
        %1974 = vmatpush.bf16.msra.mxu0 %v1865
        %1975 = vmatpush.bf16.msra.mxu0 %v1849
        %1976 = vmatmul.bf16.gmra.mxu0 %v1910
        %v1977 = vpop.f32.mrf.mxu0
        %v1978 = vadd.f32 %v1721, %v1977
        %v1979 = vpop.f32.mrf.mxu0
        %v1980 = vadd.f32 %v1721, %v1979
        %1981 = vdwg.mxu0
        %1982 = vmatpush.bf16.msra.mxu0 0
        %1983 = vmatpush.bf16.msra.mxu0 0
        %1984 = vmatpush.bf16.msra.mxu0 0
        %1985 = vmatpush.bf16.msra.mxu0 0
        %1986 = vmatpush.bf16.msra.mxu0 0
        %1987 = vmatpush.bf16.msra.mxu0 0
        %1988 = vmatpush.bf16.msra.mxu0 %v1866
        %1989 = vmatpush.bf16.msra.mxu0 %v1850
        %1990 = vmatmul.bf16.gmra.mxu0 %v1910
        %v1991 = vpop.f32.mrf.mxu0
        %v1992 = vadd.f32 %v1722, %v1991
        %v1993 = vpop.f32.mrf.mxu0
        %v1994 = vadd.f32 %v1722, %v1993
        %1995 = vdwg.mxu0
        %1996 = vmatpush.bf16.msra.mxu0 0
        %1997 = vmatpush.bf16.msra.mxu0 0
        %1998 = vmatpush.bf16.msra.mxu0 0
        %1999 = vmatpush.bf16.msra.mxu0 0
        %2000 = vmatpush.bf16.msra.mxu0 0
        %2001 = vmatpush.bf16.msra.mxu0 0
        %2002 = vmatpush.bf16.msra.mxu0 %v1867
        %2003 = vmatpush.bf16.msra.mxu0 %v1851
        %2004 = vmatmul.bf16.gmra.mxu0 %v1910
        %v2005 = vpop.f32.mrf.mxu0
        %v2006 = vadd.f32 %v1723, %v2005
        %v2007 = vpop.f32.mrf.mxu0
        %v2008 = vadd.f32 %v1723, %v2007
        %2009 = vdwg.mxu0
        %2010 = vmatpush.bf16.msra.mxu0 0
        %2011 = vmatpush.bf16.msra.mxu0 0
        %2012 = vmatpush.bf16.msra.mxu0 0
        %2013 = vmatpush.bf16.msra.mxu0 0
        %2014 = vmatpush.bf16.msra.mxu0 0
        %2015 = vmatpush.bf16.msra.mxu0 0
        %2016 = vmatpush.bf16.msra.mxu0 %v1868
        %2017 = vmatpush.bf16.msra.mxu0 %v1852
        %2018 = vmatmul.bf16.gmra.mxu0 %v1910
        %v2019 = vpop.f32.mrf.mxu0
        %v2020 = vadd.f32 %v1724, %v2019
        %v2021 = vpop.f32.mrf.mxu0
        %v2022 = vadd.f32 %v1724, %v2021
        %2023 = vdwg.mxu0
        %2024 = vmatpush.bf16.msra.mxu0 0
        %2025 = vmatpush.bf16.msra.mxu0 0
        %2026 = vmatpush.bf16.msra.mxu0 0
        %2027 = vmatpush.bf16.msra.mxu0 0
        %2028 = vmatpush.bf16.msra.mxu0 0
        %2029 = vmatpush.bf16.msra.mxu0 0
        %2030 = vmatpush.bf16.msra.mxu0 %v1869
        %2031 = vmatpush.bf16.msra.mxu0 %v1853
        %2032 = vmatmul.bf16.gmra.mxu0 %v1910
        %v2033 = vpop.f32.mrf.mxu0
        %v2034 = vadd.f32 %v1725, %v2033
        %v2035 = vpop.f32.mrf.mxu0
        %v2036 = vadd.f32 %v1725, %v2035
        %2037 = vdwg.mxu0
        %2038 = vmatpush.bf16.msra.mxu0 0
        %2039 = vmatpush.bf16.msra.mxu0 0
        %2040 = vmatpush.bf16.msra.mxu0 0
        %2041 = vmatpush.bf16.msra.mxu0 0
        %2042 = vmatpush.bf16.msra.mxu0 0
        %2043 = vmatpush.bf16.msra.mxu0 0
        %2044 = vmatpush.bf16.msra.mxu0 %v1870
        %2045 = vmatpush.bf16.msra.mxu0 %v1854
        %2046 = vmatmul.bf16.gmra.mxu0 %v1910
        %v2047 = vpop.f32.mrf.mxu0
        %v2048 = vadd.f32 %v1726, %v2047
        %v2049 = vpop.f32.mrf.mxu0
        %v2050 = vadd.f32 %v1726, %v2049
        %2051 = vdwg.mxu0
        %2052 = vmatpush.bf16.msra.mxu0 0
        %2053 = vmatpush.bf16.msra.mxu0 0
        %2054 = vmatpush.bf16.msra.mxu0 0
        %2055 = vmatpush.bf16.msra.mxu0 0
        %2056 = vmatpush.bf16.msra.mxu0 0
        %2057 = vmatpush.bf16.msra.mxu0 0
        %2058 = vmatpush.bf16.msra.mxu0 %v1871
        %2059 = vmatpush.bf16.msra.mxu0 %v1855
        %2060 = vmatmul.bf16.gmra.mxu0 %v1910
        %v2061 = vpop.f32.mrf.mxu0
        %v2062 = vadd.f32 %v1727, %v2061
        %v2063 = vpop.f32.mrf.mxu0
        %v2064 = vadd.f32 %v1727, %v2063
        %2065 = vdwg.mxu0
        %2066 = vmatpush.bf16.msra.mxu0 0
        %2067 = vmatpush.bf16.msra.mxu0 0
        %2068 = vmatpush.bf16.msra.mxu0 0
        %2069 = vmatpush.bf16.msra.mxu0 0
        %2070 = vmatpush.bf16.msra.mxu0 0
        %2071 = vmatpush.bf16.msra.mxu0 0
        %2072 = vmatpush.bf16.msra.mxu0 %v1872
        %2073 = vmatpush.bf16.msra.mxu0 %v1856
        %2074 = vmatmul.bf16.gmra.mxu0 %v1910
        %v2075 = vpop.f32.mrf.mxu0
        %v2076 = vadd.f32 %v1728, %v2075
        %v2077 = vpop.f32.mrf.mxu0
        %v2078 = vadd.f32 %v1728, %v2077
        %2079 = vdwg.mxu0
        %2080 = vmatpush.bf16.msra.mxu0 0
        %2081 = vmatpush.bf16.msra.mxu0 0
        %2082 = vmatpush.bf16.msra.mxu0 0
        %2083 = vmatpush.bf16.msra.mxu0 0
        %2084 = vmatpush.bf16.msra.mxu0 0
        %2085 = vmatpush.bf16.msra.mxu0 0
        %2086 = vmatpush.bf16.msra.mxu0 %v1873
        %2087 = vmatpush.bf16.msra.mxu0 %v1857
        %2088 = vmatmul.bf16.gmra.mxu0 %v1910
        %v2089 = vpop.f32.mrf.mxu0
        %v2090 = vadd.f32 %v1729, %v2089
        %v2091 = vpop.f32.mrf.mxu0
        %v2092 = vadd.f32 %v1729, %v2091
        %2093 = vdwg.mxu0
        %2094 = vmatpush.bf16.msra.mxu0 0
        %2095 = vmatpush.bf16.msra.mxu0 0
        %2096 = vmatpush.bf16.msra.mxu0 0
        %2097 = vmatpush.bf16.msra.mxu0 0
        %2098 = vmatpush.bf16.msra.mxu0 0
        %2099 = vmatpush.bf16.msra.mxu0 0
        %2100 = vmatpush.bf16.msra.mxu0 %v1874
        %2101 = vmatpush.bf16.msra.mxu0 %v1858
        %2102 = vmatmul.bf16.gmra.mxu0 %v1910
        %v2103 = vpop.f32.mrf.mxu0
        %v2104 = vadd.f32 %v1730, %v2103
        %v2105 = vpop.f32.mrf.mxu0
        %v2106 = vadd.f32 %v1730, %v2105
        %2107 = vdwg.mxu0
        %2108 = vmatpush.bf16.msra.mxu0 0
        %2109 = vmatpush.bf16.msra.mxu0 0
        %2110 = vmatpush.bf16.msra.mxu0 0
        %2111 = vmatpush.bf16.msra.mxu0 0
        %2112 = vmatpush.bf16.msra.mxu0 0
        %2113 = vmatpush.bf16.msra.mxu0 0
        %2114 = vmatpush.bf16.msra.mxu0 %v1875
        %2115 = vmatpush.bf16.msra.mxu0 %v1859
        %2116 = vmatmul.bf16.gmra.mxu0 %v1910
        %v2117 = vpop.f32.mrf.mxu0
        %v2118 = vadd.f32 %v1731, %v2117
        %v2119 = vpop.f32.mrf.mxu0
        %v2120 = vadd.f32 %v1731, %v2119
        %2121 = vdwg.mxu0
        %2122 = vmatpush.bf16.msra.mxu0 0
        %2123 = vmatpush.bf16.msra.mxu0 0
        %2124 = vmatpush.bf16.msra.mxu0 0
        %2125 = vmatpush.bf16.msra.mxu0 0
        %2126 = vmatpush.bf16.msra.mxu0 0
        %2127 = vmatpush.bf16.msra.mxu0 0
        %2128 = vmatpush.bf16.msra.mxu0 %v1876
        %2129 = vmatpush.bf16.msra.mxu0 %v1860
        %2130 = vmatmul.bf16.gmra.mxu0 %v1910
        %v2131 = vpop.f32.mrf.mxu0
        %v2132 = vadd.f32 %v1732, %v2131
        %v2133 = vpop.f32.mrf.mxu0
        %v2134 = vadd.f32 %v1732, %v2133
        %2135 = vdwg.mxu0
        %v2136 = vmax.f32 %v1922, 0.0
        %v2137 = vmax.f32 %v1936, 0.0
        %v2138 = vmax.f32 %v1950, 0.0
        %v2139 = vmax.f32 %v1964, 0.0
        %v2140 = vmax.f32 %v1978, 0.0
        %v2141 = vmax.f32 %v1992, 0.0
        %v2142 = vmax.f32 %v2006, 0.0
        %v2143 = vmax.f32 %v2020, 0.0
        %v2144 = vmax.f32 %v2034, 0.0
        %v2145 = vmax.f32 %v2048, 0.0
        %v2146 = vmax.f32 %v2062, 0.0
        %v2147 = vmax.f32 %v2076, 0.0
        %v2148 = vmax.f32 %v2090, 0.0
        %v2149 = vmax.f32 %v2104, 0.0
        %v2150 = vmax.f32 %v2118, 0.0
        %v2151 = vmax.f32 %v2132, 0.0
        %v2152 = vmax.f32 %v1924, 0.0
        %v2153 = vmax.f32 %v1938, 0.0
        %v2154 = vmax.f32 %v1952, 0.0
        %v2155 = vmax.f32 %v1966, 0.0
        %v2156 = vmax.f32 %v1980, 0.0
        %v2157 = vmax.f32 %v1994, 0.0
        %v2158 = vmax.f32 %v2008, 0.0
        %v2159 = vmax.f32 %v2022, 0.0
        %v2160 = vmax.f32 %v2036, 0.0
        %v2161 = vmax.f32 %v2050, 0.0
        %v2162 = vmax.f32 %v2064, 0.0
        %v2163 = vmax.f32 %v2078, 0.0
        %v2164 = vmax.f32 %v2092, 0.0
        %v2165 = vmax.f32 %v2106, 0.0
        %v2166 = vmax.f32 %v2120, 0.0
        %v2167 = vmax.f32 %v2134, 0.0
        %v2168 = vpack.c.bf16 %v2152, %v2136
        %v2169 = vpack.c.bf16 %v2153, %v2137
        %v2170 = vpack.c.bf16 %v2154, %v2138
        %v2171 = vpack.c.bf16 %v2155, %v2139
        %v2172 = vpack.c.bf16 %v2156, %v2140
        %v2173 = vpack.c.bf16 %v2157, %v2141
        %v2174 = vpack.c.bf16 %v2158, %v2142
        %v2175 = vpack.c.bf16 %v2159, %v2143
        %v2176 = vpack.c.bf16 %v2160, %v2144
        %v2177 = vpack.c.bf16 %v2161, %v2145
        %v2178 = vpack.c.bf16 %v2162, %v2146
        %v2179 = vpack.c.bf16 %v2163, %v2147
        %v2180 = vpack.c.bf16 %v2164, %v2148
        %v2181 = vpack.c.bf16 %v2165, %v2149
        %v2182 = vpack.c.bf16 %v2166, %v2150
        %v2183 = vpack.c.bf16 %v2167, %v2151
        %v2184 = vperm.slane %v584, 1
        %v2441 = vunpack.c.l.b16 %v619
        %v2442 = vunpack.c.l.b16 %v620
        %v2443 = vunpack.c.l.b16 %v621
        %v2444 = vunpack.c.l.b16 %v622
        %v2445 = vunpack.c.l.b16 %v623
        %v2446 = vunpack.c.l.b16 %v624
        %v2447 = vunpack.c.l.b16 %v625
        %v2448 = vunpack.c.l.b16 %v626
        %v2449 = vunpack.c.l.b16 %v627
        %v2450 = vunpack.c.l.b16 %v628
        %v2451 = vunpack.c.l.b16 %v629
        %v2452 = vunpack.c.l.b16 %v630
        %v2453 = vunpack.c.l.b16 %v631
        %v2454 = vunpack.c.l.b16 %v632
        %v2455 = vunpack.c.l.b16 %v633
        %v2456 = vunpack.c.l.b16 %v634
        %v2457 = vunpack.c.l.b16 %v635
        %v2458 = vunpack.c.l.b16 %v636
        %v2459 = vunpack.c.l.b16 %v637
        %v2460 = vunpack.c.l.b16 %v638
        %v2461 = vunpack.c.l.b16 %v639
        %v2462 = vunpack.c.l.b16 %v640
        %v2463 = vunpack.c.l.b16 %v641
        %v2464 = vunpack.c.l.b16 %v642
        %v2465 = vunpack.c.l.b16 %v643
        %v2466 = vunpack.c.l.b16 %v644
        %v2467 = vunpack.c.l.b16 %v645
        %v2468 = vunpack.c.l.b16 %v646
        %v2469 = vunpack.c.l.b16 %v647
        %v2470 = vunpack.c.l.b16 %v648
        %v2471 = vunpack.c.l.b16 %v649
        %v2472 = vunpack.c.l.b16 %v650
        %v2473 = vunpack.c.l.b16 %v651
        %v2474 = vunpack.c.l.b16 %v652
        %v2475 = vunpack.c.l.b16 %v653
        %v2476 = vunpack.c.l.b16 %v654
        %v2477 = vunpack.c.l.b16 %v655
        %v2478 = vunpack.c.l.b16 %v656
        %v2479 = vunpack.c.l.b16 %v657
        %v2480 = vunpack.c.l.b16 %v658
        %v2481 = vunpack.c.l.b16 %v659
        %v2482 = vunpack.c.l.b16 %v660
        %v2483 = vunpack.c.l.b16 %v661
        %v2484 = vunpack.c.l.b16 %v662
        %v2485 = vunpack.c.l.b16 %v663
        %v2486 = vunpack.c.l.b16 %v664
        %v2487 = vunpack.c.l.b16 %v665
        %v2488 = vunpack.c.l.b16 %v666
        %v2489 = vunpack.c.l.b16 %v667
        %v2490 = vunpack.c.l.b16 %v668
        %v2491 = vunpack.c.l.b16 %v669
        %v2492 = vunpack.c.l.b16 %v670
        %v2493 = vunpack.c.l.b16 %v671
        %v2494 = vunpack.c.l.b16 %v672
        %v2495 = vunpack.c.l.b16 %v673
        %v2496 = vunpack.c.l.b16 %v674
        %v2497 = vunpack.c.l.b16 %v675
        %v2498 = vunpack.c.l.b16 %v676
        %v2499 = vunpack.c.l.b16 %v677
        %v2500 = vunpack.c.l.b16 %v678
        %v2501 = vunpack.c.l.b16 %v679
        %v2502 = vunpack.c.l.b16 %v680
        %v2503 = vunpack.c.l.b16 %v681
        %v2504 = vunpack.c.l.b16 %v682
        %v2505 = vunpack.c.l.b16 %v683
        %v2506 = vunpack.c.l.b16 %v684
        %v2507 = vunpack.c.l.b16 %v685
        %v2508 = vunpack.c.l.b16 %v686
        %v2509 = vunpack.c.l.b16 %v687
        %v2510 = vunpack.c.l.b16 %v688
        %v2511 = vunpack.c.l.b16 %v689
        %v2512 = vunpack.c.l.b16 %v690
        %v2513 = vunpack.c.l.b16 %v691
        %v2514 = vunpack.c.l.b16 %v692
        %v2515 = vunpack.c.l.b16 %v693
        %v2516 = vunpack.c.l.b16 %v694
        %v2517 = vunpack.c.l.b16 %v695
        %v2518 = vunpack.c.l.b16 %v696
        %v2519 = vunpack.c.l.b16 %v697
        %v2520 = vunpack.c.l.b16 %v698
        %v2521 = vunpack.c.l.b16 %v699
        %v2522 = vunpack.c.l.b16 %v700
        %v2523 = vunpack.c.l.b16 %v701
        %v2524 = vunpack.c.l.b16 %v702
        %v2525 = vunpack.c.l.b16 %v703
        %v2526 = vunpack.c.l.b16 %v704
        %v2527 = vunpack.c.l.b16 %v705
        %v2528 = vunpack.c.l.b16 %v706
        %v2529 = vunpack.c.l.b16 %v707
        %v2530 = vunpack.c.l.b16 %v708
        %v2531 = vunpack.c.l.b16 %v709
        %v2532 = vunpack.c.l.b16 %v710
        %v2533 = vunpack.c.l.b16 %v711
        %v2534 = vunpack.c.l.b16 %v712
        %v2535 = vunpack.c.l.b16 %v713
        %v2536 = vunpack.c.l.b16 %v714
        %v2537 = vunpack.c.l.b16 %v715
        %v2538 = vunpack.c.l.b16 %v716
        %v2539 = vunpack.c.l.b16 %v717
        %v2540 = vunpack.c.l.b16 %v718
        %v2541 = vunpack.c.l.b16 %v719
        %v2542 = vunpack.c.l.b16 %v720
        %v2543 = vunpack.c.l.b16 %v721
        %v2544 = vunpack.c.l.b16 %v722
        %v2545 = vunpack.c.l.b16 %v723
        %v2546 = vunpack.c.l.b16 %v724
        %v2547 = vunpack.c.l.b16 %v725
        %v2548 = vunpack.c.l.b16 %v726
        %v2549 = vunpack.c.l.b16 %v727
        %v2550 = vunpack.c.l.b16 %v728
        %v2551 = vunpack.c.l.b16 %v729
        %v2552 = vunpack.c.l.b16 %v730
        %v2553 = vunpack.c.l.b16 %v731
        %v2554 = vunpack.c.l.b16 %v732
        %v2555 = vunpack.c.l.b16 %v733
        %v2556 = vunpack.c.l.b16 %v734
        %v2557 = vunpack.c.l.b16 %v735
        %v2558 = vunpack.c.l.b16 %v736
        %v2559 = vunpack.c.l.b16 %v737
        %v2560 = vunpack.c.l.b16 %v738
        %v2561 = vunpack.c.l.b16 %v739
        %v2562 = vunpack.c.l.b16 %v740
        %v2563 = vunpack.c.l.b16 %v741
        %v2564 = vunpack.c.l.b16 %v742
        %v2565 = vunpack.c.l.b16 %v743
        %v2566 = vunpack.c.l.b16 %v744
        %v2567 = vunpack.c.l.b16 %v745
        %v2568 = vunpack.c.l.b16 %v746
        %v2569 = vunpack.c.l.b16 %v747
        %v2570 = vunpack.c.l.b16 %v748
        %v2571 = vunpack.c.l.b16 %v749
        %v2572 = vunpack.c.l.b16 %v750
        %v2573 = vunpack.c.l.b16 %v751
        %v2574 = vunpack.c.l.b16 %v752
        %v2575 = vunpack.c.l.b16 %v753
        %v2576 = vunpack.c.l.b16 %v754
        %v2577 = vunpack.c.l.b16 %v755
        %v2578 = vunpack.c.l.b16 %v756
        %v2579 = vunpack.c.l.b16 %v757
        %v2580 = vunpack.c.l.b16 %v758
        %v2581 = vunpack.c.l.b16 %v759
        %v2582 = vunpack.c.l.b16 %v760
        %v2583 = vunpack.c.l.b16 %v761
        %v2584 = vunpack.c.l.b16 %v762
        %v2585 = vunpack.c.l.b16 %v763
        %v2586 = vunpack.c.l.b16 %v764
        %v2587 = vunpack.c.l.b16 %v765
        %v2588 = vunpack.c.l.b16 %v766
        %v2589 = vunpack.c.l.b16 %v767
        %v2590 = vunpack.c.l.b16 %v768
        %v2591 = vunpack.c.l.b16 %v769
        %v2592 = vunpack.c.l.b16 %v770
        %v2593 = vunpack.c.l.b16 %v771
        %v2594 = vunpack.c.l.b16 %v772
        %v2595 = vunpack.c.l.b16 %v773
        %v2596 = vunpack.c.l.b16 %v774
        %v2597 = vunpack.c.l.b16 %v775
        %v2598 = vunpack.c.l.b16 %v776
        %v2599 = vunpack.c.l.b16 %v777
        %v2600 = vunpack.c.l.b16 %v778
        %v2601 = vunpack.c.l.b16 %v779
        %v2602 = vunpack.c.l.b16 %v780
        %v2603 = vunpack.c.l.b16 %v781
        %v2604 = vunpack.c.l.b16 %v782
        %v2605 = vunpack.c.l.b16 %v783
        %v2606 = vunpack.c.l.b16 %v784
        %v2607 = vunpack.c.l.b16 %v785
        %v2608 = vunpack.c.l.b16 %v786
        %v2609 = vunpack.c.l.b16 %v787
        %v2610 = vunpack.c.l.b16 %v788
        %v2611 = vunpack.c.l.b16 %v789
        %v2612 = vunpack.c.l.b16 %v790
        %v2613 = vunpack.c.l.b16 %v791
        %v2614 = vunpack.c.l.b16 %v792
        %v2615 = vunpack.c.l.b16 %v793
        %v2616 = vunpack.c.l.b16 %v794
        %v2617 = vunpack.c.l.b16 %v795
        %v2618 = vunpack.c.l.b16 %v796
        %v2619 = vunpack.c.l.b16 %v797
        %v2620 = vunpack.c.l.b16 %v798
        %v2621 = vunpack.c.l.b16 %v799
        %v2622 = vunpack.c.l.b16 %v800
        %v2623 = vunpack.c.l.b16 %v801
        %v2624 = vunpack.c.l.b16 %v802
        %v2625 = vunpack.c.l.b16 %v803
        %v2626 = vunpack.c.l.b16 %v804
        %v2627 = vunpack.c.l.b16 %v805
        %v2628 = vunpack.c.l.b16 %v806
        %v2629 = vunpack.c.l.b16 %v807
        %v2630 = vunpack.c.l.b16 %v808
        %v2631 = vunpack.c.l.b16 %v809
        %v2632 = vunpack.c.l.b16 %v810
        %v2633 = vunpack.c.l.b16 %v811
        %v2634 = vunpack.c.l.b16 %v812
        %v2635 = vunpack.c.l.b16 %v813
        %v2636 = vunpack.c.l.b16 %v814
        %v2637 = vunpack.c.l.b16 %v815
        %v2638 = vunpack.c.l.b16 %v816
        %v2639 = vunpack.c.l.b16 %v817
        %v2640 = vunpack.c.l.b16 %v818
        %v2641 = vunpack.c.l.b16 %v819
        %v2642 = vunpack.c.l.b16 %v820
        %v2643 = vunpack.c.l.b16 %v821
        %v2644 = vunpack.c.l.b16 %v822
        %v2645 = vunpack.c.l.b16 %v823
        %v2646 = vunpack.c.l.b16 %v824
        %v2647 = vunpack.c.l.b16 %v825
        %v2648 = vunpack.c.l.b16 %v826
        %v2649 = vunpack.c.l.b16 %v827
        %v2650 = vunpack.c.l.b16 %v828
        %v2651 = vunpack.c.l.b16 %v829
        %v2652 = vunpack.c.l.b16 %v830
        %v2653 = vunpack.c.l.b16 %v831
        %v2654 = vunpack.c.l.b16 %v832
        %v2655 = vunpack.c.l.b16 %v833
        %v2656 = vunpack.c.l.b16 %v834
        %v2657 = vunpack.c.l.b16 %v835
        %v2658 = vunpack.c.l.b16 %v836
        %v2659 = vunpack.c.l.b16 %v837
        %v2660 = vunpack.c.l.b16 %v838
        %v2661 = vunpack.c.l.b16 %v839
        %v2662 = vunpack.c.l.b16 %v840
        %v2663 = vunpack.c.l.b16 %v841
        %v2664 = vunpack.c.l.b16 %v842
        %v2665 = vunpack.c.l.b16 %v843
        %v2666 = vunpack.c.l.b16 %v844
        %v2667 = vunpack.c.l.b16 %v845
        %v2668 = vunpack.c.l.b16 %v846
        %v2669 = vunpack.c.l.b16 %v847
        %v2670 = vunpack.c.l.b16 %v848
        %v2671 = vunpack.c.l.b16 %v849
        %v2672 = vunpack.c.l.b16 %v850
        %v2673 = vunpack.c.l.b16 %v851
        %v2674 = vunpack.c.l.b16 %v852
        %v2675 = vunpack.c.l.b16 %v853
        %v2676 = vunpack.c.l.b16 %v854
        %v2677 = vunpack.c.l.b16 %v855
        %v2678 = vunpack.c.l.b16 %v856
        %v2679 = vunpack.c.l.b16 %v857
        %v2680 = vunpack.c.l.b16 %v858
        %v2681 = vunpack.c.l.b16 %v859
        %v2682 = vunpack.c.l.b16 %v860
        %v2683 = vunpack.c.l.b16 %v861
        %v2684 = vunpack.c.l.b16 %v862
        %v2685 = vunpack.c.l.b16 %v863
        %v2686 = vunpack.c.l.b16 %v864
        %v2687 = vunpack.c.l.b16 %v865
        %v2688 = vunpack.c.l.b16 %v866
        %v2689 = vunpack.c.l.b16 %v867
        %v2690 = vunpack.c.l.b16 %v868
        %v2691 = vunpack.c.l.b16 %v869
        %v2692 = vunpack.c.l.b16 %v870
        %v2693 = vunpack.c.l.b16 %v871
        %v2694 = vunpack.c.l.b16 %v872
        %v2695 = vunpack.c.l.b16 %v873
        %v2696 = vunpack.c.l.b16 %v874
        %v2697 = vpack.c.b16 %v2442, %v2441
        %v2698 = vpack.c.b16 %v2444, %v2443
        %v2699 = vpack.c.b16 %v2446, %v2445
        %v2700 = vpack.c.b16 %v2448, %v2447
        %v2701 = vpack.c.b16 %v2450, %v2449
        %v2702 = vpack.c.b16 %v2452, %v2451
        %v2703 = vpack.c.b16 %v2454, %v2453
        %v2704 = vpack.c.b16 %v2456, %v2455
        %v2705 = vpack.c.b16 %v2458, %v2457
        %v2706 = vpack.c.b16 %v2460, %v2459
        %v2707 = vpack.c.b16 %v2462, %v2461
        %v2708 = vpack.c.b16 %v2464, %v2463
        %v2709 = vpack.c.b16 %v2466, %v2465
        %v2710 = vpack.c.b16 %v2468, %v2467
        %v2711 = vpack.c.b16 %v2470, %v2469
        %v2712 = vpack.c.b16 %v2472, %v2471
        %v2713 = vpack.c.b16 %v2474, %v2473
        %v2714 = vpack.c.b16 %v2476, %v2475
        %v2715 = vpack.c.b16 %v2478, %v2477
        %v2716 = vpack.c.b16 %v2480, %v2479
        %v2717 = vpack.c.b16 %v2482, %v2481
        %v2718 = vpack.c.b16 %v2484, %v2483
        %v2719 = vpack.c.b16 %v2486, %v2485
        %v2720 = vpack.c.b16 %v2488, %v2487
        %v2721 = vpack.c.b16 %v2490, %v2489
        %v2722 = vpack.c.b16 %v2492, %v2491
        %v2723 = vpack.c.b16 %v2494, %v2493
        %v2724 = vpack.c.b16 %v2496, %v2495
        %v2725 = vpack.c.b16 %v2498, %v2497
        %v2726 = vpack.c.b16 %v2500, %v2499
        %v2727 = vpack.c.b16 %v2502, %v2501
        %v2728 = vpack.c.b16 %v2504, %v2503
        %v2729 = vpack.c.b16 %v2506, %v2505
        %v2730 = vpack.c.b16 %v2508, %v2507
        %v2731 = vpack.c.b16 %v2510, %v2509
        %v2732 = vpack.c.b16 %v2512, %v2511
        %v2733 = vpack.c.b16 %v2514, %v2513
        %v2734 = vpack.c.b16 %v2516, %v2515
        %v2735 = vpack.c.b16 %v2518, %v2517
        %v2736 = vpack.c.b16 %v2520, %v2519
        %v2737 = vpack.c.b16 %v2522, %v2521
        %v2738 = vpack.c.b16 %v2524, %v2523
        %v2739 = vpack.c.b16 %v2526, %v2525
        %v2740 = vpack.c.b16 %v2528, %v2527
        %v2741 = vpack.c.b16 %v2530, %v2529
        %v2742 = vpack.c.b16 %v2532, %v2531
        %v2743 = vpack.c.b16 %v2534, %v2533
        %v2744 = vpack.c.b16 %v2536, %v2535
        %v2745 = vpack.c.b16 %v2538, %v2537
        %v2746 = vpack.c.b16 %v2540, %v2539
        %v2747 = vpack.c.b16 %v2542, %v2541
        %v2748 = vpack.c.b16 %v2544, %v2543
        %v2749 = vpack.c.b16 %v2546, %v2545
        %v2750 = vpack.c.b16 %v2548, %v2547
        %v2751 = vpack.c.b16 %v2550, %v2549
        %v2752 = vpack.c.b16 %v2552, %v2551
        %v2753 = vpack.c.b16 %v2554, %v2553
        %v2754 = vpack.c.b16 %v2556, %v2555
        %v2755 = vpack.c.b16 %v2558, %v2557
        %v2756 = vpack.c.b16 %v2560, %v2559
        %v2757 = vpack.c.b16 %v2562, %v2561
        %v2758 = vpack.c.b16 %v2564, %v2563
        %v2759 = vpack.c.b16 %v2566, %v2565
        %v2760 = vpack.c.b16 %v2568, %v2567
        %v2761 = vpack.c.b16 %v2570, %v2569
        %v2762 = vpack.c.b16 %v2572, %v2571
        %v2763 = vpack.c.b16 %v2574, %v2573
        %v2764 = vpack.c.b16 %v2576, %v2575
        %v2765 = vpack.c.b16 %v2578, %v2577
        %v2766 = vpack.c.b16 %v2580, %v2579
        %v2767 = vpack.c.b16 %v2582, %v2581
        %v2768 = vpack.c.b16 %v2584, %v2583
        %v2769 = vpack.c.b16 %v2586, %v2585
        %v2770 = vpack.c.b16 %v2588, %v2587
        %v2771 = vpack.c.b16 %v2590, %v2589
        %v2772 = vpack.c.b16 %v2592, %v2591
        %v2773 = vpack.c.b16 %v2594, %v2593
        %v2774 = vpack.c.b16 %v2596, %v2595
        %v2775 = vpack.c.b16 %v2598, %v2597
        %v2776 = vpack.c.b16 %v2600, %v2599
        %v2777 = vpack.c.b16 %v2602, %v2601
        %v2778 = vpack.c.b16 %v2604, %v2603
        %v2779 = vpack.c.b16 %v2606, %v2605
        %v2780 = vpack.c.b16 %v2608, %v2607
        %v2781 = vpack.c.b16 %v2610, %v2609
        %v2782 = vpack.c.b16 %v2612, %v2611
        %v2783 = vpack.c.b16 %v2614, %v2613
        %v2784 = vpack.c.b16 %v2616, %v2615
        %v2785 = vpack.c.b16 %v2618, %v2617
        %v2786 = vpack.c.b16 %v2620, %v2619
        %v2787 = vpack.c.b16 %v2622, %v2621
        %v2788 = vpack.c.b16 %v2624, %v2623
        %v2789 = vpack.c.b16 %v2626, %v2625
        %v2790 = vpack.c.b16 %v2628, %v2627
        %v2791 = vpack.c.b16 %v2630, %v2629
        %v2792 = vpack.c.b16 %v2632, %v2631
        %v2793 = vpack.c.b16 %v2634, %v2633
        %v2794 = vpack.c.b16 %v2636, %v2635
        %v2795 = vpack.c.b16 %v2638, %v2637
        %v2796 = vpack.c.b16 %v2640, %v2639
        %v2797 = vpack.c.b16 %v2642, %v2641
        %v2798 = vpack.c.b16 %v2644, %v2643
        %v2799 = vpack.c.b16 %v2646, %v2645
        %v2800 = vpack.c.b16 %v2648, %v2647
        %v2801 = vpack.c.b16 %v2650, %v2649
        %v2802 = vpack.c.b16 %v2652, %v2651
        %v2803 = vpack.c.b16 %v2654, %v2653
        %v2804 = vpack.c.b16 %v2656, %v2655
        %v2805 = vpack.c.b16 %v2658, %v2657
        %v2806 = vpack.c.b16 %v2660, %v2659
        %v2807 = vpack.c.b16 %v2662, %v2661
        %v2808 = vpack.c.b16 %v2664, %v2663
        %v2809 = vpack.c.b16 %v2666, %v2665
        %v2810 = vpack.c.b16 %v2668, %v2667
        %v2811 = vpack.c.b16 %v2670, %v2669
        %v2812 = vpack.c.b16 %v2672, %v2671
        %v2813 = vpack.c.b16 %v2674, %v2673
        %v2814 = vpack.c.b16 %v2676, %v2675
        %v2815 = vpack.c.b16 %v2678, %v2677
        %v2816 = vpack.c.b16 %v2680, %v2679
        %v2817 = vpack.c.b16 %v2682, %v2681
        %v2818 = vpack.c.b16 %v2684, %v2683
        %v2819 = vpack.c.b16 %v2686, %v2685
        %v2820 = vpack.c.b16 %v2688, %v2687
        %v2821 = vpack.c.b16 %v2690, %v2689
        %v2822 = vpack.c.b16 %v2692, %v2691
        %v2823 = vpack.c.b16 %v2694, %v2693
        %v2824 = vpack.c.b16 %v2696, %v2695
        %2953 = vmatpush.bf16.msra.mxu0 %v2704
        %2954 = vmatpush.bf16.msra.mxu0 %v2703
        %2955 = vmatpush.bf16.msra.mxu0 %v2702
        %2956 = vmatpush.bf16.msra.mxu0 %v2701
        %2957 = vmatpush.bf16.msra.mxu0 %v2700
        %2958 = vmatpush.bf16.msra.mxu0 %v2699
        %2959 = vmatpush.bf16.msra.mxu0 %v2698
        %2960 = vmatpush.bf16.msra.mxu0 %v2697
        %2961 = vmatmul.bf16.gmra.mxu0 %v2168
        %v2962 = vpop.f32.mrf.mxu0
        %v2963 = vadd.f32 %v2184, %v2962
        %v2964 = vpop.f32.mrf.mxu0
        %v2965 = vadd.f32 %v2184, %v2964
        %2966 = vdwg.mxu0
        %2967 = vmatpush.bf16.msra.mxu0 %v2712
        %2968 = vmatpush.bf16.msra.mxu0 %v2711
        %2969 = vmatpush.bf16.msra.mxu0 %v2710
        %2970 = vmatpush.bf16.msra.mxu0 %v2709
        %2971 = vmatpush.bf16.msra.mxu0 %v2708
        %2972 = vmatpush.bf16.msra.mxu0 %v2707
        %2973 = vmatpush.bf16.msra.mxu0 %v2706
        %2974 = vmatpush.bf16.msra.mxu0 %v2705
        %2975 = vmatmul.bf16.gmra.mxu0 %v2169
        %v2976 = vpop.f32.mrf.mxu0
        %v2977 = vadd.f32 %v2963, %v2976
        %v2978 = vpop.f32.mrf.mxu0
        %v2979 = vadd.f32 %v2965, %v2978
        %2980 = vdwg.mxu0
        %2981 = vmatpush.bf16.msra.mxu0 %v2720
        %2982 = vmatpush.bf16.msra.mxu0 %v2719
        %2983 = vmatpush.bf16.msra.mxu0 %v2718
        %2984 = vmatpush.bf16.msra.mxu0 %v2717
        %2985 = vmatpush.bf16.msra.mxu0 %v2716
        %2986 = vmatpush.bf16.msra.mxu0 %v2715
        %2987 = vmatpush.bf16.msra.mxu0 %v2714
        %2988 = vmatpush.bf16.msra.mxu0 %v2713
        %2989 = vmatmul.bf16.gmra.mxu0 %v2170
        %v2990 = vpop.f32.mrf.mxu0
        %v2991 = vadd.f32 %v2977, %v2990
        %v2992 = vpop.f32.mrf.mxu0
        %v2993 = vadd.f32 %v2979, %v2992
        %2994 = vdwg.mxu0
        %2995 = vmatpush.bf16.msra.mxu0 %v2728
        %2996 = vmatpush.bf16.msra.mxu0 %v2727
        %2997 = vmatpush.bf16.msra.mxu0 %v2726
        %2998 = vmatpush.bf16.msra.mxu0 %v2725
        %2999 = vmatpush.bf16.msra.mxu0 %v2724
        %3000 = vmatpush.bf16.msra.mxu0 %v2723
        %3001 = vmatpush.bf16.msra.mxu0 %v2722
        %3002 = vmatpush.bf16.msra.mxu0 %v2721
        %3003 = vmatmul.bf16.gmra.mxu0 %v2171
        %v3004 = vpop.f32.mrf.mxu0
        %v3005 = vadd.f32 %v2991, %v3004
        %v3006 = vpop.f32.mrf.mxu0
        %v3007 = vadd.f32 %v2993, %v3006
        %3008 = vdwg.mxu0
        %3009 = vmatpush.bf16.msra.mxu0 %v2736
        %3010 = vmatpush.bf16.msra.mxu0 %v2735
        %3011 = vmatpush.bf16.msra.mxu0 %v2734
        %3012 = vmatpush.bf16.msra.mxu0 %v2733
        %3013 = vmatpush.bf16.msra.mxu0 %v2732
        %3014 = vmatpush.bf16.msra.mxu0 %v2731
        %3015 = vmatpush.bf16.msra.mxu0 %v2730
        %3016 = vmatpush.bf16.msra.mxu0 %v2729
        %3017 = vmatmul.bf16.gmra.mxu0 %v2172
        %v3018 = vpop.f32.mrf.mxu0
        %v3019 = vadd.f32 %v3005, %v3018
        %v3020 = vpop.f32.mrf.mxu0
        %v3021 = vadd.f32 %v3007, %v3020
        %3022 = vdwg.mxu0
        %3023 = vmatpush.bf16.msra.mxu0 %v2744
        %3024 = vmatpush.bf16.msra.mxu0 %v2743
        %3025 = vmatpush.bf16.msra.mxu0 %v2742
        %3026 = vmatpush.bf16.msra.mxu0 %v2741
        %3027 = vmatpush.bf16.msra.mxu0 %v2740
        %3028 = vmatpush.bf16.msra.mxu0 %v2739
        %3029 = vmatpush.bf16.msra.mxu0 %v2738
        %3030 = vmatpush.bf16.msra.mxu0 %v2737
        %3031 = vmatmul.bf16.gmra.mxu0 %v2173
        %v3032 = vpop.f32.mrf.mxu0
        %v3033 = vadd.f32 %v3019, %v3032
        %v3034 = vpop.f32.mrf.mxu0
        %v3035 = vadd.f32 %v3021, %v3034
        %3036 = vdwg.mxu0
        %3037 = vmatpush.bf16.msra.mxu0 %v2752
        %3038 = vmatpush.bf16.msra.mxu0 %v2751
        %3039 = vmatpush.bf16.msra.mxu0 %v2750
        %3040 = vmatpush.bf16.msra.mxu0 %v2749
        %3041 = vmatpush.bf16.msra.mxu0 %v2748
        %3042 = vmatpush.bf16.msra.mxu0 %v2747
        %3043 = vmatpush.bf16.msra.mxu0 %v2746
        %3044 = vmatpush.bf16.msra.mxu0 %v2745
        %3045 = vmatmul.bf16.gmra.mxu0 %v2174
        %v3046 = vpop.f32.mrf.mxu0
        %v3047 = vadd.f32 %v3033, %v3046
        %v3048 = vpop.f32.mrf.mxu0
        %v3049 = vadd.f32 %v3035, %v3048
        %3050 = vdwg.mxu0
        %3051 = vmatpush.bf16.msra.mxu0 %v2760
        %3052 = vmatpush.bf16.msra.mxu0 %v2759
        %3053 = vmatpush.bf16.msra.mxu0 %v2758
        %3054 = vmatpush.bf16.msra.mxu0 %v2757
        %3055 = vmatpush.bf16.msra.mxu0 %v2756
        %3056 = vmatpush.bf16.msra.mxu0 %v2755
        %3057 = vmatpush.bf16.msra.mxu0 %v2754
        %3058 = vmatpush.bf16.msra.mxu0 %v2753
        %3059 = vmatmul.bf16.gmra.mxu0 %v2175
        %v3060 = vpop.f32.mrf.mxu0
        %v3061 = vadd.f32 %v3047, %v3060
        %v3062 = vpop.f32.mrf.mxu0
        %v3063 = vadd.f32 %v3049, %v3062
        %3064 = vdwg.mxu0
        %3065 = vmatpush.bf16.msra.mxu0 %v2768
        %3066 = vmatpush.bf16.msra.mxu0 %v2767
        %3067 = vmatpush.bf16.msra.mxu0 %v2766
        %3068 = vmatpush.bf16.msra.mxu0 %v2765
        %3069 = vmatpush.bf16.msra.mxu0 %v2764
        %3070 = vmatpush.bf16.msra.mxu0 %v2763
        %3071 = vmatpush.bf16.msra.mxu0 %v2762
        %3072 = vmatpush.bf16.msra.mxu0 %v2761
        %3073 = vmatmul.bf16.gmra.mxu0 %v2176
        %v3074 = vpop.f32.mrf.mxu0
        %v3075 = vadd.f32 %v3061, %v3074
        %v3076 = vpop.f32.mrf.mxu0
        %v3077 = vadd.f32 %v3063, %v3076
        %3078 = vdwg.mxu0
        %3079 = vmatpush.bf16.msra.mxu0 %v2776
        %3080 = vmatpush.bf16.msra.mxu0 %v2775
        %3081 = vmatpush.bf16.msra.mxu0 %v2774
        %3082 = vmatpush.bf16.msra.mxu0 %v2773
        %3083 = vmatpush.bf16.msra.mxu0 %v2772
        %3084 = vmatpush.bf16.msra.mxu0 %v2771
        %3085 = vmatpush.bf16.msra.mxu0 %v2770
        %3086 = vmatpush.bf16.msra.mxu0 %v2769
        %3087 = vmatmul.bf16.gmra.mxu0 %v2177
        %v3088 = vpop.f32.mrf.mxu0
        %v3089 = vadd.f32 %v3075, %v3088
        %v3090 = vpop.f32.mrf.mxu0
        %v3091 = vadd.f32 %v3077, %v3090
        %3092 = vdwg.mxu0
        %3093 = vmatpush.bf16.msra.mxu0 %v2784
        %3094 = vmatpush.bf16.msra.mxu0 %v2783
        %3095 = vmatpush.bf16.msra.mxu0 %v2782
        %3096 = vmatpush.bf16.msra.mxu0 %v2781
        %3097 = vmatpush.bf16.msra.mxu0 %v2780
        %3098 = vmatpush.bf16.msra.mxu0 %v2779
        %3099 = vmatpush.bf16.msra.mxu0 %v2778
        %3100 = vmatpush.bf16.msra.mxu0 %v2777
        %3101 = vmatmul.bf16.gmra.mxu0 %v2178
        %v3102 = vpop.f32.mrf.mxu0
        %v3103 = vadd.f32 %v3089, %v3102
        %v3104 = vpop.f32.mrf.mxu0
        %v3105 = vadd.f32 %v3091, %v3104
        %3106 = vdwg.mxu0
        %3107 = vmatpush.bf16.msra.mxu0 %v2792
        %3108 = vmatpush.bf16.msra.mxu0 %v2791
        %3109 = vmatpush.bf16.msra.mxu0 %v2790
        %3110 = vmatpush.bf16.msra.mxu0 %v2789
        %3111 = vmatpush.bf16.msra.mxu0 %v2788
        %3112 = vmatpush.bf16.msra.mxu0 %v2787
        %3113 = vmatpush.bf16.msra.mxu0 %v2786
        %3114 = vmatpush.bf16.msra.mxu0 %v2785
        %3115 = vmatmul.bf16.gmra.mxu0 %v2179
        %v3116 = vpop.f32.mrf.mxu0
        %v3117 = vadd.f32 %v3103, %v3116
        %v3118 = vpop.f32.mrf.mxu0
        %v3119 = vadd.f32 %v3105, %v3118
        %3120 = vdwg.mxu0
        %3121 = vmatpush.bf16.msra.mxu0 %v2800
        %3122 = vmatpush.bf16.msra.mxu0 %v2799
        %3123 = vmatpush.bf16.msra.mxu0 %v2798
        %3124 = vmatpush.bf16.msra.mxu0 %v2797
        %3125 = vmatpush.bf16.msra.mxu0 %v2796
        %3126 = vmatpush.bf16.msra.mxu0 %v2795
        %3127 = vmatpush.bf16.msra.mxu0 %v2794
        %3128 = vmatpush.bf16.msra.mxu0 %v2793
        %3129 = vmatmul.bf16.gmra.mxu0 %v2180
        %v3130 = vpop.f32.mrf.mxu0
        %v3131 = vadd.f32 %v3117, %v3130
        %v3132 = vpop.f32.mrf.mxu0
        %v3133 = vadd.f32 %v3119, %v3132
        %3134 = vdwg.mxu0
        %3135 = vmatpush.bf16.msra.mxu0 %v2808
        %3136 = vmatpush.bf16.msra.mxu0 %v2807
        %3137 = vmatpush.bf16.msra.mxu0 %v2806
        %3138 = vmatpush.bf16.msra.mxu0 %v2805
        %3139 = vmatpush.bf16.msra.mxu0 %v2804
        %3140 = vmatpush.bf16.msra.mxu0 %v2803
        %3141 = vmatpush.bf16.msra.mxu0 %v2802
        %3142 = vmatpush.bf16.msra.mxu0 %v2801
        %3143 = vmatmul.bf16.gmra.mxu0 %v2181
        %v3144 = vpop.f32.mrf.mxu0
        %v3145 = vadd.f32 %v3131, %v3144
        %v3146 = vpop.f32.mrf.mxu0
        %v3147 = vadd.f32 %v3133, %v3146
        %3148 = vdwg.mxu0
        %3149 = vmatpush.bf16.msra.mxu0 %v2816
        %3150 = vmatpush.bf16.msra.mxu0 %v2815
        %3151 = vmatpush.bf16.msra.mxu0 %v2814
        %3152 = vmatpush.bf16.msra.mxu0 %v2813
        %3153 = vmatpush.bf16.msra.mxu0 %v2812
        %3154 = vmatpush.bf16.msra.mxu0 %v2811
        %3155 = vmatpush.bf16.msra.mxu0 %v2810
        %3156 = vmatpush.bf16.msra.mxu0 %v2809
        %3157 = vmatmul.bf16.gmra.mxu0 %v2182
        %v3158 = vpop.f32.mrf.mxu0
        %v3159 = vadd.f32 %v3145, %v3158
        %v3160 = vpop.f32.mrf.mxu0
        %v3161 = vadd.f32 %v3147, %v3160
        %3162 = vdwg.mxu0
        %3163 = vmatpush.bf16.msra.mxu0 %v2824
        %3164 = vmatpush.bf16.msra.mxu0 %v2823
        %3165 = vmatpush.bf16.msra.mxu0 %v2822
        %3166 = vmatpush.bf16.msra.mxu0 %v2821
        %3167 = vmatpush.bf16.msra.mxu0 %v2820
        %3168 = vmatpush.bf16.msra.mxu0 %v2819
        %3169 = vmatpush.bf16.msra.mxu0 %v2818
        %3170 = vmatpush.bf16.msra.mxu0 %v2817
        %3171 = vmatmul.bf16.gmra.mxu0 %v2183
        %v3172 = vpop.f32.mrf.mxu0
        %v3173 = vadd.f32 %v3159, %v3172
        %v3174 = vpop.f32.mrf.mxu0
        %v3175 = vadd.f32 %v3161, %v3174
        %3176 = vdwg.mxu0
        %v3177 = vadd.f32 %v1712, %v3173
        %v3178 = vadd.f32 %v1713, %v3175
        %v3179 = vsel %vm891, %v3177, 0.0
        %3180 = vadd.xlane.f32.xlu0 %v3179
        %v3181 = vpop.xlane.xlu0 %3180
        %v3182 = vsel %vm891, %v3178, 0.0
        %3183 = vadd.xlane.f32.xlu0 %v3182
        %v3184 = vpop.xlane.xlu0 %3183
        %v3185 = vmul.f32 %v3181, %v1669
        %v3186 = vmul.f32 %v3184, %v1669
        %v3187 = vsub.f32 %v3177, %v3185
        %v3188 = vsub.f32 %v3178, %v3186
        %v3189 = vmul.f32 %v3187, %v3187
        %v3190 = vmul.f32 %v3188, %v3188
        %v3191 = vsel %vm891, %v3189, 0.0
        %3192 = vadd.xlane.f32.xlu0 %v3191
        %v3193 = vpop.xlane.xlu0 %3192
        %v3194 = vsel %vm891, %v3190, 0.0
        %3195 = vadd.xlane.f32.xlu0 %v3194
        %v3196 = vpop.xlane.xlu0 %3195
        %v3197 = vmul.f32 %v3193, %v1669
        %v3198 = vmul.f32 %v3196, %v1669
        %v3199 = vadd.f32 %v3197, 1e-05
        %v3200 = vadd.f32 %v3198, 1e-05
        %v3201 = vrsqrt.pop %v3199
        %v3202 = vmul.f32 %v3201, %v3199
        %v3203 = vmul.f32 %v3202, %v3201
        %v3204 = vmul.f32 0.5, %v3203
        %v3205 = vsub.f32 1.5, %v3204
        %v3206 = vmul.f32 %v3201, %v3205
        %vm3207 = vweird.f32 %v3199
        %vm3208 = vweird.f32 %v3201
        %vm3209 = vmor %vm3207, %vm3208
        %v3210 = vsel %vm3209, %v3201, %v3206
        %v3211 = vrsqrt.pop %v3200
        %v3212 = vmul.f32 %v3211, %v3200
        %v3213 = vmul.f32 %v3212, %v3211
        %v3214 = vmul.f32 0.5, %v3213
        %v3215 = vsub.f32 1.5, %v3214
        %v3216 = vmul.f32 %v3211, %v3215
        %vm3217 = vweird.f32 %v3200
        %vm3218 = vweird.f32 %v3211
        %vm3219 = vmor %vm3217, %vm3218
        %v3220 = vsel %vm3219, %v3211, %v3216
        %v3221 = vmul.f32 %v3187, %v3210
        %v3222 = vmul.f32 %v3188, %v3220
        %v3223 = vperm.slane %v584, 4
        %v3224 = vmul.f32 %v3221, %v3223
        %v3225 = vmul.f32 %v3222, %v3223
        %v3226 = vperm.slane %v584, 5
        %v3227 = vadd.f32 %v3224, %v3226
        %v3228 = vadd.f32 %v3225, %v3226
        %3229 = vst.msk [vmem:[#allocation2] sm:$0xff] %vm891, %v3227
        %3230 = vst.msk [vmem:[#allocation2 + $0x8] sm:$0xff] %vm891, %v3228
        %p3231 = scmp.eq.s32.totalorder %s25, 1
        // Predicated region
        $region77: #{transformer_forward.1} parent=71 // pred_check
          %p3232 = pneg %p3231
        $region78: #{transformer_forward.1} parent=71 // pred_check_branch
          %3234 = sbr.rel (%p3232) target = $region80
        $region79: #{transformer_forward.1} parent=71 // pred_region
          %s3235 = scalar_lea.vmem [#allocation2], 7
          %v3236 = vld [vmem:[%s3235] ss:$8 sm:$0x3]
          %v3237 = vpack.c.bf16 %v3236, %v3236
          %v3238 = vld [vmem:[%s11] sm:$0xf]
          %v3239 = vld [vmem:[%s11 + $0x4] sm:$0xf]
          %v3240 = vld [vmem:[%s11 + $0x8] sm:$0xf]
          %v3241 = vld [vmem:[%s11 + $0xc] sm:$0xf]
          %v3242 = vld [vmem:[%s12] sm:$0x1]
          %v3244 = vperm.slane %v3242, 0
          %v3250 = vunpack.c.l.b16 %v3238
          %v3251 = vunpack.c.l.b16 %v3239
          %v3252 = vunpack.c.l.b16 %v3240
          %v3253 = vunpack.c.l.b16 %v3241
          %v3254 = vpack.c.b16 %v3251, %v3250
          %v3255 = vpack.c.b16 %v3253, %v3252
          %v3259 = vsel %vm891, %v3237, 0
          %3261 = vmatpush.bf16.msra.mxu0 0
          %3262 = vmatpush.bf16.msra.mxu0 0
          %3263 = vmatpush.bf16.msra.mxu0 0
          %3264 = vmatpush.bf16.msra.mxu0 0
          %3265 = vmatpush.bf16.msra.mxu0 0
          %3266 = vmatpush.bf16.msra.mxu0 0
          %3267 = vmatpush.bf16.msra.mxu0 %v3255
          %3268 = vmatpush.bf16.msra.mxu0 %v3254
          %3269 = vmatmul.bf16.gmra.mxu0 %v3259
          %v3270 = vpop.f32.mrf.mxu0
          %v3271 = vadd.f32 %v3244, %v3270
          %v3272 = vpop.f32.mrf.mxu0
          %3273 = vdwg.mxu0
          %v3274 = vsub.f32 0.0, %v3271
          %v3275 = vmul.f32 %v3274, 1.442695
          %v3276 = vpow.pop %v3275
          %v3277 = vadd.f32 %v3276, 1.0
          %v3278 = vrcp.pop %v3277
          %v3279 = vmul.f32 %v3277, %v3278
          %v3280 = vsub.f32 1.0, %v3279
          %v3281 = vmul.f32 %v3278, %v3280
          %v3282 = vadd.f32 %v3278, %v3281
          %vm3283 = vweird.f32 %v3277
          %vm3284 = vweird.f32 %v3278
          %vm3285 = vmor %vm3283, %vm3284
          %v3286 = vsel %vm3285, %v3278, %v3282
          %v3287 = vand.u32 2147483647, %v3277
          %vm3288 = vcmp.eq.f32.partialorder %v3287, 8.507059e+37
          %v3289 = vand.u32 %v3277, 2147483648
          %v3290 = vor.u32 1.1754944e-38, %v3289
          %v3291 = vsel %vm3288, %v3290, %v3286
          %v3292 = vmul.f32 1.0, %v3291
          %vm3293 = vcmask 25600
          %3294 = vst.msk [vmem:[#allocation3] sm:$0x3] %vm3293, %v3292
        $region80: #{transformer_forward.1} parent=71 // pred_fallthru
          _
        // Predicated region
        $region81: #{transformer_forward.1} parent=71 // pred_check
          %p3295 = pneg %p346
        $region82: #{transformer_forward.1} parent=71 // pred_check_branch
          %3297 = sbr.rel (%p3295) target = $region84
        $region83: #{transformer_forward.1} parent=71 // pred_region
          %3299 = vsyncadd [#allocation4], 0
          %s3301 = sshll.u32 [#allocation3], 4
          %s3302 = int_to_ptr.vmem [resolvable:$true] %s3301
          %s3303 = sshll.u32 %s13, 4
          %s3304 = int_to_ptr.hbm [resolvable:$true] %s3303
          %3306 = dma.vmem_to_hbm [thread:$0]  %s3302, 32, %s3304, [#allocation4]
        $region84: #{transformer_forward.1} parent=71 // pred_fallthru
          _
        // Predicated region
        $region85: #{transformer_forward.1} parent=71 // pred_check
          %p3307 = pneg %p346
        $region86: #{transformer_forward.1} parent=71 // pred_check_branch
          %3309 = sbr.rel (%p3307) target = $region88
        $region87: #{transformer_forward.1} parent=71 // pred_region
          %3311 = dma.done [#allocation4], 32
        $region88: #{transformer_forward.1} parent=71 // pred_fallthru
          _
      $region72: #{transformer_forward.1} parent=5 // pred_fallthru
        _
      %p3312 = scmp.le.s32.totalorder 2, %s20
      // Predicated region
      $region89: #{transformer_forward.1} parent=5 // pred_check
        %p3313 = pneg %p3312
      $region90: #{transformer_forward.1} parent=5 // pred_check_branch
        %3315 = sbr.rel (%p3313) target = $region92
      $region91: #{transformer_forward.1} parent=5 // pred_region
        %s3316 = ssub.s32 %s20, 2
      $region92: #{transformer_forward.1} parent=5 // pred_fallthru
        _
    $region6: #{transformer_forward.1} parent=1 // loop_footer
      %s24 = sadd.s32 1, %s20
    $region7: #{transformer_forward.1} parent=1 // loop_footer_branch
      %19 = sbr.rel target = $region3
    $region8: #{transformer_forward.1} parent=1 // loop_exit
      _
    %3317 = vsyncpa [#allocation4], 1
    %s3318 = scalar_lea.sflag [#allocation4], 1
    %3319 = vsyncpa %s3318, 1

</llo_original>
